<compile_context>
chip_gen: v7x
topology: tpu7x:2x2x1
jax: 0.10.0
libtpu: 0.0.40
codegen_flags: <defaults>
</compile_context>

<pallas_src>
import jax
import jax.numpy as jnp
from jax.experimental import pallas as pl
from jax.experimental.pallas import tpu as pltpu


# ----------------------------------------------------------------------------
# Model constants
# ----------------------------------------------------------------------------
C_IN, C_HIGH, C_LOW = 3, 128, 32
C_WASP, C_ENC = 3840, 256
C_CAT, C_OUT, K_DEC = C_ENC + C_LOW, 21, 4        # 288, 21, deconv k=s=4
C_TAIL = K_DEC * K_DEC * C_OUT                    # 336 = 16 taps * 21 channels
C_TAIL_PAD = 384                                  # next multiple of 128 (lane-dense)
C_BB_IN = K_DEC * K_DEC * C_IN                    # 48 = patchified backbone input
C_BB = C_HIGH + C_LOW                             # 160 merged backbone channels


def _pick_m_tile(M, preferred=256):
    """Largest convenient M tile that divides M (keeps VMEM working set small)."""
    for t in (preferred, 128, 64, 32, 16, 8):
        if t <= M and M % t == 0:
            return t
    return M


def _pick_k_tile(K, preferred=1280):
    for t in (preferred, 768, 640, 384, 256, 128):
        if t <= K and K % t == 0:
            return t
    return K


# ----------------------------------------------------------------------------
# Fully fused Pallas kernel
# ----------------------------------------------------------------------------
def _fused_kernel(patches_ref, w_bb_ref, b_bb_ref,
                  w_wasp_ref, b_wasp_ref, w_enc_ref, b_enc_ref,
                  w_te_ref, w_tl_ref, b_tail_ref,
                  o_ref,
                  high_ref, low_ref, acc_ref):
    """grid = (M tiles, K tiles over 3840).

    k == 0    : backbone patch-conv -> (high, low) into VMEM scratch, zero acc.
    every k   : acc += relu(high @ Wwasp[:,k] + b) @ Wenc[k,:]   (K-tiled chain,
                the [tm, 3840] intermediate never leaves VMEM).
    k == last : enc = relu(acc + b_enc); out = sigmoid(enc@Wte + low@Wtl + b).
    """
    k = pl.program_id(1)

    @pl.when(k == 0)
    def _():
        feats = jnp.dot(patches_ref[...], w_bb_ref[...],
                        preferred_element_type=jnp.float32)
        feats = jnp.maximum(feats + b_bb_ref[...], 0.0)
        high_ref[...] = feats[:, :C_HIGH].astype(jnp.bfloat16)
        low_ref[...] = feats[:, C_HIGH:].astype(jnp.bfloat16)
        acc_ref[...] = jnp.zeros_like(acc_ref)

    t = jnp.dot(high_ref[...], w_wasp_ref[...], preferred_element_type=jnp.float32)
    t = jnp.maximum(t + b_wasp_ref[...], 0.0).astype(jnp.bfloat16)
    acc_ref[...] += jnp.dot(t, w_enc_ref[...], preferred_element_type=jnp.float32)

    @pl.when(k == pl.num_programs(1) - 1)
    def _():
        enc = jnp.maximum(acc_ref[...] + b_enc_ref[...], 0.0).astype(jnp.bfloat16)
        y = jnp.dot(enc, w_te_ref[...], preferred_element_type=jnp.float32)
        y = y + jnp.dot(low_ref[...], w_tl_ref[...], preferred_element_type=jnp.float32)
        y = y + b_tail_ref[...]
        o_ref[...] = jax.nn.sigmoid(y)


def fused_head(patches, fp):
    """patches: [M, 48] bf16 -> [M, 384] f32 (sigmoid probs, cols >=336 are pad)."""
    M = patches.shape[0]
    tm = _pick_m_tile(M)
    tk = _pick_k_tile(C_WASP)
    return pl.pallas_call(
        _fused_kernel,
        out_shape=jax.ShapeDtypeStruct((M, C_TAIL_PAD), jnp.float32),
        grid=(M // tm, C_WASP // tk),
        in_specs=[
            pl.BlockSpec((tm, C_BB_IN), lambda i, k: (i, 0)),       # patches
            pl.BlockSpec((C_BB_IN, C_BB), lambda i, k: (0, 0)),     # w_bb
            pl.BlockSpec((1, C_BB), lambda i, k: (0, 0)),           # b_bb
            pl.BlockSpec((C_HIGH, tk), lambda i, k: (0, k)),        # w_wasp
            pl.BlockSpec((1, tk), lambda i, k: (0, k)),             # b_wasp
            pl.BlockSpec((tk, C_ENC), lambda i, k: (k, 0)),         # w_enc
            pl.BlockSpec((1, C_ENC), lambda i, k: (0, 0)),          # b_enc
            pl.BlockSpec((C_ENC, C_TAIL_PAD), lambda i, k: (0, 0)),  # w_tail_enc
            pl.BlockSpec((C_LOW, C_TAIL_PAD), lambda i, k: (0, 0)),  # w_tail_low
            pl.BlockSpec((1, C_TAIL_PAD), lambda i, k: (0, 0)),      # b_tail
        ],
        out_specs=pl.BlockSpec((tm, C_TAIL_PAD), lambda i, k: (i, 0)),
        scratch_shapes=[
            pltpu.VMEM((tm, C_HIGH), jnp.bfloat16),   # high features
            pltpu.VMEM((tm, C_LOW), jnp.bfloat16),    # low features
            pltpu.VMEM((tm, C_ENC), jnp.float32),     # encoder accumulator
        ],
        compiler_params=pltpu.CompilerParams(
            dimension_semantics=("parallel", "arbitrary")),
    )(patches, fp["w_bb"], fp["b_bb"],
      fp["w_wasp"], fp["b_wasp"], fp["w_enc"], fp["b_enc"],
      fp["w_tail_enc"], fp["w_tail_low"], fp["b_tail"])


# ----------------------------------------------------------------------------
# Parameters (synthetic) + offline algebraic folding
# ----------------------------------------------------------------------------
def init_params(key):
    ks = jax.random.split(key, 6)

    def w(k, shape, fan_in):
        return jax.random.normal(k, shape, jnp.float32) / jnp.sqrt(fan_in)

    p = {}
    # TODO(synk): HighLowFeauturesBck not defined in the reference; stand-in is a
    # patchified (k=4, s=4) conv producing high(128) + low(32) feature maps.
    p["w_high"] = w(ks[0], (C_BB_IN, C_HIGH), C_BB_IN)
    p["b_high"] = jnp.zeros((C_HIGH,), jnp.float32)
    p["w_low"] = w(ks[1], (C_BB_IN, C_LOW), C_BB_IN)
    p["b_low"] = jnp.zeros((C_LOW,), jnp.float32)
    # TODO(synk): Waterfall (WASP atrous branch bank) not defined; stand-in 1x1 conv 128->3840.
    p["w_wasp"] = w(ks[2], (C_HIGH, C_WASP), C_HIGH)
    p["b_wasp"] = jnp.zeros((C_WASP,), jnp.float32)
    # TODO(synk): Encoder internals not defined; stand-in 1x1 conv 3840->256.
    p["w_enc"] = w(ks[3], (C_WASP, C_ENC), C_WASP)
    p["b_enc"] = jnp.zeros((C_ENC,), jnp.float32)
    # DeconvolutionLayer(288, 288, k=4, s=4): weight [tap=ki*4+kj, Cin, Cout], bias [Cout]
    p["w_deconv"] = w(ks[4], (K_DEC * K_DEC, C_CAT, C_CAT), C_CAT)
    p["b_deconv"] = jnp.zeros((C_CAT,), jnp.float32)
    # point_conv: Conv2d(288, 21, k=1)
    p["w_point"] = w(ks[5], (C_CAT, C_OUT), C_CAT)
    p["b_point"] = jnp.zeros((C_OUT,), jnp.float32)
    return p


def fuse_params(p):
    """One-time offline folding / dtype prep (exact, no nonlinearity crossed)."""
    # Merge high/low backbone convs -> one [48, 160] matmul.
    w_bb = jnp.concatenate([p["w_high"], p["w_low"]], axis=1)
    b_bb = jnp.concatenate([p["b_high"], p["b_low"]], axis=0)

    # Fold deconv(k=s=4) . point_conv:  W_tail[ci, tap*21 + c] = sum_co Wd[tap,ci,co] * Wp[co,c]
    w_tail = jnp.einsum("tio,oc->itc", p["w_deconv"], p["w_point"]).reshape(C_CAT, C_TAIL)
    b_tail = jnp.tile(p["b_deconv"] @ p["w_point"] + p["b_point"], (K_DEC * K_DEC,))
    # Zero-pad output channels 336 -> 384 for lane-dense stores (sliced off later).
    w_tail = jnp.pad(w_tail, ((0, 0), (0, C_TAIL_PAD - C_TAIL)))
    b_tail = jnp.pad(b_tail, (0, C_TAIL_PAD - C_TAIL))

    return {
        "w_bb": w_bb.astype(jnp.bfloat16),
        "b_bb": b_bb.reshape(1, -1),
        "w_wasp": p["w_wasp"].astype(jnp.bfloat16),
        "b_wasp": p["b_wasp"].reshape(1, -1),
        "w_enc": p["w_enc"].astype(jnp.bfloat16),
        "b_enc": p["b_enc"].reshape(1, -1),
        # Split fused tail weight rows so [enc, low] never needs a concat in HBM.
        "w_tail_enc": w_tail[:C_ENC].astype(jnp.bfloat16),
        "w_tail_low": w_tail[C_ENC:].astype(jnp.bfloat16),
        "b_tail": b_tail.reshape(1, -1),
    }


# ----------------------------------------------------------------------------
# Forward pass
# ----------------------------------------------------------------------------
def _patchify(x_nhwc, patch):
    """im2col for a kernel==stride conv: [N,H,W,C] -> [N*(H/p)*(W/p), p*p*C]."""
    N, H, W, C = x_nhwc.shape
    Hs, Ws = H // patch, W // patch
    x = x_nhwc.reshape(N, Hs, patch, Ws, patch, C)
    x = x.transpose(0, 1, 3, 2, 4, 5)
    return x.reshape(N * Hs * Ws, patch * patch * C), (N, Hs, Ws)


@jax.jit
def efficient_waterfall_forward(x_nchw, fp):
    """x_nchw: [N, 3, H, W]  ->  [N, 21, H, W] in (0, 1)."""
    x = jnp.transpose(x_nchw, (0, 2, 3, 1)).astype(jnp.float32)       # NCHW -> NHWC
    patches, (N, Hs, Ws) = _patchify(x, K_DEC)                        # [M, 48]
    patches = patches.astype(jnp.bfloat16)

    y = fused_head(patches, fp)                                       # [M, 384] f32
    y = y[:, :C_TAIL]                                                 # drop padding

    # Scatter taps back to full resolution: col = (ki*4 + kj)*21 + c.
    out = y.reshape(N, Hs, Ws, K_DEC, K_DEC, C_OUT)
    out = out.transpose(0, 1, 3, 2, 4, 5)                             # [N, Hs, ki, Ws, kj, 21]
    out = out.reshape(N, Hs * K_DEC, Ws * K_DEC, C_OUT)               # NHWC
    return jnp.transpose(out, (0, 3, 1, 2))                           # NCHW [N, 21, H, W]


if __name__ == "__main__":
    key = jax.random.PRNGKey(0)
    k_params, k_x = jax.random.split(key)
    params = fuse_params(init_params(k_params))
    x = jax.random.normal(k_x, (2, 3, 16, 16), jnp.float32)           # NCHW like PyTorch

    out = efficient_waterfall_forward(x, params)
    out = jax.block_until_ready(out)

    assert out.shape == (2, 21, 16, 16), out.shape
    assert bool(jnp.all(jnp.isfinite(out)))
    assert bool(jnp.all((out > 0.0) & (out < 1.0)))                   # sigmoid range
    print("KERNEL_OK")
</pallas_src>

<mosaic_0001>
module attributes {stable_mosaic.version = 11 : i64} {
  func.func @_fused_kernel(%arg0: i32, %arg1: i32, %arg2: memref<32x48xbf16, #tpu.memory_space<vmem>>, %arg3: memref<48x160xbf16, #tpu.memory_space<vmem>>, %arg4: memref<1x160xf32, #tpu.memory_space<vmem>>, %arg5: memref<128x1280xbf16, #tpu.memory_space<vmem>>, %arg6: memref<1x1280xf32, #tpu.memory_space<vmem>>, %arg7: memref<1280x256xbf16, #tpu.memory_space<vmem>>, %arg8: memref<1x256xf32, #tpu.memory_space<vmem>>, %arg9: memref<256x384xbf16, #tpu.memory_space<vmem>>, %arg10: memref<32x384xbf16, #tpu.memory_space<vmem>>, %arg11: memref<1x384xf32, #tpu.memory_space<vmem>>, %arg12: memref<32x384xf32, #tpu.memory_space<vmem>>, %arg13: memref<32x128xbf16, #tpu.memory_space<vmem>>, %arg14: memref<32x32xbf16, #tpu.memory_space<vmem>>, %arg15: memref<32x256xf32, #tpu.memory_space<vmem>>) attributes {dimension_semantics = [#tpu.dimension_semantics<parallel>, #tpu.dimension_semantics<arbitrary>], iteration_bounds = array<i64: 1, 3>, scalar_prefetch = 0 : i64, scratch_operands = 3 : i64, tpu.core_type = #tpu.core_type<tc>, window_params = [{transform_indices = @transform_0, window_bounds = array<i64: 32, 48>}, {pipeline_mode = #tpu.pipeline_mode<synchronous>, transform_indices = @transform_1, window_bounds = array<i64: 48, 160>}, {pipeline_mode = #tpu.pipeline_mode<synchronous>, transform_indices = @transform_2, window_bounds = array<i64: 1, 160>}, {transform_indices = @transform_3, window_bounds = array<i64: 128, 1280>}, {transform_indices = @transform_4, window_bounds = array<i64: 1, 1280>}, {transform_indices = @transform_5, window_bounds = array<i64: 1280, 256>}, {pipeline_mode = #tpu.pipeline_mode<synchronous>, transform_indices = @transform_6, window_bounds = array<i64: 1, 256>}, {pipeline_mode = #tpu.pipeline_mode<synchronous>, transform_indices = @transform_7, window_bounds = array<i64: 256, 384>}, {pipeline_mode = #tpu.pipeline_mode<synchronous>, transform_indices = @transform_8, window_bounds = array<i64: 32, 384>}, {pipeline_mode = #tpu.pipeline_mode<synchronous>, transform_indices = @transform_9, window_bounds = array<i64: 1, 384>}, {transform_indices = @transform_10, window_bounds = array<i64: 32, 384>}]} {
    %c0_i32 = arith.constant 0 : i32
    %0 = arith.cmpi eq, %arg1, %c0_i32 : i32
    %1 = arith.extui %0 : i1 to i32
    %c0_i32_0 = arith.constant 0 : i32
    %2 = arith.cmpi ne, %1, %c0_i32_0 : i32
    scf.if %2 {
      %c0_15 = arith.constant 0 : index
      %c0_16 = arith.constant 0 : index
      %20 = vector.load %arg2[%c0_15, %c0_16] : memref<32x48xbf16, #tpu.memory_space<vmem>>, vector<32x48xbf16>
      %c0_17 = arith.constant 0 : index
      %c0_18 = arith.constant 0 : index
      %21 = vector.load %arg3[%c0_17, %c0_18] : memref<48x160xbf16, #tpu.memory_space<vmem>>, vector<48x160xbf16>
      %cst_19 = arith.constant dense<0.000000e+00> : vector<32x160xf32>
      %22 = tpu.matmul %20, %21, %cst_19 {dimension_numbers = #tpu.dot_dimension_numbers<[1], [0], [0], [1], [0, 0, 1, 1], [], []>} : vector<32x48xbf16>, vector<48x160xbf16>, vector<32x160xf32> -> vector<32x160xf32>
      %c0_20 = arith.constant 0 : index
      %c0_21 = arith.constant 0 : index
      %23 = vector.load %arg4[%c0_20, %c0_21] : memref<1x160xf32, #tpu.memory_space<vmem>>, vector<1x160xf32>
      %24 = vector.broadcast %23 : vector<1x160xf32> to vector<32x160xf32>
      %25 = arith.addf %22, %24 : vector<32x160xf32>
      %cst_22 = arith.constant 0.000000e+00 : f32
      %26 = vector.broadcast %cst_22 : f32 to vector<32x160xf32>
      %27 = arith.maximumf %25, %26 : vector<32x160xf32>
      %28 = vector.extract_strided_slice %27 {offsets = [0, 0], sizes = [32, 128], strides = [1, 1]} : vector<32x160xf32> to vector<32x128xf32>
      %29 = arith.truncf %28 : vector<32x128xf32> to vector<32x128xbf16>
      %c0_23 = arith.constant 0 : index
      %c0_24 = arith.constant 0 : index
      %30 = vector.load %arg13[%c0_23, %c0_24] : memref<32x128xbf16, #tpu.memory_space<vmem>>, vector<32x128xbf16>
      tpu.vector_store %arg13[%c0_23, %c0_24], %29 {strides = array<i32>} : memref<32x128xbf16, #tpu.memory_space<vmem>>, vector<32x128xbf16>,
      %31 = vector.extract_strided_slice %27 {offsets = [0, 128], sizes = [32, 32], strides = [1, 1]} : vector<32x160xf32> to vector<32x32xf32>
      %32 = arith.truncf %31 : vector<32x32xf32> to vector<32x32xbf16>
      %c0_25 = arith.constant 0 : index
      %c0_26 = arith.constant 0 : index
      %33 = vector.load %arg14[%c0_25, %c0_26] : memref<32x32xbf16, #tpu.memory_space<vmem>>, vector<32x32xbf16>
      tpu.vector_store %arg14[%c0_25, %c0_26], %32 {strides = array<i32>} : memref<32x32xbf16, #tpu.memory_space<vmem>>, vector<32x32xbf16>,
      %cst_27 = arith.constant 0.000000e+00 : f32
      %34 = vector.broadcast %cst_27 : f32 to vector<32x256xf32>
      %c0_28 = arith.constant 0 : index
      %c0_29 = arith.constant 0 : index
      %35 = vector.load %arg15[%c0_28, %c0_29] : memref<32x256xf32, #tpu.memory_space<vmem>>, vector<32x256xf32>
      tpu.vector_store %arg15[%c0_28, %c0_29], %34 {strides = array<i32>} : memref<32x256xf32, #tpu.memory_space<vmem>>, vector<32x256xf32>,
    } else {
    }
    %c0 = arith.constant 0 : index
    %c0_1 = arith.constant 0 : index
    %3 = vector.load %arg13[%c0, %c0_1] : memref<32x128xbf16, #tpu.memory_space<vmem>>, vector<32x128xbf16>
    %c0_2 = arith.constant 0 : index
    %c0_3 = arith.constant 0 : index
    %4 = vector.load %arg5[%c0_2, %c0_3] : memref<128x1280xbf16, #tpu.memory_space<vmem>>, vector<128x1280xbf16>
    %cst = arith.constant dense<0.000000e+00> : vector<32x1280xf32>
    %5 = tpu.matmul %3, %4, %cst {dimension_numbers = #tpu.dot_dimension_numbers<[1], [0], [0], [1], [0, 0, 1, 1], [], []>} : vector<32x128xbf16>, vector<128x1280xbf16>, vector<32x1280xf32> -> vector<32x1280xf32>
    %c0_4 = arith.constant 0 : index
    %c0_5 = arith.constant 0 : index
    %6 = vector.load %arg6[%c0_4, %c0_5] : memref<1x1280xf32, #tpu.memory_space<vmem>>, vector<1x1280xf32>
    %7 = vector.broadcast %6 : vector<1x1280xf32> to vector<32x1280xf32>
    %8 = arith.addf %5, %7 : vector<32x1280xf32>
    %cst_6 = arith.constant 0.000000e+00 : f32
    %9 = vector.broadcast %cst_6 : f32 to vector<32x1280xf32>
    %10 = arith.maximumf %8, %9 : vector<32x1280xf32>
    %11 = arith.truncf %10 : vector<32x1280xf32> to vector<32x1280xbf16>
    %c0_7 = arith.constant 0 : index
    %c0_8 = arith.constant 0 : index
    %12 = vector.load %arg15[%c0_7, %c0_8] : memref<32x256xf32, #tpu.memory_space<vmem>>, vector<32x256xf32>
    %c0_9 = arith.constant 0 : index
    %c0_10 = arith.constant 0 : index
    %13 = vector.load %arg7[%c0_9, %c0_10] : memref<1280x256xbf16, #tpu.memory_space<vmem>>, vector<1280x256xbf16>
    %cst_11 = arith.constant dense<0.000000e+00> : vector<32x256xf32>
    %14 = tpu.matmul %11, %13, %cst_11 {dimension_numbers = #tpu.dot_dimension_numbers<[1], [0], [0], [1], [0, 0, 1, 1], [], []>} : vector<32x1280xbf16>, vector<1280x256xbf16>, vector<32x256xf32> -> vector<32x256xf32>
    %15 = arith.addf %12, %14 : vector<32x256xf32>
    %c0_12 = arith.constant 0 : index
    %c0_13 = arith.constant 0 : index
    %16 = vector.load %arg15[%c0_12, %c0_13] : memref<32x256xf32, #tpu.memory_space<vmem>>, vector<32x256xf32>
    tpu.vector_store %arg15[%c0_12, %c0_13], %15 {strides = array<i32>} : memref<32x256xf32, #tpu.memory_space<vmem>>, vector<32x256xf32>,
    %c2_i32 = arith.constant 2 : i32
    %17 = arith.cmpi eq, %arg1, %c2_i32 : i32
    %18 = arith.extui %17 : i1 to i32
    %c0_i32_14 = arith.constant 0 : i32
    %19 = arith.cmpi ne, %18, %c0_i32_14 : i32
    scf.if %19 {
      %c0_15 = arith.constant 0 : index
      %c0_16 = arith.constant 0 : index
      %20 = vector.load %arg15[%c0_15, %c0_16] : memref<32x256xf32, #tpu.memory_space<vmem>>, vector<32x256xf32>
      %c0_17 = arith.constant 0 : index
      %c0_18 = arith.constant 0 : index
      %21 = vector.load %arg8[%c0_17, %c0_18] : memref<1x256xf32, #tpu.memory_space<vmem>>, vector<1x256xf32>
      %22 = vector.broadcast %21 : vector<1x256xf32> to vector<32x256xf32>
      %23 = arith.addf %20, %22 : vector<32x256xf32>
      %cst_19 = arith.constant 0.000000e+00 : f32
      %24 = vector.broadcast %cst_19 : f32 to vector<32x256xf32>
      %25 = arith.maximumf %23, %24 : vector<32x256xf32>
      %26 = arith.truncf %25 : vector<32x256xf32> to vector<32x256xbf16>
      %c0_20 = arith.constant 0 : index
      %c0_21 = arith.constant 0 : index
      %27 = vector.load %arg9[%c0_20, %c0_21] : memref<256x384xbf16, #tpu.memory_space<vmem>>, vector<256x384xbf16>
      %cst_22 = arith.constant dense<0.000000e+00> : vector<32x384xf32>
      %28 = tpu.matmul %26, %27, %cst_22 {dimension_numbers = #tpu.dot_dimension_numbers<[1], [0], [0], [1], [0, 0, 1, 1], [], []>} : vector<32x256xbf16>, vector<256x384xbf16>, vector<32x384xf32> -> vector<32x384xf32>
      %c0_23 = arith.constant 0 : index
      %c0_24 = arith.constant 0 : index
      %29 = vector.load %arg14[%c0_23, %c0_24] : memref<32x32xbf16, #tpu.memory_space<vmem>>, vector<32x32xbf16>
      %c0_25 = arith.constant 0 : index
      %c0_26 = arith.constant 0 : index
      %30 = vector.load %arg10[%c0_25, %c0_26] : memref<32x384xbf16, #tpu.memory_space<vmem>>, vector<32x384xbf16>
      %cst_27 = arith.constant dense<0.000000e+00> : vector<32x384xf32>
      %31 = tpu.matmul %29, %30, %cst_27 {dimension_numbers = #tpu.dot_dimension_numbers<[1], [0], [0], [1], [0, 0, 1, 1], [], []>} : vector<32x32xbf16>, vector<32x384xbf16>, vector<32x384xf32> -> vector<32x384xf32>
      %32 = arith.addf %28, %31 : vector<32x384xf32>
      %c0_28 = arith.constant 0 : index
      %c0_29 = arith.constant 0 : index
      %33 = vector.load %arg11[%c0_28, %c0_29] : memref<1x384xf32, #tpu.memory_space<vmem>>, vector<1x384xf32>
      %34 = vector.broadcast %33 : vector<1x384xf32> to vector<32x384xf32>
      %35 = arith.addf %32, %34 : vector<32x384xf32>
      %36 = arith.negf %35 : vector<32x384xf32>
      %37 = math.exp %36 : vector<32x384xf32>
      %cst_30 = arith.constant 1.000000e+00 : f32
      %38 = vector.broadcast %cst_30 : f32 to vector<32x384xf32>
      %39 = arith.addf %38, %37 : vector<32x384xf32>
      %40 = arith.divf %38, %39 : vector<32x384xf32>
      %c0_31 = arith.constant 0 : index
      %c0_32 = arith.constant 0 : index
      %41 = vector.load %arg12[%c0_31, %c0_32] : memref<32x384xf32, #tpu.memory_space<vmem>>, vector<32x384xf32>
      tpu.vector_store %arg12[%c0_31, %c0_32], %40 {strides = array<i32>} : memref<32x384xf32, #tpu.memory_space<vmem>>, vector<32x384xf32>,
    } else {
    }
    return
  }
  func.func @transform_0(%arg0: i32, %arg1: i32) -> (i32, i32) {
    %c0_i32 = arith.constant 0 : i32
    %c0_i32_0 = arith.constant 0 : i32
    return %arg0, %c0_i32 : i32, i32
  }
  func.func @transform_1(%arg0: i32, %arg1: i32) -> (i32, i32) {
    %c0_i32 = arith.constant 0 : i32
    %c0_i32_0 = arith.constant 0 : i32
    %c0_i32_1 = arith.constant 0 : i32
    return %c0_i32, %c0_i32_0 : i32, i32
  }
  func.func @transform_2(%arg0: i32, %arg1: i32) -> (i32, i32) {
    %c0_i32 = arith.constant 0 : i32
    %c0_i32_0 = arith.constant 0 : i32
    %c0_i32_1 = arith.constant 0 : i32
    return %c0_i32, %c0_i32_0 : i32, i32
  }
  func.func @transform_3(%arg0: i32, %arg1: i32) -> (i32, i32) {
    %c0_i32 = arith.constant 0 : i32
    %c0_i32_0 = arith.constant 0 : i32
    return %c0_i32, %arg1 : i32, i32
  }
  func.func @transform_4(%arg0: i32, %arg1: i32) -> (i32, i32) {
    %c0_i32 = arith.constant 0 : i32
    %c0_i32_0 = arith.constant 0 : i32
    return %c0_i32, %arg1 : i32, i32
  }
  func.func @transform_5(%arg0: i32, %arg1: i32) -> (i32, i32) {
    %c0_i32 = arith.constant 0 : i32
    %c0_i32_0 = arith.constant 0 : i32
    return %arg1, %c0_i32 : i32, i32
  }
  func.func @transform_6(%arg0: i32, %arg1: i32) -> (i32, i32) {
    %c0_i32 = arith.constant 0 : i32
    %c0_i32_0 = arith.constant 0 : i32
    %c0_i32_1 = arith.constant 0 : i32
    return %c0_i32, %c0_i32_0 : i32, i32
  }
  func.func @transform_7(%arg0: i32, %arg1: i32) -> (i32, i32) {
    %c0_i32 = arith.constant 0 : i32
    %c0_i32_0 = arith.constant 0 : i32
    %c0_i32_1 = arith.constant 0 : i32
    return %c0_i32, %c0_i32_0 : i32, i32
  }
  func.func @transform_8(%arg0: i32, %arg1: i32) -> (i32, i32) {
    %c0_i32 = arith.constant 0 : i32
    %c0_i32_0 = arith.constant 0 : i32
    %c0_i32_1 = arith.constant 0 : i32
    return %c0_i32, %c0_i32_0 : i32, i32
  }
  func.func @transform_9(%arg0: i32, %arg1: i32) -> (i32, i32) {
    %c0_i32 = arith.constant 0 : i32
    %c0_i32_0 = arith.constant 0 : i32
    %c0_i32_1 = arith.constant 0 : i32
    return %c0_i32, %c0_i32_0 : i32, i32
  }
  func.func @transform_10(%arg0: i32, %arg1: i32) -> (i32, i32) {
    %c0_i32 = arith.constant 0 : i32
    %c0_i32_0 = arith.constant 0 : i32
    return %arg0, %c0_i32 : i32, i32
  }
}

</mosaic_0001>

<llo_original>
// kernel: efficient_waterfall_forward.1
$region0: #{efficient_waterfall_forward.1}
  #allocation0 [shape = 'u32[]', space=smem, size = 0x4, offset = 0x4, fixed_abs, tag = 'smem constant byte address 0x4 - core index']
  #allocation1 [shape = 'u32[144,128]{1,0:T(1,128)}', space=vmem, size = 0x12000, scoped, tag = 'internal scratch']
  #allocation2 [shape = 'bf16[32,128]{1,0:T(16,128)(2,1)}', space=vmem, size = 0x2000, scoped, tag = 'scratch operand']
  #allocation3 [shape = 'bf16[32,32]{1,0:T(16,128)(2,1)}', space=vmem, size = 0x2000, scoped, tag = 'scratch operand']
  #allocation4 [shape = 'f32[32,256]{1,0:T(8,128)}', space=vmem, size = 0x8000, scoped, tag = 'scratch operand']
  %s0 = inlined_call_operand.vmem [shape: bf16[32,48], index: 0, kind: input, shape index: {}]
  %s1 = inlined_call_operand.hbm [shape: bf16[48,160], index: 1, kind: input, shape index: {}]
  %s2 = inlined_call_operand.hbm [shape: f32[1,160], index: 2, kind: input, shape index: {}]
  %s3 = inlined_call_operand.hbm [shape: bf16[128,3840], index: 3, kind: input, shape index: {}]
  %s4 = inlined_call_operand.hbm [shape: f32[1,3840], index: 4, kind: input, shape index: {}]
  %s5 = inlined_call_operand.hbm [shape: bf16[3840,256], index: 5, kind: input, shape index: {}]
  %s6 = inlined_call_operand.hbm [shape: f32[1,256], index: 6, kind: input, shape index: {}]
  %s7 = inlined_call_operand.hbm [shape: bf16[256,384], index: 7, kind: input, shape index: {}]
  %s8 = inlined_call_operand.hbm [shape: bf16[32,384], index: 8, kind: input, shape index: {}]
  %s9 = inlined_call_operand.hbm [shape: f32[1,384], index: 9, kind: input, shape index: {}]
  %s10 = inlined_call_operand.vmem [shape: f32[32,384], index: 10, kind: output, shape index: {}]
  %s11 = sld [smem:[#allocation0]]
  $region117: #{efficient_waterfall_forward.1} parent=0
    _
  %s13 = ssub.s32 1, %s11
  %s14 = scalar_select 0, %s13, %s11
  $region1: #{efficient_waterfall_forward.1} parent=0
    #allocation5 [shape = 'u8[24576]{0}', space=vmem, size = 0x6000, scoped, tag = 'input window, operand 1, single buffered']
    #allocation6 [shape = 's32[2]{0}', space=sflag, size = 0x8, scoped, tag = 'scoped memory for efficient_waterfall_forward.1']
    #allocation7 [shape = 'u8[1024]{0}', space=vmem, size = 0x400, scoped, tag = 'input window, operand 2, single buffered']
    #allocation8 [shape = 's32[1]{0}', space=sflag, size = 0x4, scoped, tag = 'scoped memory for efficient_waterfall_forward.1']
    #allocation9 [shape = 'u8[655360]{0}', space=vmem, size = 0xa0000, scoped, tag = 'input window, operand 3']
    #allocation10 [shape = 'u8[10240]{0}', space=vmem, size = 0x2800, scoped, tag = 'input window, operand 4']
    #allocation11 [shape = 'u8[1310720]{0}', space=vmem, size = 0x140000, scoped, tag = 'input window, operand 5']
    #allocation12 [shape = 'u8[1024]{0}', space=vmem, size = 0x400, scoped, tag = 'input window, operand 6, single buffered']
    #allocation13 [shape = 'u8[196608]{0}', space=vmem, size = 0x30000, scoped, tag = 'input window, operand 7, single buffered']
    #allocation14 [shape = 's32[1]{0}', space=sflag, size = 0x4, scoped, tag = 'scoped memory for efficient_waterfall_forward.1']
    #allocation15 [shape = 'u8[24576]{0}', space=vmem, size = 0x6000, scoped, tag = 'input window, operand 8, single buffered']
    #allocation16 [shape = 'u8[1536]{0}', space=vmem, size = 0x800, scoped, tag = 'input window, operand 9, single buffered']
    #allocation17 [shape = 's32[1]{0}', space=sflag, size = 0x4, scoped, tag = 'scoped memory for efficient_waterfall_forward.1']
    %15 = vsyncpa [#allocation6], 0
    %16 = vsyncpa [#allocation8], 0
    %17 = vsyncpa [#allocation14], 0
    %18 = vsyncpa [#allocation17], 0
    loop: start=0, step=1, limit=5
    $region2: #{efficient_waterfall_forward.1} parent=1 // loop_pre_header
      _
    $region3: #{efficient_waterfall_forward.1} parent=1 // loop_header
      %s20 = sphi 0, %s24
      %p21 = scmp.ge.s32.totalorder %s20, 5
      %s27 = sphi 0, %s39
      %s28 = sphi 0, %s35
      %s29 = sphi 0, %s27
      %s30 = sphi 0, %s28
      %s31 = sphi 0, %s29
      %s32 = sphi 0, %s30
      %s42 = sphi 0, %s44
      %s45 = sphi 0, %s42
      %s46 = sphi 0, %s45
      %s62 = sphi 0, %s46
      %s66 = sphi 0, %s66
      %s68 = sphi 0, %s66
      %s69 = sphi 0, %s68
      %s83 = sphi 0, %s69
      %s87 = sphi 0, %s87
      %s89 = sphi 0, %s87
      %s90 = sphi 0, %s89
      %s104 = sphi 0, %s90
      %s110 = sphi 0, %s112
      %s113 = sphi 0, %s110
      %s114 = sphi 0, %s113
      %s130 = sphi 0, %s114
      %s136 = sphi 0, %s138
      %s139 = sphi 0, %s136
      %s140 = sphi 0, %s139
      %s156 = sphi 0, %s140
      %s162 = sphi 0, %s164
      %s165 = sphi 0, %s162
      %s166 = sphi 0, %s165
      %s182 = sphi 0, %s166
      %s186 = sphi 0, %s186
      %s188 = sphi 0, %s186
      %s189 = sphi 0, %s188
      %s203 = sphi 0, %s189
      %s207 = sphi 0, %s207
      %s209 = sphi 0, %s207
      %s210 = sphi 0, %s209
      %s224 = sphi 0, %s210
      %s228 = sphi 0, %s228
      %s230 = sphi 0, %s228
      %s231 = sphi 0, %s230
      %s245 = sphi 0, %s231
      %s249 = sphi 0, %s249
      %s251 = sphi 0, %s249
      %s252 = sphi 0, %s251
      %s266 = sphi 0, %s252
      %s272 = sphi 0, %s274
      %s275 = sphi 0, %s272
      %s276 = sphi 0, %s275
      %s292 = sphi 0, %s276
    $region4: #{efficient_waterfall_forward.1} parent=1 // loop_header_branch
      %23 = sbr.rel (%p21) target = $region8
    $region5: #{efficient_waterfall_forward.1} parent=1 // loop_body
      %s25 = ssub.s32 %s20, 1
      %s26 = ssub.s32 %s20, 2
      %s33 = sadd.s32 1, %s28
      %p34 = scmp.ge.s32.totalorder %s33, 3
      %s35 = scalar_select %p34, 0, %s33
      %s36 = sadd.s32 1, %s27
      %s37 = scalar_select %p34, %s36, %s27
      %p38 = scmp.ge.s32.totalorder %s37, 1
      %s39 = scalar_select %p38, 0, %s37
      %s40 = ssub.s32 %s27, %s39
      %p41 = scmp.eq.s32.totalorder %s40, 0
      %s43 = sadd.s32 %s42, 1
      %s44 = scalar_select %p41, %s42, %s43
      %p47 = pneg %p41
      %p48 = scmp.eq.s32.totalorder %s20, 2
      %p49 = por %p47, %p48
      %p50 = scmp.ne.s32.totalorder %s42, %s45
      %p51 = scmp.eq.s32.totalorder %s20, 0
      %p52 = por %p50, %p51
      %p53 = scmp.ne.s32.totalorder %s42, %s45
      %p54 = scmp.eq.s32.totalorder %s25, 2
      %p55 = por %p53, %p54
      %p56 = scmp.ne.s32.totalorder %s45, %s46
      %p57 = scmp.eq.s32.totalorder %s25, 0
      %p58 = por %p56, %p57
      %p59 = scmp.ne.s32.totalorder %s45, %s46
      %p60 = scmp.eq.s32.totalorder %s26, 2
      %p61 = por %p59, %p60
      %p63 = scmp.ne.s32.totalorder %s46, %s62
      %p64 = scmp.eq.s32.totalorder %s26, 0
      %p65 = por %p63, %p64
      %s67 = sadd.s32 %s66, 1
      %p70 = scmp.eq.s32.totalorder %s20, 2
      %p71 = scmp.ne.s32.totalorder %s66, %s68
      %p72 = scmp.eq.s32.totalorder %s20, 0
      %p73 = por %p71, %p72
      %p74 = scmp.ne.s32.totalorder %s66, %s68
      %p75 = scmp.eq.s32.totalorder %s25, 2
      %p76 = por %p74, %p75
      %p77 = scmp.ne.s32.totalorder %s68, %s69
      %p78 = scmp.eq.s32.totalorder %s25, 0
      %p79 = por %p77, %p78
      %p80 = scmp.ne.s32.totalorder %s68, %s69
      %p81 = scmp.eq.s32.totalorder %s26, 2
      %p82 = por %p80, %p81
      %p84 = scmp.ne.s32.totalorder %s69, %s83
      %p85 = scmp.eq.s32.totalorder %s26, 0
      %p86 = por %p84, %p85
      %s88 = sadd.s32 %s87, 1
      %p91 = scmp.eq.s32.totalorder %s20, 2
      %p92 = scmp.ne.s32.totalorder %s87, %s89
      %p93 = scmp.eq.s32.totalorder %s20, 0
      %p94 = por %p92, %p93
      %p95 = scmp.ne.s32.totalorder %s87, %s89
      %p96 = scmp.eq.s32.totalorder %s25, 2
      %p97 = por %p95, %p96
      %p98 = scmp.ne.s32.totalorder %s89, %s90
      %p99 = scmp.eq.s32.totalorder %s25, 0
      %p100 = por %p98, %p99
      %p101 = scmp.ne.s32.totalorder %s89, %s90
      %p102 = scmp.eq.s32.totalorder %s26, 2
      %p103 = por %p101, %p102
      %p105 = scmp.ne.s32.totalorder %s90, %s104
      %p106 = scmp.eq.s32.totalorder %s26, 0
      %p107 = por %p105, %p106
      %s108 = ssub.s32 %s28, %s35
      %p109 = scmp.eq.s32.totalorder %s108, 0
      %s111 = sadd.s32 %s110, 1
      %s112 = scalar_select %p109, %s110, %s111
      %p115 = pneg %p109
      %p116 = scmp.eq.s32.totalorder %s20, 2
      %p117 = por %p115, %p116
      %p118 = scmp.ne.s32.totalorder %s110, %s113
      %p119 = scmp.eq.s32.totalorder %s20, 0
      %p120 = por %p118, %p119
      %p121 = scmp.ne.s32.totalorder %s110, %s113
      %p122 = scmp.eq.s32.totalorder %s25, 2
      %p123 = por %p121, %p122
      %p124 = scmp.ne.s32.totalorder %s113, %s114
      %p125 = scmp.eq.s32.totalorder %s25, 0
      %p126 = por %p124, %p125
      %p127 = scmp.ne.s32.totalorder %s113, %s114
      %p128 = scmp.eq.s32.totalorder %s26, 2
      %p129 = por %p127, %p128
      %p131 = scmp.ne.s32.totalorder %s114, %s130
      %p132 = scmp.eq.s32.totalorder %s26, 0
      %p133 = por %p131, %p132
      %s134 = ssub.s32 %s28, %s35
      %p135 = scmp.eq.s32.totalorder %s134, 0
      %s137 = sadd.s32 %s136, 1
      %s138 = scalar_select %p135, %s136, %s137
      %p141 = pneg %p135
      %p142 = scmp.eq.s32.totalorder %s20, 2
      %p143 = por %p141, %p142
      %p144 = scmp.ne.s32.totalorder %s136, %s139
      %p145 = scmp.eq.s32.totalorder %s20, 0
      %p146 = por %p144, %p145
      %p147 = scmp.ne.s32.totalorder %s136, %s139
      %p148 = scmp.eq.s32.totalorder %s25, 2
      %p149 = por %p147, %p148
      %p150 = scmp.ne.s32.totalorder %s139, %s140
      %p151 = scmp.eq.s32.totalorder %s25, 0
      %p152 = por %p150, %p151
      %p153 = scmp.ne.s32.totalorder %s139, %s140
      %p154 = scmp.eq.s32.totalorder %s26, 2
      %p155 = por %p153, %p154
      %p157 = scmp.ne.s32.totalorder %s140, %s156
      %p158 = scmp.eq.s32.totalorder %s26, 0
      %p159 = por %p157, %p158
      %s160 = ssub.s32 %s28, %s35
      %p161 = scmp.eq.s32.totalorder %s160, 0
      %s163 = sadd.s32 %s162, 1
      %s164 = scalar_select %p161, %s162, %s163
      %p167 = pneg %p161
      %p168 = scmp.eq.s32.totalorder %s20, 2
      %p169 = por %p167, %p168
      %p170 = scmp.ne.s32.totalorder %s162, %s165
      %p171 = scmp.eq.s32.totalorder %s20, 0
      %p172 = por %p170, %p171
      %p173 = scmp.ne.s32.totalorder %s162, %s165
      %p174 = scmp.eq.s32.totalorder %s25, 2
      %p175 = por %p173, %p174
      %p176 = scmp.ne.s32.totalorder %s165, %s166
      %p177 = scmp.eq.s32.totalorder %s25, 0
      %p178 = por %p176, %p177
      %p179 = scmp.ne.s32.totalorder %s165, %s166
      %p180 = scmp.eq.s32.totalorder %s26, 2
      %p181 = por %p179, %p180
      %p183 = scmp.ne.s32.totalorder %s166, %s182
      %p184 = scmp.eq.s32.totalorder %s26, 0
      %p185 = por %p183, %p184
      %s187 = sadd.s32 %s186, 1
      %p190 = scmp.eq.s32.totalorder %s20, 2
      %p191 = scmp.ne.s32.totalorder %s186, %s188
      %p192 = scmp.eq.s32.totalorder %s20, 0
      %p193 = por %p191, %p192
      %p194 = scmp.ne.s32.totalorder %s186, %s188
      %p195 = scmp.eq.s32.totalorder %s25, 2
      %p196 = por %p194, %p195
      %p197 = scmp.ne.s32.totalorder %s188, %s189
      %p198 = scmp.eq.s32.totalorder %s25, 0
      %p199 = por %p197, %p198
      %p200 = scmp.ne.s32.totalorder %s188, %s189
      %p201 = scmp.eq.s32.totalorder %s26, 2
      %p202 = por %p200, %p201
      %p204 = scmp.ne.s32.totalorder %s189, %s203
      %p205 = scmp.eq.s32.totalorder %s26, 0
      %p206 = por %p204, %p205
      %s208 = sadd.s32 %s207, 1
      %p211 = scmp.eq.s32.totalorder %s20, 2
      %p212 = scmp.ne.s32.totalorder %s207, %s209
      %p213 = scmp.eq.s32.totalorder %s20, 0
      %p214 = por %p212, %p213
      %p215 = scmp.ne.s32.totalorder %s207, %s209
      %p216 = scmp.eq.s32.totalorder %s25, 2
      %p217 = por %p215, %p216
      %p218 = scmp.ne.s32.totalorder %s209, %s210
      %p219 = scmp.eq.s32.totalorder %s25, 0
      %p220 = por %p218, %p219
      %p221 = scmp.ne.s32.totalorder %s209, %s210
      %p222 = scmp.eq.s32.totalorder %s26, 2
      %p223 = por %p221, %p222
      %p225 = scmp.ne.s32.totalorder %s210, %s224
      %p226 = scmp.eq.s32.totalorder %s26, 0
      %p227 = por %p225, %p226
      %s229 = sadd.s32 %s228, 1
      %p232 = scmp.eq.s32.totalorder %s20, 2
      %p233 = scmp.ne.s32.totalorder %s228, %s230
      %p234 = scmp.eq.s32.totalorder %s20, 0
      %p235 = por %p233, %p234
      %p236 = scmp.ne.s32.totalorder %s228, %s230
      %p237 = scmp.eq.s32.totalorder %s25, 2
      %p238 = por %p236, %p237
      %p239 = scmp.ne.s32.totalorder %s230, %s231
      %p240 = scmp.eq.s32.totalorder %s25, 0
      %p241 = por %p239, %p240
      %p242 = scmp.ne.s32.totalorder %s230, %s231
      %p243 = scmp.eq.s32.totalorder %s26, 2
      %p244 = por %p242, %p243
      %p246 = scmp.ne.s32.totalorder %s231, %s245
      %p247 = scmp.eq.s32.totalorder %s26, 0
      %p248 = por %p246, %p247
      %s250 = sadd.s32 %s249, 1
      %p253 = scmp.eq.s32.totalorder %s20, 2
      %p254 = scmp.ne.s32.totalorder %s249, %s251
      %p255 = scmp.eq.s32.totalorder %s20, 0
      %p256 = por %p254, %p255
      %p257 = scmp.ne.s32.totalorder %s249, %s251
      %p258 = scmp.eq.s32.totalorder %s25, 2
      %p259 = por %p257, %p258
      %p260 = scmp.ne.s32.totalorder %s251, %s252
      %p261 = scmp.eq.s32.totalorder %s25, 0
      %p262 = por %p260, %p261
      %p263 = scmp.ne.s32.totalorder %s251, %s252
      %p264 = scmp.eq.s32.totalorder %s26, 2
      %p265 = por %p263, %p264
      %p267 = scmp.ne.s32.totalorder %s252, %s266
      %p268 = scmp.eq.s32.totalorder %s26, 0
      %p269 = por %p267, %p268
      %s270 = ssub.s32 %s27, %s39
      %p271 = scmp.eq.s32.totalorder %s270, 0
      %s273 = sadd.s32 %s272, 1
      %s274 = scalar_select %p271, %s272, %s273
      %p277 = pneg %p271
      %p278 = scmp.eq.s32.totalorder %s20, 2
      %p279 = por %p277, %p278
      %p280 = scmp.ne.s32.totalorder %s272, %s275
      %p281 = scmp.eq.s32.totalorder %s20, 0
      %p282 = por %p280, %p281
      %p283 = scmp.ne.s32.totalorder %s272, %s275
      %p284 = scmp.eq.s32.totalorder %s25, 2
      %p285 = por %p283, %p284
      %p286 = scmp.ne.s32.totalorder %s275, %s276
      %p287 = scmp.eq.s32.totalorder %s25, 0
      %p288 = por %p286, %p287
      %p289 = scmp.ne.s32.totalorder %s275, %s276
      %p290 = scmp.eq.s32.totalorder %s26, 2
      %p291 = por %p289, %p290
      %p293 = scmp.ne.s32.totalorder %s276, %s292
      %p294 = scmp.eq.s32.totalorder %s26, 0
      %p295 = por %p293, %p294
      %p296 = scmp.le.s32.totalorder 1, %s20
      %p297 = scmp.lt.s32.totalorder %s20, 4
      %p298 = pnand %p296, %p297
      %p299 = pneg %p298
      // Predicated region
      $region9: #{efficient_waterfall_forward.1} parent=5 // pred_check
        _
      $region10: #{efficient_waterfall_forward.1} parent=5 // pred_check_branch
        %301 = sbr.rel (%p298) target = $region12
      $region11: #{efficient_waterfall_forward.1} parent=5 // pred_region
        %s302 = ssub.s32 %s20, 1
        // Predicated region
        $region13: #{efficient_waterfall_forward.1} parent=11 // pred_check
          %p303 = pneg %p58
        $region14: #{efficient_waterfall_forward.1} parent=11 // pred_check_branch
          %305 = sbr.rel (%p303) target = $region16
        $region15: #{efficient_waterfall_forward.1} parent=11 // pred_region
          %s306 = smul.u32 4, %s29
          %p307 = scmp.lt.s32.totalorder %s306, 3
          %s308 = scalar_select %p307, %s306, 3
          %s309 = smul.addr %s308, 4
          %s310 = scalar_lea.vmem %s0, %s309
          %s311 = smul.u32 4, %s29
        $region16: #{efficient_waterfall_forward.1} parent=11 // pred_fallthru
          _
        // Predicated region
        $region17: #{efficient_waterfall_forward.1} parent=11 // pred_check
          %p312 = pneg %p79
        $region18: #{efficient_waterfall_forward.1} parent=11 // pred_check_branch
          %314 = sbr.rel (%p312) target = $region20
        $region19: #{efficient_waterfall_forward.1} parent=11 // pred_region
          %s316 = ssub.s32 768, 768
          %317 = vsyncadd [#allocation6], %s316
          %s318 = sshll.u32 [#allocation5], 4
          %s319 = int_to_ptr.vmem [resolvable:$true] %s318
          %324 = dma.hbm_to_vmem [thread:$0]  %s1, 768, %s319, [#allocation6], 128, 128, 8
        $region20: #{efficient_waterfall_forward.1} parent=11 // pred_fallthru
          _
        // Predicated region
        $region21: #{efficient_waterfall_forward.1} parent=11 // pred_check
          %p325 = pneg %p100
        $region22: #{efficient_waterfall_forward.1} parent=11 // pred_check_branch
          %327 = sbr.rel (%p325) target = $region24
        $region23: #{efficient_waterfall_forward.1} parent=11 // pred_region
          %s329 = ssub.s32 32, 32
          %330 = vsyncadd [#allocation8], %s329
          %s332 = sshll.u32 [#allocation7], 4
          %s333 = int_to_ptr.vmem [resolvable:$true] %s332
          %335 = dma.hbm_to_vmem [thread:$0]  %s2, 32, %s333, [#allocation8]
        $region24: #{efficient_waterfall_forward.1} parent=11 // pred_fallthru
          _
        // Predicated region
        $region25: #{efficient_waterfall_forward.1} parent=11 // pred_check
          %p336 = pneg %p199
        $region26: #{efficient_waterfall_forward.1} parent=11 // pred_check_branch
          %338 = sbr.rel (%p336) target = $region28
        $region27: #{efficient_waterfall_forward.1} parent=11 // pred_region
          %s340 = ssub.s32 32, 32
          %341 = vsyncadd [#allocation8], %s340
          %s343 = sshll.u32 [#allocation12], 4
          %s344 = int_to_ptr.vmem [resolvable:$true] %s343
          %346 = dma.hbm_to_vmem [thread:$0]  %s6, 32, %s344, [#allocation8]
        $region28: #{efficient_waterfall_forward.1} parent=11 // pred_fallthru
          _
        // Predicated region
        $region29: #{efficient_waterfall_forward.1} parent=11 // pred_check
          %p347 = pneg %p220
        $region30: #{efficient_waterfall_forward.1} parent=11 // pred_check_branch
          %349 = sbr.rel (%p347) target = $region32
        $region31: #{efficient_waterfall_forward.1} parent=11 // pred_region
          %s351 = ssub.s32 6144, 6144
          %352 = vsyncadd [#allocation14], %s351
          %s353 = sshll.u32 [#allocation13], 4
          %s354 = int_to_ptr.vmem [resolvable:$true] %s353
          %359 = dma.hbm_to_vmem [thread:$0]  %s7, 6144, %s354, [#allocation14], 192, 192, 12
        $region32: #{efficient_waterfall_forward.1} parent=11 // pred_fallthru
          _
        // Predicated region
        $region33: #{efficient_waterfall_forward.1} parent=11 // pred_check
          %p360 = pneg %p241
        $region34: #{efficient_waterfall_forward.1} parent=11 // pred_check_branch
          %362 = sbr.rel (%p360) target = $region36
        $region35: #{efficient_waterfall_forward.1} parent=11 // pred_region
          %s364 = ssub.s32 768, 768
          %365 = vsyncadd [#allocation14], %s364
          %s366 = sshll.u32 [#allocation15], 4
          %s367 = int_to_ptr.vmem [resolvable:$true] %s366
          %372 = dma.hbm_to_vmem [thread:$0]  %s8, 768, %s367, [#allocation14], 192, 192, 12
        $region36: #{efficient_waterfall_forward.1} parent=11 // pred_fallthru
          _
        // Predicated region
        $region37: #{efficient_waterfall_forward.1} parent=11 // pred_check
          %p373 = pneg %p262
        $region38: #{efficient_waterfall_forward.1} parent=11 // pred_check_branch
          %375 = sbr.rel (%p373) target = $region40
        $region39: #{efficient_waterfall_forward.1} parent=11 // pred_region
          %s377 = ssub.s32 48, 48
          %378 = vsyncadd [#allocation17], %s377
          %s380 = sshll.u32 [#allocation16], 4
          %s381 = int_to_ptr.vmem [resolvable:$true] %s380
          %383 = dma.hbm_to_vmem [thread:$0]  %s9, 48, %s381, [#allocation17]
        $region40: #{efficient_waterfall_forward.1} parent=11 // pred_fallthru
          _
      $region12: #{efficient_waterfall_forward.1} parent=5 // pred_fallthru
        _
      %p384 = scmp.lt.s32.totalorder %s20, 3
      // Predicated region
      $region41: #{efficient_waterfall_forward.1} parent=5 // pred_check
        %p385 = pneg %p384
      $region42: #{efficient_waterfall_forward.1} parent=5 // pred_check_branch
        %387 = sbr.rel (%p385) target = $region44
      $region43: #{efficient_waterfall_forward.1} parent=5 // pred_region
        // Predicated region
        $region45: #{efficient_waterfall_forward.1} parent=43 // pred_check
          %p388 = pneg %p120
        $region46: #{efficient_waterfall_forward.1} parent=43 // pred_check_branch
          %390 = sbr.rel (%p388) target = $region48
        $region47: #{efficient_waterfall_forward.1} parent=43 // pred_region
          %s391 = sand.u32 %s20, 1
          %s392 = scalar_lea.sflag [#allocation6], %s391
          %s393 = sand.u32 %s110, 1
          %s394 = smul.addr %s393, 640
          %s395 = scalar_lea.vmem [#allocation9], %s394
          %s396 = smul.u32 10, %s28
          %s398 = ssub.s32 10240, 10240
          %399 = vsyncadd %s392, %s398
          %s400 = smul.addr %s396, 64
          %s401 = scalar_lea.hbm %s3, %s400
          %s402 = sshll.u32 %s395, 4
          %s403 = int_to_ptr.vmem [resolvable:$true] %s402
          %408 = dma.hbm_to_vmem [thread:$0]  %s401, 10240, %s403, %s392, 1920, 640, 40
        $region48: #{efficient_waterfall_forward.1} parent=43 // pred_fallthru
          _
        // Predicated region
        $region49: #{efficient_waterfall_forward.1} parent=43 // pred_check
          %p409 = pneg %p146
        $region50: #{efficient_waterfall_forward.1} parent=43 // pred_check_branch
          %411 = sbr.rel (%p409) target = $region52
        $region51: #{efficient_waterfall_forward.1} parent=43 // pred_region
          %s412 = sand.u32 %s20, 1
          %s413 = scalar_lea.sflag [#allocation6], %s412
          %s414 = sand.u32 %s136, 1
          %s415 = smul.addr %s414, 10
          %s416 = scalar_lea.vmem [#allocation10], %s415
          %s417 = smul.u32 10, %s28
          %s419 = ssub.s32 160, 160
          %420 = vsyncadd %s413, %s419
          %s421 = smul.addr %s417, 16
          %s422 = scalar_lea.hbm %s4, %s421
          %s424 = sshll.u32 %s416, 4
          %s425 = int_to_ptr.vmem [resolvable:$true] %s424
          %427 = dma.hbm_to_vmem [thread:$0]  %s422, 160, %s425, %s413
        $region52: #{efficient_waterfall_forward.1} parent=43 // pred_fallthru
          _
        // Predicated region
        $region53: #{efficient_waterfall_forward.1} parent=43 // pred_check
          %p428 = pneg %p172
        $region54: #{efficient_waterfall_forward.1} parent=43 // pred_check_branch
          %430 = sbr.rel (%p428) target = $region56
        $region55: #{efficient_waterfall_forward.1} parent=43 // pred_region
          %s431 = sand.u32 %s20, 1
          %s432 = scalar_lea.sflag [#allocation6], %s431
          %s433 = sand.u32 %s162, 1
          %s434 = smul.addr %s433, 1280
          %s435 = scalar_lea.vmem [#allocation11], %s434
          %s436 = smul.u32 160, %s28
          %s438 = ssub.s32 20480, 20480
          %439 = vsyncadd %s432, %s438
          %s440 = smul.addr %s436, 2
          %s441 = smul.addr %s440, 64
          %s442 = scalar_lea.hbm %s5, %s441
          %s443 = sshll.u32 %s435, 4
          %s444 = int_to_ptr.vmem [resolvable:$true] %s443
          %449 = dma.hbm_to_vmem [thread:$0]  %s442, 20480, %s444, %s432, 128, 128, 8
        $region56: #{efficient_waterfall_forward.1} parent=43 // pred_fallthru
          _
      $region44: #{efficient_waterfall_forward.1} parent=5 // pred_fallthru
        _
      %p450 = scmp.le.s32.totalorder 1, %s20
      %p451 = scmp.lt.s32.totalorder %s20, 4
      %p452 = pnand %p450, %p451
      %p453 = pneg %p452
      // Predicated region
      $region57: #{efficient_waterfall_forward.1} parent=5 // pred_check
        _
      $region58: #{efficient_waterfall_forward.1} parent=5 // pred_check_branch
        %455 = sbr.rel (%p452) target = $region60
      $region59: #{efficient_waterfall_forward.1} parent=5 // pred_region
        %s456 = ssub.s32 %s20, 1
        // Predicated region
        $region61: #{efficient_waterfall_forward.1} parent=59 // pred_check
          %p457 = pneg %p79
        $region62: #{efficient_waterfall_forward.1} parent=59 // pred_check_branch
          %459 = sbr.rel (%p457) target = $region64
        $region63: #{efficient_waterfall_forward.1} parent=59 // pred_region
          %460 = dma.done [#allocation6], 768
        $region64: #{efficient_waterfall_forward.1} parent=59 // pred_fallthru
          _
        // Predicated region
        $region65: #{efficient_waterfall_forward.1} parent=59 // pred_check
          %p461 = pneg %p100
        $region66: #{efficient_waterfall_forward.1} parent=59 // pred_check_branch
          %463 = sbr.rel (%p461) target = $region68
        $region67: #{efficient_waterfall_forward.1} parent=59 // pred_region
          %464 = dma.done [#allocation8], 32
        $region68: #{efficient_waterfall_forward.1} parent=59 // pred_fallthru
          _
        %s465 = sand.u32 %s25, 1
        %s466 = scalar_lea.sflag [#allocation6], %s465
        %s467 = sand.u32 %s113, 1
        %s468 = smul.addr %s467, 640
        %s469 = scalar_lea.vmem [#allocation9], %s468
        // Predicated region
        $region69: #{efficient_waterfall_forward.1} parent=59 // pred_check
          %p470 = pneg %p126
        $region70: #{efficient_waterfall_forward.1} parent=59 // pred_check_branch
          %472 = sbr.rel (%p470) target = $region72
        $region71: #{efficient_waterfall_forward.1} parent=59 // pred_region
          %473 = dma.done %s466, 10240
        $region72: #{efficient_waterfall_forward.1} parent=59 // pred_fallthru
          _
        %s474 = sand.u32 %s25, 1
        %s475 = scalar_lea.sflag [#allocation6], %s474
        %s476 = sand.u32 %s139, 1
        %s477 = smul.addr %s476, 10
        %s478 = scalar_lea.vmem [#allocation10], %s477
        // Predicated region
        $region73: #{efficient_waterfall_forward.1} parent=59 // pred_check
          %p479 = pneg %p152
        $region74: #{efficient_waterfall_forward.1} parent=59 // pred_check_branch
          %481 = sbr.rel (%p479) target = $region76
        $region75: #{efficient_waterfall_forward.1} parent=59 // pred_region
          %482 = dma.done %s475, 160
        $region76: #{efficient_waterfall_forward.1} parent=59 // pred_fallthru
          _
        %s483 = sand.u32 %s25, 1
        %s484 = scalar_lea.sflag [#allocation6], %s483
        %s485 = sand.u32 %s165, 1
        %s486 = smul.addr %s485, 1280
        %s487 = scalar_lea.vmem [#allocation11], %s486
        // Predicated region
        $region77: #{efficient_waterfall_forward.1} parent=59 // pred_check
          %p488 = pneg %p178
        $region78: #{efficient_waterfall_forward.1} parent=59 // pred_check_branch
          %490 = sbr.rel (%p488) target = $region80
        $region79: #{efficient_waterfall_forward.1} parent=59 // pred_region
          %491 = dma.done %s484, 20480
        $region80: #{efficient_waterfall_forward.1} parent=59 // pred_fallthru
          _
        // Predicated region
        $region81: #{efficient_waterfall_forward.1} parent=59 // pred_check
          %p492 = pneg %p199
        $region82: #{efficient_waterfall_forward.1} parent=59 // pred_check_branch
          %494 = sbr.rel (%p492) target = $region84
        $region83: #{efficient_waterfall_forward.1} parent=59 // pred_region
          %495 = dma.done [#allocation8], 32
        $region84: #{efficient_waterfall_forward.1} parent=59 // pred_fallthru
          _
        // Predicated region
        $region85: #{efficient_waterfall_forward.1} parent=59 // pred_check
          %p496 = pneg %p220
        $region86: #{efficient_waterfall_forward.1} parent=59 // pred_check_branch
          %498 = sbr.rel (%p496) target = $region88
        $region87: #{efficient_waterfall_forward.1} parent=59 // pred_region
          %499 = dma.done [#allocation14], 6144
        $region88: #{efficient_waterfall_forward.1} parent=59 // pred_fallthru
          _
        // Predicated region
        $region89: #{efficient_waterfall_forward.1} parent=59 // pred_check
          %p500 = pneg %p241
        $region90: #{efficient_waterfall_forward.1} parent=59 // pred_check_branch
          %502 = sbr.rel (%p500) target = $region92
        $region91: #{efficient_waterfall_forward.1} parent=59 // pred_region
          %503 = dma.done [#allocation14], 768
        $region92: #{efficient_waterfall_forward.1} parent=59 // pred_fallthru
          _
        // Predicated region
        $region93: #{efficient_waterfall_forward.1} parent=59 // pred_check
          %p504 = pneg %p262
        $region94: #{efficient_waterfall_forward.1} parent=59 // pred_check_branch
          %506 = sbr.rel (%p504) target = $region96
        $region95: #{efficient_waterfall_forward.1} parent=59 // pred_region
          %507 = dma.done [#allocation17], 48
        $region96: #{efficient_waterfall_forward.1} parent=59 // pred_fallthru
          _
        %s508 = smul.u32 4, %s29
        %p509 = scmp.lt.s32.totalorder %s508, 3
        %s510 = scalar_select %p509, %s508, 3
        %s511 = smul.addr %s510, 4
        %s512 = scalar_lea.vmem %s0, %s511
        %p513 = pneg %p58
        %p514 = pneg %p55
        %p515 = pneg %p79
        %p516 = pneg %p76
        %p517 = pneg %p100
        %p518 = pneg %p97
        %s519 = sand.u32 %s25, 1
        %s520 = scalar_lea.sflag [#allocation6], %s519
        %s521 = sand.u32 %s113, 1
        %s522 = smul.addr %s521, 640
        %s523 = scalar_lea.vmem [#allocation9], %s522
        %p524 = pneg %p126
        %p525 = pneg %p123
        %s526 = sand.u32 %s25, 1
        %s527 = scalar_lea.sflag [#allocation6], %s526
        %s528 = sand.u32 %s139, 1
        %s529 = smul.addr %s528, 10
        %s530 = scalar_lea.vmem [#allocation10], %s529
        %p531 = pneg %p152
        %p532 = pneg %p149
        %s533 = sand.u32 %s25, 1
        %s534 = scalar_lea.sflag [#allocation6], %s533
        %s535 = sand.u32 %s165, 1
        %s536 = smul.addr %s535, 1280
        %s537 = scalar_lea.vmem [#allocation11], %s536
        %p538 = pneg %p178
        %p539 = pneg %p175
        %p540 = pneg %p199
        %p541 = pneg %p196
        %p542 = pneg %p220
        %p543 = pneg %p217
        %p544 = pneg %p241
        %p545 = pneg %p238
        %p546 = pneg %p262
        %p547 = pneg %p259
        %p548 = pneg %p288
        %p549 = pneg %p285
        %s550 = smul.u32 4, %s29
        %p551 = scmp.lt.s32.totalorder %s550, 3
        %s552 = scalar_select %p551, %s550, 3
        %s553 = smul.addr %s552, 3
        %s554 = smul.addr %s553, 8
        %s555 = scalar_lea.vmem %s10, %s554
        %s556 = smul.u32 4, %s29
        %p557 = scmp.lt.s32.totalorder %s556, 3
        %s558 = scalar_select %p557, %s556, 3
        %s559 = smul.addr %s558, 4
        %s560 = scalar_lea.vmem %s0, %s559
        %s561 = smul.u32 4, %s29
        %s562 = smul.u32 10, %s30
        %s563 = smul.u32 10, %s30
        %s564 = smul.u32 160, %s30
        %s565 = smul.u32 4, %s29
        %p566 = scmp.lt.s32.totalorder %s565, 3
        %s567 = scalar_select %p566, %s565, 3
        %s568 = smul.addr %s567, 3
        %s569 = smul.addr %s568, 8
        %s570 = scalar_lea.vmem %s10, %s569
        %s571 = smul.u32 4, %s29
        %p573 = scmp.eq.s32.totalorder %s30, 0
        // Predicated region
        $region97: #{efficient_waterfall_forward.1} parent=59 // pred_check
          %p574 = pneg %p573
        $region98: #{efficient_waterfall_forward.1} parent=59 // pred_check_branch
          %576 = sbr.rel (%p574) target = $region100
        $region99: #{efficient_waterfall_forward.1} parent=59 // pred_region
          %v577 = vld [vmem:[%s560] sm:$0xf]
          %v578 = vld [vmem:[%s560 + $0x4] sm:$0xf]
          %v579 = vld [vmem:[%s560 + $0x8] sm:$0xf]
          %v580 = vld [vmem:[%s560 + $0xc] sm:$0xf]
          %v581 = vld [vmem:[#allocation5] sm:$0xff]
          %v582 = vld [vmem:[#allocation5 + $0x8] sm:$0xff]
          %v583 = vld [vmem:[#allocation5 + $0x10] sm:$0xff]
          %v584 = vld [vmem:[#allocation5 + $0x18] sm:$0xff]
          %v585 = vld [vmem:[#allocation5 + $0x20] sm:$0xff]
          %v586 = vld [vmem:[#allocation5 + $0x28] sm:$0xff]
          %v587 = vld [vmem:[#allocation7] sm:$0x3]
          %v589 = vlaneseq
          %v590 = vshrl.u32 %v589, 7
          %v591 = vsub.s32 0, %v590
          %v592 = vrot.slane %v587, %v591
          %v593 = vlaneseq
          %v594 = vshrl.u32 %v593, 7
          %v595 = vsub.s32 1, %v594
          %v596 = vrot.slane %v587, %v595
          %v603 = vunpack.c.l.b16 %v577
          %v604 = vunpack.c.l.b16 %v578
          %v605 = vunpack.c.l.b16 %v579
          %v606 = vunpack.c.l.b16 %v580
          %v607 = vpack.c.b16 %v604, %v603
          %v608 = vpack.c.b16 %v606, %v605
          %v615 = vunpack.c.l.b16 %v581
          %v616 = vunpack.c.h.b16 %v581
          %v617 = vunpack.c.l.b16 %v582
          %v618 = vunpack.c.h.b16 %v582
          %v619 = vunpack.c.l.b16 %v583
          %v620 = vunpack.c.h.b16 %v583
          %v621 = vunpack.c.l.b16 %v584
          %v622 = vunpack.c.h.b16 %v584
          %v623 = vunpack.c.l.b16 %v585
          %v624 = vunpack.c.h.b16 %v585
          %v625 = vunpack.c.l.b16 %v586
          %v626 = vunpack.c.h.b16 %v586
          %v627 = vpack.c.b16 %v617, %v615
          %v628 = vpack.c.b16 %v618, %v616
          %v629 = vpack.c.b16 %v621, %v619
          %v630 = vpack.c.b16 %v622, %v620
          %v631 = vpack.c.b16 %v625, %v623
          %v632 = vpack.c.b16 %v626, %v624
          %vm639 = vcmask 392192
          %v641 = vsel %vm639, %v607, 0
          %v644 = vsel %vm639, %v608, 0
          %646 = vmatprep.subr.bf16.mxu0 %v628
          %647 = vmatpush1.bf16.msra.mxu0 %v627
          %648 = vmatprep.subr.bf16.mxu0 %v630
          %649 = vmatpush1.bf16.msra.mxu0 %v629
          %650 = vmatprep.subr.bf16.mxu0 %v632
          %651 = vmatpush1.bf16.msra.mxu0 %v631
          %652 = vmatprep.subr.bf16.mxu0 0
          %653 = vmatpush1.bf16.msra.mxu0 0
          %654 = vmatprep.subr.bf16.mxu0 0
          %655 = vmatpush1.bf16.msra.mxu0 0
          %656 = vmatprep.subr.bf16.mxu0 0
          %657 = vmatpush1.bf16.msra.mxu0 0
          %658 = vmatprep.subr.bf16.mxu0 0
          %659 = vmatpush1.bf16.msra.mxu0 0
          %660 = vmatprep.subr.bf16.mxu0 0
          %661 = vmatpush1.bf16.msra.mxu0 0
          %662 = vmatprep.subr.bf16.mxu0 0
          %663 = vmatpush1.bf16.msra.mxu0 0
          %664 = vmatprep.subr.bf16.mxu0 0
          %665 = vmatpush1.bf16.msra.mxu0 0
          %666 = vmatprep.subr.bf16.mxu0 0
          %667 = vmatpush1.bf16.msra.mxu0 0
          %668 = vmatprep.subr.bf16.mxu0 0
          %669 = vmatpush1.bf16.msra.mxu0 0
          %670 = vmatprep.subr.bf16.mxu0 0
          %671 = vmatpush1.bf16.msra.mxu0 0
          %672 = vmatprep.subr.bf16.mxu0 0
          %673 = vmatpush1.bf16.msra.mxu0 0
          %674 = vmatprep.subr.bf16.mxu0 0
          %675 = vmatpush1.bf16.msra.mxu0 0
          %676 = vmatprep.subr.bf16.mxu0 0
          %677 = vmatpush1.bf16.msra.mxu0 0
          %678 = vmatprep.mubr.bf16.mxu0 0
          %679 = vmatmul.mubr.bf16.gmra.mrb[0].mxu0 %v641
          %v680 = vpop.f32.mrb[0].mxu0
          %v681 = vadd.f32 %v592, %v680
          %v682 = vpop.f32.mrb[0].mxu0
          %v683 = vadd.f32 %v596, %v682
          %v684 = vpop.f32.mrb[0].mxu0
          %v685 = vadd.f32 %v592, %v684
          %v686 = vpop.f32.mrb[0].mxu0
          %v687 = vadd.f32 %v596, %v686
          %688 = vmatprep.mubr.bf16.mxu0 0
          %689 = vmatmul.mubr.bf16.gmra.mrb[0].mxu0 %v644
          %v690 = vpop.f32.mrb[0].mxu0
          %v691 = vadd.f32 %v592, %v690
          %v692 = vpop.f32.mrb[0].mxu0
          %v693 = vadd.f32 %v596, %v692
          %v694 = vpop.f32.mrb[0].mxu0
          %v695 = vadd.f32 %v592, %v694
          %v696 = vpop.f32.mrb[0].mxu0
          %v697 = vadd.f32 %v596, %v696
          %698 = vdwg.mxu0
          %v699 = vmax.f32 %v681, 0.0
          %v700 = vmax.f32 %v683, 0.0
          %v701 = vmax.f32 %v685, 0.0
          %v702 = vmax.f32 %v687, 0.0
          %v703 = vmax.f32 %v691, 0.0
          %v704 = vmax.f32 %v693, 0.0
          %v705 = vmax.f32 %v695, 0.0
          %v706 = vmax.f32 %v697, 0.0
          %v707 = vpack.c.bf16 %v701, %v699
          %v708 = vpack.c.bf16 %v705, %v703
          %709 = vst [vmem:[#allocation2] sm:$0xff] %v707
          %710 = vst [vmem:[#allocation2 + $0x8] sm:$0xff] %v708
          %v711 = vpack.c.bf16 %v702, %v700
          %v712 = vpack.c.bf16 %v706, %v704
          %vm713 = vcmask 261120
          %714 = vst.msk [vmem:[#allocation3] sm:$0xff] %vm713, %v711
          %715 = vst.msk [vmem:[#allocation3 + $0x8] sm:$0xff] %vm713, %v712
          %716 = vst [vmem:[#allocation4] sm:$0xff] 0.0
          %717 = vst [vmem:[#allocation4 + $0x8] sm:$0xff] 0.0
          %718 = vst [vmem:[#allocation4 + $0x10] sm:$0xff] 0.0
          %719 = vst [vmem:[#allocation4 + $0x18] sm:$0xff] 0.0
          %720 = vst [vmem:[#allocation4 + $0x20] sm:$0xff] 0.0
          %721 = vst [vmem:[#allocation4 + $0x28] sm:$0xff] 0.0
          %722 = vst [vmem:[#allocation4 + $0x30] sm:$0xff] 0.0
          %723 = vst [vmem:[#allocation4 + $0x38] sm:$0xff] 0.0
        $region100: #{efficient_waterfall_forward.1} parent=59 // pred_fallthru
          _
        %v724 = vld [vmem:[#allocation2] sm:$0xff]
        %v725 = vld [vmem:[#allocation2 + $0x8] sm:$0xff]
        %v726 = vld [vmem:[%s469] sm:$0xff]
        %v727 = vld [vmem:[%s469 + $0x8] sm:$0xff]
        %v728 = vld [vmem:[%s469 + $0x10] sm:$0xff]
        %v729 = vld [vmem:[%s469 + $0x18] sm:$0xff]
        %v730 = vld [vmem:[%s469 + $0x20] sm:$0xff]
        %v731 = vld [vmem:[%s469 + $0x28] sm:$0xff]
        %v732 = vld [vmem:[%s469 + $0x30] sm:$0xff]
        %v733 = vld [vmem:[%s469 + $0x38] sm:$0xff]
        %v734 = vld [vmem:[%s469 + $0x40] sm:$0xff]
        %v735 = vld [vmem:[%s469 + $0x48] sm:$0xff]
        %v736 = vld [vmem:[%s469 + $0x50] sm:$0xff]
        %v737 = vld [vmem:[%s469 + $0x58] sm:$0xff]
        %v738 = vld [vmem:[%s469 + $0x60] sm:$0xff]
        %v739 = vld [vmem:[%s469 + $0x68] sm:$0xff]
        %v740 = vld [vmem:[%s469 + $0x70] sm:$0xff]
        %v741 = vld [vmem:[%s469 + $0x78] sm:$0xff]
        %v742 = vld [vmem:[%s469 + $0x80] sm:$0xff]
        %v743 = vld [vmem:[%s469 + $0x88] sm:$0xff]
        %v744 = vld [vmem:[%s469 + $0x90] sm:$0xff]
        %v745 = vld [vmem:[%s469 + $0x98] sm:$0xff]
        %v746 = vld [vmem:[%s469 + $0xa0] sm:$0xff]
        %v747 = vld [vmem:[%s469 + $0xa8] sm:$0xff]
        %v748 = vld [vmem:[%s469 + $0xb0] sm:$0xff]
        %v749 = vld [vmem:[%s469 + $0xb8] sm:$0xff]
        %v750 = vld [vmem:[%s469 + $0xc0] sm:$0xff]
        %v751 = vld [vmem:[%s469 + $0xc8] sm:$0xff]
        %v752 = vld [vmem:[%s469 + $0xd0] sm:$0xff]
        %v753 = vld [vmem:[%s469 + $0xd8] sm:$0xff]
        %v754 = vld [vmem:[%s469 + $0xe0] sm:$0xff]
        %v755 = vld [vmem:[%s469 + $0xe8] sm:$0xff]
        %v756 = vld [vmem:[%s469 + $0xf0] sm:$0xff]
        %v757 = vld [vmem:[%s469 + $0xf8] sm:$0xff]
        %v758 = vld [vmem:[%s469 + $0x100] sm:$0xff]
        %v759 = vld [vmem:[%s469 + $0x108] sm:$0xff]
        %v760 = vld [vmem:[%s469 + $0x110] sm:$0xff]
        %v761 = vld [vmem:[%s469 + $0x118] sm:$0xff]
        %v762 = vld [vmem:[%s469 + $0x120] sm:$0xff]
        %v763 = vld [vmem:[%s469 + $0x128] sm:$0xff]
        %v764 = vld [vmem:[%s469 + $0x130] sm:$0xff]
        %v765 = vld [vmem:[%s469 + $0x138] sm:$0xff]
        %v766 = vld [vmem:[%s469 + $0x140] sm:$0xff]
        %v767 = vld [vmem:[%s469 + $0x148] sm:$0xff]
        %v768 = vld [vmem:[%s469 + $0x150] sm:$0xff]
        %v769 = vld [vmem:[%s469 + $0x158] sm:$0xff]
        %v770 = vld [vmem:[%s469 + $0x160] sm:$0xff]
        %v771 = vld [vmem:[%s469 + $0x168] sm:$0xff]
        %v772 = vld [vmem:[%s469 + $0x170] sm:$0xff]
        %v773 = vld [vmem:[%s469 + $0x178] sm:$0xff]
        %v774 = vld [vmem:[%s469 + $0x180] sm:$0xff]
        %v775 = vld [vmem:[%s469 + $0x188] sm:$0xff]
        %v776 = vld [vmem:[%s469 + $0x190] sm:$0xff]
        %v777 = vld [vmem:[%s469 + $0x198] sm:$0xff]
        %v778 = vld [vmem:[%s469 + $0x1a0] sm:$0xff]
        %v779 = vld [vmem:[%s469 + $0x1a8] sm:$0xff]
        %v780 = vld [vmem:[%s469 + $0x1b0] sm:$0xff]
        %v781 = vld [vmem:[%s469 + $0x1b8] sm:$0xff]
        %v782 = vld [vmem:[%s469 + $0x1c0] sm:$0xff]
        %v783 = vld [vmem:[%s469 + $0x1c8] sm:$0xff]
        %v784 = vld [vmem:[%s469 + $0x1d0] sm:$0xff]
        %v785 = vld [vmem:[%s469 + $0x1d8] sm:$0xff]
        %v786 = vld [vmem:[%s469 + $0x1e0] sm:$0xff]
        %v787 = vld [vmem:[%s469 + $0x1e8] sm:$0xff]
        %v788 = vld [vmem:[%s469 + $0x1f0] sm:$0xff]
        %v789 = vld [vmem:[%s469 + $0x1f8] sm:$0xff]
        %v790 = vld [vmem:[%s469 + $0x200] sm:$0xff]
        %v791 = vld [vmem:[%s469 + $0x208] sm:$0xff]
        %v792 = vld [vmem:[%s469 + $0x210] sm:$0xff]
        %v793 = vld [vmem:[%s469 + $0x218] sm:$0xff]
        %v794 = vld [vmem:[%s469 + $0x220] sm:$0xff]
        %v795 = vld [vmem:[%s469 + $0x228] sm:$0xff]
        %v796 = vld [vmem:[%s469 + $0x230] sm:$0xff]
        %v797 = vld [vmem:[%s469 + $0x238] sm:$0xff]
        %v798 = vld [vmem:[%s469 + $0x240] sm:$0xff]
        %v799 = vld [vmem:[%s469 + $0x248] sm:$0xff]
        %v800 = vld [vmem:[%s469 + $0x250] sm:$0xff]
        %v801 = vld [vmem:[%s469 + $0x258] sm:$0xff]
        %v802 = vld [vmem:[%s469 + $0x260] sm:$0xff]
        %v803 = vld [vmem:[%s469 + $0x268] sm:$0xff]
        %v804 = vld [vmem:[%s469 + $0x270] sm:$0xff]
        %v805 = vld [vmem:[%s469 + $0x278] sm:$0xff]
        %v806 = vld [vmem:[%s478] sm:$0xff]
        %v807 = vld [vmem:[%s478 + $0x8] sm:$0x3]
        %v810 = vlaneseq
        %v811 = vshrl.u32 %v810, 7
        %v812 = vsub.s32 0, %v811
        %v813 = vrot.slane %v806, %v812
        %v814 = vlaneseq
        %v815 = vshrl.u32 %v814, 7
        %v816 = vsub.s32 1, %v815
        %v817 = vrot.slane %v806, %v816
        %v818 = vlaneseq
        %v819 = vshrl.u32 %v818, 7
        %v820 = vsub.s32 2, %v819
        %v821 = vrot.slane %v806, %v820
        %v822 = vlaneseq
        %v823 = vshrl.u32 %v822, 7
        %v824 = vsub.s32 3, %v823
        %v825 = vrot.slane %v806, %v824
        %v826 = vlaneseq
        %v827 = vshrl.u32 %v826, 7
        %v828 = vsub.s32 4, %v827
        %v829 = vrot.slane %v806, %v828
        %v830 = vlaneseq
        %v831 = vshrl.u32 %v830, 7
        %v832 = vsub.s32 5, %v831
        %v833 = vrot.slane %v806, %v832
        %v834 = vlaneseq
        %v835 = vshrl.u32 %v834, 7
        %v836 = vsub.s32 6, %v835
        %v837 = vrot.slane %v806, %v836
        %v838 = vlaneseq
        %v839 = vshrl.u32 %v838, 7
        %v840 = vsub.s32 7, %v839
        %v841 = vrot.slane %v806, %v840
        %v842 = vlaneseq
        %v843 = vshrl.u32 %v842, 7
        %v844 = vsub.s32 0, %v843
        %v845 = vrot.slane %v807, %v844
        %v846 = vlaneseq
        %v847 = vshrl.u32 %v846, 7
        %v848 = vsub.s32 1, %v847
        %v849 = vrot.slane %v807, %v848
        %v940 = vunpack.c.l.b16 %v726
        %v941 = vunpack.c.h.b16 %v726
        %v942 = vunpack.c.l.b16 %v727
        %v943 = vunpack.c.h.b16 %v727
        %v944 = vunpack.c.l.b16 %v728
        %v945 = vunpack.c.h.b16 %v728
        %v946 = vunpack.c.l.b16 %v729
        %v947 = vunpack.c.h.b16 %v729
        %v948 = vunpack.c.l.b16 %v730
        %v949 = vunpack.c.h.b16 %v730
        %v950 = vunpack.c.l.b16 %v731
        %v951 = vunpack.c.h.b16 %v731
        %v952 = vunpack.c.l.b16 %v732
        %v953 = vunpack.c.h.b16 %v732
        %v954 = vunpack.c.l.b16 %v733
        %v955 = vunpack.c.h.b16 %v733
        %v956 = vunpack.c.l.b16 %v734
        %v957 = vunpack.c.h.b16 %v734
        %v958 = vunpack.c.l.b16 %v735
        %v959 = vunpack.c.h.b16 %v735
        %v960 = vunpack.c.l.b16 %v736
        %v961 = vunpack.c.h.b16 %v736
        %v962 = vunpack.c.l.b16 %v737
        %v963 = vunpack.c.h.b16 %v737
        %v964 = vunpack.c.l.b16 %v738
        %v965 = vunpack.c.h.b16 %v738
        %v966 = vunpack.c.l.b16 %v739
        %v967 = vunpack.c.h.b16 %v739
        %v968 = vunpack.c.l.b16 %v740
        %v969 = vunpack.c.h.b16 %v740
        %v970 = vunpack.c.l.b16 %v741
        %v971 = vunpack.c.h.b16 %v741
        %v972 = vunpack.c.l.b16 %v742
        %v973 = vunpack.c.h.b16 %v742
        %v974 = vunpack.c.l.b16 %v743
        %v975 = vunpack.c.h.b16 %v743
        %v976 = vunpack.c.l.b16 %v744
        %v977 = vunpack.c.h.b16 %v744
        %v978 = vunpack.c.l.b16 %v745
        %v979 = vunpack.c.h.b16 %v745
        %v980 = vunpack.c.l.b16 %v746
        %v981 = vunpack.c.h.b16 %v746
        %v982 = vunpack.c.l.b16 %v747
        %v983 = vunpack.c.h.b16 %v747
        %v984 = vunpack.c.l.b16 %v748
        %v985 = vunpack.c.h.b16 %v748
        %v986 = vunpack.c.l.b16 %v749
        %v987 = vunpack.c.h.b16 %v749
        %v988 = vunpack.c.l.b16 %v750
        %v989 = vunpack.c.h.b16 %v750
        %v990 = vunpack.c.l.b16 %v751
        %v991 = vunpack.c.h.b16 %v751
        %v992 = vunpack.c.l.b16 %v752
        %v993 = vunpack.c.h.b16 %v752
        %v994 = vunpack.c.l.b16 %v753
        %v995 = vunpack.c.h.b16 %v753
        %v996 = vunpack.c.l.b16 %v754
        %v997 = vunpack.c.h.b16 %v754
        %v998 = vunpack.c.l.b16 %v755
        %v999 = vunpack.c.h.b16 %v755
        %v1000 = vunpack.c.l.b16 %v756
        %v1001 = vunpack.c.h.b16 %v756
        %v1002 = vunpack.c.l.b16 %v757
        %v1003 = vunpack.c.h.b16 %v757
        %v1004 = vunpack.c.l.b16 %v758
        %v1005 = vunpack.c.h.b16 %v758
        %v1006 = vunpack.c.l.b16 %v759
        %v1007 = vunpack.c.h.b16 %v759
        %v1008 = vunpack.c.l.b16 %v760
        %v1009 = vunpack.c.h.b16 %v760
        %v1010 = vunpack.c.l.b16 %v761
        %v1011 = vunpack.c.h.b16 %v761
        %v1012 = vunpack.c.l.b16 %v762
        %v1013 = vunpack.c.h.b16 %v762
        %v1014 = vunpack.c.l.b16 %v763
        %v1015 = vunpack.c.h.b16 %v763
        %v1016 = vunpack.c.l.b16 %v764
        %v1017 = vunpack.c.h.b16 %v764
        %v1018 = vunpack.c.l.b16 %v765
        %v1019 = vunpack.c.h.b16 %v765
        %v1020 = vunpack.c.l.b16 %v766
        %v1021 = vunpack.c.h.b16 %v766
        %v1022 = vunpack.c.l.b16 %v767
        %v1023 = vunpack.c.h.b16 %v767
        %v1024 = vunpack.c.l.b16 %v768
        %v1025 = vunpack.c.h.b16 %v768
        %v1026 = vunpack.c.l.b16 %v769
        %v1027 = vunpack.c.h.b16 %v769
        %v1028 = vunpack.c.l.b16 %v770
        %v1029 = vunpack.c.h.b16 %v770
        %v1030 = vunpack.c.l.b16 %v771
        %v1031 = vunpack.c.h.b16 %v771
        %v1032 = vunpack.c.l.b16 %v772
        %v1033 = vunpack.c.h.b16 %v772
        %v1034 = vunpack.c.l.b16 %v773
        %v1035 = vunpack.c.h.b16 %v773
        %v1036 = vunpack.c.l.b16 %v774
        %v1037 = vunpack.c.h.b16 %v774
        %v1038 = vunpack.c.l.b16 %v775
        %v1039 = vunpack.c.h.b16 %v775
        %v1040 = vunpack.c.l.b16 %v776
        %v1041 = vunpack.c.h.b16 %v776
        %v1042 = vunpack.c.l.b16 %v777
        %v1043 = vunpack.c.h.b16 %v777
        %v1044 = vunpack.c.l.b16 %v778
        %v1045 = vunpack.c.h.b16 %v778
        %v1046 = vunpack.c.l.b16 %v779
        %v1047 = vunpack.c.h.b16 %v779
        %v1048 = vunpack.c.l.b16 %v780
        %v1049 = vunpack.c.h.b16 %v780
        %v1050 = vunpack.c.l.b16 %v781
        %v1051 = vunpack.c.h.b16 %v781
        %v1052 = vunpack.c.l.b16 %v782
        %v1053 = vunpack.c.h.b16 %v782
        %v1054 = vunpack.c.l.b16 %v783
        %v1055 = vunpack.c.h.b16 %v783
        %v1056 = vunpack.c.l.b16 %v784
        %v1057 = vunpack.c.h.b16 %v784
        %v1058 = vunpack.c.l.b16 %v785
        %v1059 = vunpack.c.h.b16 %v785
        %v1060 = vunpack.c.l.b16 %v786
        %v1061 = vunpack.c.h.b16 %v786
        %v1062 = vunpack.c.l.b16 %v787
        %v1063 = vunpack.c.h.b16 %v787
        %v1064 = vunpack.c.l.b16 %v788
        %v1065 = vunpack.c.h.b16 %v788
        %v1066 = vunpack.c.l.b16 %v789
        %v1067 = vunpack.c.h.b16 %v789
        %v1068 = vunpack.c.l.b16 %v790
        %v1069 = vunpack.c.h.b16 %v790
        %v1070 = vunpack.c.l.b16 %v791
        %v1071 = vunpack.c.h.b16 %v791
        %v1072 = vunpack.c.l.b16 %v792
        %v1073 = vunpack.c.h.b16 %v792
        %v1074 = vunpack.c.l.b16 %v793
        %v1075 = vunpack.c.h.b16 %v793
        %v1076 = vunpack.c.l.b16 %v794
        %v1077 = vunpack.c.h.b16 %v794
        %v1078 = vunpack.c.l.b16 %v795
        %v1079 = vunpack.c.h.b16 %v795
        %v1080 = vunpack.c.l.b16 %v796
        %v1081 = vunpack.c.h.b16 %v796
        %v1082 = vunpack.c.l.b16 %v797
        %v1083 = vunpack.c.h.b16 %v797
        %v1084 = vunpack.c.l.b16 %v798
        %v1085 = vunpack.c.h.b16 %v798
        %v1086 = vunpack.c.l.b16 %v799
        %v1087 = vunpack.c.h.b16 %v799
        %v1088 = vunpack.c.l.b16 %v800
        %v1089 = vunpack.c.h.b16 %v800
        %v1090 = vunpack.c.l.b16 %v801
        %v1091 = vunpack.c.h.b16 %v801
        %v1092 = vunpack.c.l.b16 %v802
        %v1093 = vunpack.c.h.b16 %v802
        %v1094 = vunpack.c.l.b16 %v803
        %v1095 = vunpack.c.h.b16 %v803
        %v1096 = vunpack.c.l.b16 %v804
        %v1097 = vunpack.c.h.b16 %v804
        %v1098 = vunpack.c.l.b16 %v805
        %v1099 = vunpack.c.h.b16 %v805
        %v1100 = vpack.c.b16 %v950, %v940
        %v1101 = vpack.c.b16 %v951, %v941
        %v1102 = vpack.c.b16 %v952, %v942
        %v1103 = vpack.c.b16 %v953, %v943
        %v1104 = vpack.c.b16 %v954, %v944
        %v1105 = vpack.c.b16 %v955, %v945
        %v1106 = vpack.c.b16 %v956, %v946
        %v1107 = vpack.c.b16 %v957, %v947
        %v1108 = vpack.c.b16 %v958, %v948
        %v1109 = vpack.c.b16 %v959, %v949
        %v1110 = vpack.c.b16 %v970, %v960
        %v1111 = vpack.c.b16 %v971, %v961
        %v1112 = vpack.c.b16 %v972, %v962
        %v1113 = vpack.c.b16 %v973, %v963
        %v1114 = vpack.c.b16 %v974, %v964
        %v1115 = vpack.c.b16 %v975, %v965
        %v1116 = vpack.c.b16 %v976, %v966
        %v1117 = vpack.c.b16 %v977, %v967
        %v1118 = vpack.c.b16 %v978, %v968
        %v1119 = vpack.c.b16 %v979, %v969
        %v1120 = vpack.c.b16 %v990, %v980
        %v1121 = vpack.c.b16 %v991, %v981
        %v1122 = vpack.c.b16 %v992, %v982
        %v1123 = vpack.c.b16 %v993, %v983
        %v1124 = vpack.c.b16 %v994, %v984
        %v1125 = vpack.c.b16 %v995, %v985
        %v1126 = vpack.c.b16 %v996, %v986
        %v1127 = vpack.c.b16 %v997, %v987
        %v1128 = vpack.c.b16 %v998, %v988
        %v1129 = vpack.c.b16 %v999, %v989
        %v1130 = vpack.c.b16 %v1010, %v1000
        %v1131 = vpack.c.b16 %v1011, %v1001
        %v1132 = vpack.c.b16 %v1012, %v1002
        %v1133 = vpack.c.b16 %v1013, %v1003
        %v1134 = vpack.c.b16 %v1014, %v1004
        %v1135 = vpack.c.b16 %v1015, %v1005
        %v1136 = vpack.c.b16 %v1016, %v1006
        %v1137 = vpack.c.b16 %v1017, %v1007
        %v1138 = vpack.c.b16 %v1018, %v1008
        %v1139 = vpack.c.b16 %v1019, %v1009
        %v1140 = vpack.c.b16 %v1030, %v1020
        %v1141 = vpack.c.b16 %v1031, %v1021
        %v1142 = vpack.c.b16 %v1032, %v1022
        %v1143 = vpack.c.b16 %v1033, %v1023
        %v1144 = vpack.c.b16 %v1034, %v1024
        %v1145 = vpack.c.b16 %v1035, %v1025
        %v1146 = vpack.c.b16 %v1036, %v1026
        %v1147 = vpack.c.b16 %v1037, %v1027
        %v1148 = vpack.c.b16 %v1038, %v1028
        %v1149 = vpack.c.b16 %v1039, %v1029
        %v1150 = vpack.c.b16 %v1050, %v1040
        %v1151 = vpack.c.b16 %v1051, %v1041
        %v1152 = vpack.c.b16 %v1052, %v1042
        %v1153 = vpack.c.b16 %v1053, %v1043
        %v1154 = vpack.c.b16 %v1054, %v1044
        %v1155 = vpack.c.b16 %v1055, %v1045
        %v1156 = vpack.c.b16 %v1056, %v1046
        %v1157 = vpack.c.b16 %v1057, %v1047
        %v1158 = vpack.c.b16 %v1058, %v1048
        %v1159 = vpack.c.b16 %v1059, %v1049
        %v1160 = vpack.c.b16 %v1070, %v1060
        %v1161 = vpack.c.b16 %v1071, %v1061
        %v1162 = vpack.c.b16 %v1072, %v1062
        %v1163 = vpack.c.b16 %v1073, %v1063
        %v1164 = vpack.c.b16 %v1074, %v1064
        %v1165 = vpack.c.b16 %v1075, %v1065
        %v1166 = vpack.c.b16 %v1076, %v1066
        %v1167 = vpack.c.b16 %v1077, %v1067
        %v1168 = vpack.c.b16 %v1078, %v1068
        %v1169 = vpack.c.b16 %v1079, %v1069
        %v1170 = vpack.c.b16 %v1090, %v1080
        %v1171 = vpack.c.b16 %v1091, %v1081
        %v1172 = vpack.c.b16 %v1092, %v1082
        %v1173 = vpack.c.b16 %v1093, %v1083
        %v1174 = vpack.c.b16 %v1094, %v1084
        %v1175 = vpack.c.b16 %v1095, %v1085
        %v1176 = vpack.c.b16 %v1096, %v1086
        %v1177 = vpack.c.b16 %v1097, %v1087
        %v1178 = vpack.c.b16 %v1098, %v1088
        %v1179 = vpack.c.b16 %v1099, %v1089
        %1260 = vmatprep.subr.bf16.mxu0 %v1101
        %1261 = vmatpush1.bf16.msra.mxu0 %v1100
        %1262 = vmatprep.subr.bf16.mxu0 %v1111
        %1263 = vmatpush1.bf16.msra.mxu0 %v1110
        %1264 = vmatprep.subr.bf16.mxu0 %v1121
        %1265 = vmatpush1.bf16.msra.mxu0 %v1120
        %1266 = vmatprep.subr.bf16.mxu0 %v1131
        %1267 = vmatpush1.bf16.msra.mxu0 %v1130
        %1268 = vmatprep.subr.bf16.mxu0 %v1141
        %1269 = vmatpush1.bf16.msra.mxu0 %v1140
        %1270 = vmatprep.subr.bf16.mxu0 %v1151
        %1271 = vmatpush1.bf16.msra.mxu0 %v1150
        %1272 = vmatprep.subr.bf16.mxu0 %v1161
        %1273 = vmatpush1.bf16.msra.mxu0 %v1160
        %1274 = vmatprep.subr.bf16.mxu0 %v1171
        %1275 = vmatpush1.bf16.msra.mxu0 %v1170
        %1276 = vmatprep.subr.bf16.mxu0 0
        %1277 = vmatpush1.bf16.msra.mxu0 0
        %1278 = vmatprep.subr.bf16.mxu0 0
        %1279 = vmatpush1.bf16.msra.mxu0 0
        %1280 = vmatprep.subr.bf16.mxu0 0
        %1281 = vmatpush1.bf16.msra.mxu0 0
        %1282 = vmatprep.subr.bf16.mxu0 0
        %1283 = vmatpush1.bf16.msra.mxu0 0
        %1284 = vmatprep.subr.bf16.mxu0 0
        %1285 = vmatpush1.bf16.msra.mxu0 0
        %1286 = vmatprep.subr.bf16.mxu0 0
        %1287 = vmatpush1.bf16.msra.mxu0 0
        %1288 = vmatprep.subr.bf16.mxu0 0
        %1289 = vmatpush1.bf16.msra.mxu0 0
        %1290 = vmatprep.subr.bf16.mxu0 0
        %1291 = vmatpush1.bf16.msra.mxu0 0
        %1292 = vmatprep.mubr.bf16.mxu0 0
        %1293 = vmatmul.mubr.bf16.gmra.mrb[0].mxu0 %v724
        %v1294 = vpop.f32.mrb[0].mxu0
        %v1295 = vadd.f32 %v813, %v1294
        %v1296 = vpop.f32.mrb[0].mxu0
        %v1297 = vadd.f32 %v817, %v1296
        %v1298 = vpop.f32.mrb[0].mxu0
        %v1299 = vadd.f32 %v813, %v1298
        %v1300 = vpop.f32.mrb[0].mxu0
        %v1301 = vadd.f32 %v817, %v1300
        %1302 = vmatprep.mubr.bf16.mxu0 0
        %1303 = vmatmul.mubr.bf16.gmra.mrb[0].mxu0 %v725
        %v1304 = vpop.f32.mrb[0].mxu0
        %v1305 = vadd.f32 %v813, %v1304
        %v1306 = vpop.f32.mrb[0].mxu0
        %v1307 = vadd.f32 %v817, %v1306
        %v1308 = vpop.f32.mrb[0].mxu0
        %v1309 = vadd.f32 %v813, %v1308
        %v1310 = vpop.f32.mrb[0].mxu0
        %v1311 = vadd.f32 %v817, %v1310
        %1312 = vdwg.mxu0
        %1313 = vmatprep.subr.bf16.mxu0 %v1103
        %1314 = vmatpush1.bf16.msra.mxu0 %v1102
        %1315 = vmatprep.subr.bf16.mxu0 %v1113
        %1316 = vmatpush1.bf16.msra.mxu0 %v1112
        %1317 = vmatprep.subr.bf16.mxu0 %v1123
        %1318 = vmatpush1.bf16.msra.mxu0 %v1122
        %1319 = vmatprep.subr.bf16.mxu0 %v1133
        %1320 = vmatpush1.bf16.msra.mxu0 %v1132
        %1321 = vmatprep.subr.bf16.mxu0 %v1143
        %1322 = vmatpush1.bf16.msra.mxu0 %v1142
        %1323 = vmatprep.subr.bf16.mxu0 %v1153
        %1324 = vmatpush1.bf16.msra.mxu0 %v1152
        %1325 = vmatprep.subr.bf16.mxu0 %v1163
        %1326 = vmatpush1.bf16.msra.mxu0 %v1162
        %1327 = vmatprep.subr.bf16.mxu0 %v1173
        %1328 = vmatpush1.bf16.msra.mxu0 %v1172
        %1329 = vmatprep.subr.bf16.mxu0 0
        %1330 = vmatpush1.bf16.msra.mxu0 0
        %1331 = vmatprep.subr.bf16.mxu0 0
        %1332 = vmatpush1.bf16.msra.mxu0 0
        %1333 = vmatprep.subr.bf16.mxu0 0
        %1334 = vmatpush1.bf16.msra.mxu0 0
        %1335 = vmatprep.subr.bf16.mxu0 0
        %1336 = vmatpush1.bf16.msra.mxu0 0
        %1337 = vmatprep.subr.bf16.mxu0 0
        %1338 = vmatpush1.bf16.msra.mxu0 0
        %1339 = vmatprep.subr.bf16.mxu0 0
        %1340 = vmatpush1.bf16.msra.mxu0 0
        %1341 = vmatprep.subr.bf16.mxu0 0
        %1342 = vmatpush1.bf16.msra.mxu0 0
        %1343 = vmatprep.subr.bf16.mxu0 0
        %1344 = vmatpush1.bf16.msra.mxu0 0
        %1345 = vmatprep.mubr.bf16.mxu0 0
        %1346 = vmatmul.mubr.bf16.gmra.mrb[0].mxu0 %v724
        %v1347 = vpop.f32.mrb[0].mxu0
        %v1348 = vadd.f32 %v821, %v1347
        %v1349 = vpop.f32.mrb[0].mxu0
        %v1350 = vadd.f32 %v825, %v1349
        %v1351 = vpop.f32.mrb[0].mxu0
        %v1352 = vadd.f32 %v821, %v1351
        %v1353 = vpop.f32.mrb[0].mxu0
        %v1354 = vadd.f32 %v825, %v1353
        %1355 = vmatprep.mubr.bf16.mxu0 0
        %1356 = vmatmul.mubr.bf16.gmra.mrb[0].mxu0 %v725
        %v1357 = vpop.f32.mrb[0].mxu0
        %v1358 = vadd.f32 %v821, %v1357
        %v1359 = vpop.f32.mrb[0].mxu0
        %v1360 = vadd.f32 %v825, %v1359
        %v1361 = vpop.f32.mrb[0].mxu0
        %v1362 = vadd.f32 %v821, %v1361
        %v1363 = vpop.f32.mrb[0].mxu0
        %v1364 = vadd.f32 %v825, %v1363
        %1365 = vdwg.mxu0
        %1366 = vmatprep.subr.bf16.mxu0 %v1105
        %1367 = vmatpush1.bf16.msra.mxu0 %v1104
        %1368 = vmatprep.subr.bf16.mxu0 %v1115
        %1369 = vmatpush1.bf16.msra.mxu0 %v1114
        %1370 = vmatprep.subr.bf16.mxu0 %v1125
        %1371 = vmatpush1.bf16.msra.mxu0 %v1124
        %1372 = vmatprep.subr.bf16.mxu0 %v1135
        %1373 = vmatpush1.bf16.msra.mxu0 %v1134
        %1374 = vmatprep.subr.bf16.mxu0 %v1145
        %1375 = vmatpush1.bf16.msra.mxu0 %v1144
        %1376 = vmatprep.subr.bf16.mxu0 %v1155
        %1377 = vmatpush1.bf16.msra.mxu0 %v1154
        %1378 = vmatprep.subr.bf16.mxu0 %v1165
        %1379 = vmatpush1.bf16.msra.mxu0 %v1164
        %1380 = vmatprep.subr.bf16.mxu0 %v1175
        %1381 = vmatpush1.bf16.msra.mxu0 %v1174
        %1382 = vmatprep.subr.bf16.mxu0 0
        %1383 = vmatpush1.bf16.msra.mxu0 0
        %1384 = vmatprep.subr.bf16.mxu0 0
        %1385 = vmatpush1.bf16.msra.mxu0 0
        %1386 = vmatprep.subr.bf16.mxu0 0
        %1387 = vmatpush1.bf16.msra.mxu0 0
        %1388 = vmatprep.subr.bf16.mxu0 0
        %1389 = vmatpush1.bf16.msra.mxu0 0
        %1390 = vmatprep.subr.bf16.mxu0 0
        %1391 = vmatpush1.bf16.msra.mxu0 0
        %1392 = vmatprep.subr.bf16.mxu0 0
        %1393 = vmatpush1.bf16.msra.mxu0 0
        %1394 = vmatprep.subr.bf16.mxu0 0
        %1395 = vmatpush1.bf16.msra.mxu0 0
        %1396 = vmatprep.subr.bf16.mxu0 0
        %1397 = vmatpush1.bf16.msra.mxu0 0
        %1398 = vmatprep.mubr.bf16.mxu0 0
        %1399 = vmatmul.mubr.bf16.gmra.mrb[0].mxu0 %v724
        %v1400 = vpop.f32.mrb[0].mxu0
        %v1401 = vadd.f32 %v829, %v1400
        %v1402 = vpop.f32.mrb[0].mxu0
        %v1403 = vadd.f32 %v833, %v1402
        %v1404 = vpop.f32.mrb[0].mxu0
        %v1405 = vadd.f32 %v829, %v1404
        %v1406 = vpop.f32.mrb[0].mxu0
        %v1407 = vadd.f32 %v833, %v1406
        %1408 = vmatprep.mubr.bf16.mxu0 0
        %1409 = vmatmul.mubr.bf16.gmra.mrb[0].mxu0 %v725
        %v1410 = vpop.f32.mrb[0].mxu0
        %v1411 = vadd.f32 %v829, %v1410
        %v1412 = vpop.f32.mrb[0].mxu0
        %v1413 = vadd.f32 %v833, %v1412
        %v1414 = vpop.f32.mrb[0].mxu0
        %v1415 = vadd.f32 %v829, %v1414
        %v1416 = vpop.f32.mrb[0].mxu0
        %v1417 = vadd.f32 %v833, %v1416
        %1418 = vdwg.mxu0
        %1419 = vmatprep.subr.bf16.mxu0 %v1107
        %1420 = vmatpush1.bf16.msra.mxu0 %v1106
        %1421 = vmatprep.subr.bf16.mxu0 %v1117
        %1422 = vmatpush1.bf16.msra.mxu0 %v1116
        %1423 = vmatprep.subr.bf16.mxu0 %v1127
        %1424 = vmatpush1.bf16.msra.mxu0 %v1126
        %1425 = vmatprep.subr.bf16.mxu0 %v1137
        %1426 = vmatpush1.bf16.msra.mxu0 %v1136
        %1427 = vmatprep.subr.bf16.mxu0 %v1147
        %1428 = vmatpush1.bf16.msra.mxu0 %v1146
        %1429 = vmatprep.subr.bf16.mxu0 %v1157
        %1430 = vmatpush1.bf16.msra.mxu0 %v1156
        %1431 = vmatprep.subr.bf16.mxu0 %v1167
        %1432 = vmatpush1.bf16.msra.mxu0 %v1166
        %1433 = vmatprep.subr.bf16.mxu0 %v1177
        %1434 = vmatpush1.bf16.msra.mxu0 %v1176
        %1435 = vmatprep.subr.bf16.mxu0 0
        %1436 = vmatpush1.bf16.msra.mxu0 0
        %1437 = vmatprep.subr.bf16.mxu0 0
        %1438 = vmatpush1.bf16.msra.mxu0 0
        %1439 = vmatprep.subr.bf16.mxu0 0
        %1440 = vmatpush1.bf16.msra.mxu0 0
        %1441 = vmatprep.subr.bf16.mxu0 0
        %1442 = vmatpush1.bf16.msra.mxu0 0
        %1443 = vmatprep.subr.bf16.mxu0 0
        %1444 = vmatpush1.bf16.msra.mxu0 0
        %1445 = vmatprep.subr.bf16.mxu0 0
        %1446 = vmatpush1.bf16.msra.mxu0 0
        %1447 = vmatprep.subr.bf16.mxu0 0
        %1448 = vmatpush1.bf16.msra.mxu0 0
        %1449 = vmatprep.subr.bf16.mxu0 0
        %1450 = vmatpush1.bf16.msra.mxu0 0
        %1451 = vmatprep.mubr.bf16.mxu0 0
        %1452 = vmatmul.mubr.bf16.gmra.mrb[0].mxu0 %v724
        %v1453 = vpop.f32.mrb[0].mxu0
        %v1454 = vadd.f32 %v837, %v1453
        %v1455 = vpop.f32.mrb[0].mxu0
        %v1456 = vadd.f32 %v841, %v1455
        %v1457 = vpop.f32.mrb[0].mxu0
        %v1458 = vadd.f32 %v837, %v1457
        %v1459 = vpop.f32.mrb[0].mxu0
        %v1460 = vadd.f32 %v841, %v1459
        %1461 = vmatprep.mubr.bf16.mxu0 0
        %1462 = vmatmul.mubr.bf16.gmra.mrb[0].mxu0 %v725
        %v1463 = vpop.f32.mrb[0].mxu0
        %v1464 = vadd.f32 %v837, %v1463
        %v1465 = vpop.f32.mrb[0].mxu0
        %v1466 = vadd.f32 %v841, %v1465
        %v1467 = vpop.f32.mrb[0].mxu0
        %v1468 = vadd.f32 %v837, %v1467
        %v1469 = vpop.f32.mrb[0].mxu0
        %v1470 = vadd.f32 %v841, %v1469
        %1471 = vdwg.mxu0
        %1472 = vmatprep.subr.bf16.mxu0 %v1109
        %1473 = vmatpush1.bf16.msra.mxu0 %v1108
        %1474 = vmatprep.subr.bf16.mxu0 %v1119
        %1475 = vmatpush1.bf16.msra.mxu0 %v1118
        %1476 = vmatprep.subr.bf16.mxu0 %v1129
        %1477 = vmatpush1.bf16.msra.mxu0 %v1128
        %1478 = vmatprep.subr.bf16.mxu0 %v1139
        %1479 = vmatpush1.bf16.msra.mxu0 %v1138
        %1480 = vmatprep.subr.bf16.mxu0 %v1149
        %1481 = vmatpush1.bf16.msra.mxu0 %v1148
        %1482 = vmatprep.subr.bf16.mxu0 %v1159
        %1483 = vmatpush1.bf16.msra.mxu0 %v1158
        %1484 = vmatprep.subr.bf16.mxu0 %v1169
        %1485 = vmatpush1.bf16.msra.mxu0 %v1168
        %1486 = vmatprep.subr.bf16.mxu0 %v1179
        %1487 = vmatpush1.bf16.msra.mxu0 %v1178
        %1488 = vmatprep.subr.bf16.mxu0 0
        %1489 = vmatpush1.bf16.msra.mxu0 0
        %1490 = vmatprep.subr.bf16.mxu0 0
        %1491 = vmatpush1.bf16.msra.mxu0 0
        %1492 = vmatprep.subr.bf16.mxu0 0
        %1493 = vmatpush1.bf16.msra.mxu0 0
        %1494 = vmatprep.subr.bf16.mxu0 0
        %1495 = vmatpush1.bf16.msra.mxu0 0
        %1496 = vmatprep.subr.bf16.mxu0 0
        %1497 = vmatpush1.bf16.msra.mxu0 0
        %1498 = vmatprep.subr.bf16.mxu0 0
        %1499 = vmatpush1.bf16.msra.mxu0 0
        %1500 = vmatprep.subr.bf16.mxu0 0
        %1501 = vmatpush1.bf16.msra.mxu0 0
        %1502 = vmatprep.subr.bf16.mxu0 0
        %1503 = vmatpush1.bf16.msra.mxu0 0
        %1504 = vmatprep.mubr.bf16.mxu0 0
        %1505 = vmatmul.mubr.bf16.gmra.mrb[0].mxu0 %v724
        %v1506 = vpop.f32.mrb[0].mxu0
        %v1507 = vadd.f32 %v845, %v1506
        %v1508 = vpop.f32.mrb[0].mxu0
        %v1509 = vadd.f32 %v849, %v1508
        %v1510 = vpop.f32.mrb[0].mxu0
        %v1511 = vadd.f32 %v845, %v1510
        %v1512 = vpop.f32.mrb[0].mxu0
        %v1513 = vadd.f32 %v849, %v1512
        %1514 = vmatprep.mubr.bf16.mxu0 0
        %1515 = vmatmul.mubr.bf16.gmra.mrb[0].mxu0 %v725
        %v1516 = vpop.f32.mrb[0].mxu0
        %v1517 = vadd.f32 %v845, %v1516
        %v1518 = vpop.f32.mrb[0].mxu0
        %v1519 = vadd.f32 %v849, %v1518
        %v1520 = vpop.f32.mrb[0].mxu0
        %v1521 = vadd.f32 %v845, %v1520
        %v1522 = vpop.f32.mrb[0].mxu0
        %v1523 = vadd.f32 %v849, %v1522
        %1524 = vdwg.mxu0
        %v1525 = vmax.f32 %v1295, 0.0
        %v1526 = vmax.f32 %v1297, 0.0
        %v1527 = vmax.f32 %v1348, 0.0
        %v1528 = vmax.f32 %v1350, 0.0
        %v1529 = vmax.f32 %v1401, 0.0
        %v1530 = vmax.f32 %v1403, 0.0
        %v1531 = vmax.f32 %v1454, 0.0
        %v1532 = vmax.f32 %v1456, 0.0
        %v1533 = vmax.f32 %v1507, 0.0
        %v1534 = vmax.f32 %v1509, 0.0
        %v1535 = vmax.f32 %v1299, 0.0
        %v1536 = vmax.f32 %v1301, 0.0
        %v1537 = vmax.f32 %v1352, 0.0
        %v1538 = vmax.f32 %v1354, 0.0
        %v1539 = vmax.f32 %v1405, 0.0
        %v1540 = vmax.f32 %v1407, 0.0
        %v1541 = vmax.f32 %v1458, 0.0
        %v1542 = vmax.f32 %v1460, 0.0
        %v1543 = vmax.f32 %v1511, 0.0
        %v1544 = vmax.f32 %v1513, 0.0
        %v1545 = vmax.f32 %v1305, 0.0
        %v1546 = vmax.f32 %v1307, 0.0
        %v1547 = vmax.f32 %v1358, 0.0
        %v1548 = vmax.f32 %v1360, 0.0
        %v1549 = vmax.f32 %v1411, 0.0
        %v1550 = vmax.f32 %v1413, 0.0
        %v1551 = vmax.f32 %v1464, 0.0
        %v1552 = vmax.f32 %v1466, 0.0
        %v1553 = vmax.f32 %v1517, 0.0
        %v1554 = vmax.f32 %v1519, 0.0
        %v1555 = vmax.f32 %v1309, 0.0
        %v1556 = vmax.f32 %v1311, 0.0
        %v1557 = vmax.f32 %v1362, 0.0
        %v1558 = vmax.f32 %v1364, 0.0
        %v1559 = vmax.f32 %v1415, 0.0
        %v1560 = vmax.f32 %v1417, 0.0
        %v1561 = vmax.f32 %v1468, 0.0
        %v1562 = vmax.f32 %v1470, 0.0
        %v1563 = vmax.f32 %v1521, 0.0
        %v1564 = vmax.f32 %v1523, 0.0
        %v1565 = vpack.c.bf16 %v1535, %v1525
        %v1566 = vpack.c.bf16 %v1536, %v1526
        %v1567 = vpack.c.bf16 %v1537, %v1527
        %v1568 = vpack.c.bf16 %v1538, %v1528
        %v1569 = vpack.c.bf16 %v1539, %v1529
        %v1570 = vpack.c.bf16 %v1540, %v1530
        %v1571 = vpack.c.bf16 %v1541, %v1531
        %v1572 = vpack.c.bf16 %v1542, %v1532
        %v1573 = vpack.c.bf16 %v1543, %v1533
        %v1574 = vpack.c.bf16 %v1544, %v1534
        %v1575 = vpack.c.bf16 %v1555, %v1545
        %v1576 = vpack.c.bf16 %v1556, %v1546
        %v1577 = vpack.c.bf16 %v1557, %v1547
        %v1578 = vpack.c.bf16 %v1558, %v1548
        %v1579 = vpack.c.bf16 %v1559, %v1549
        %v1580 = vpack.c.bf16 %v1560, %v1550
        %v1581 = vpack.c.bf16 %v1561, %v1551
        %v1582 = vpack.c.bf16 %v1562, %v1552
        %v1583 = vpack.c.bf16 %v1563, %v1553
        %v1584 = vpack.c.bf16 %v1564, %v1554
        %v1585 = vld [vmem:[#allocation4] sm:$0xff]
        %v1586 = vld [vmem:[#allocation4 + $0x8] sm:$0xff]
        %v1587 = vld [vmem:[#allocation4 + $0x10] sm:$0xff]
        %v1588 = vld [vmem:[#allocation4 + $0x18] sm:$0xff]
        %v1589 = vld [vmem:[#allocation4 + $0x20] sm:$0xff]
        %v1590 = vld [vmem:[#allocation4 + $0x28] sm:$0xff]
        %v1591 = vld [vmem:[#allocation4 + $0x30] sm:$0xff]
        %v1592 = vld [vmem:[#allocation4 + $0x38] sm:$0xff]
        %v1593 = vld [vmem:[%s487] sm:$0xff]
        %v1594 = vld [vmem:[%s487 + $0x8] sm:$0xff]
        %v1595 = vld [vmem:[%s487 + $0x10] sm:$0xff]
        %v1596 = vld [vmem:[%s487 + $0x18] sm:$0xff]
        %v1597 = vld [vmem:[%s487 + $0x20] sm:$0xff]
        %v1598 = vld [vmem:[%s487 + $0x28] sm:$0xff]
        %v1599 = vld [vmem:[%s487 + $0x30] sm:$0xff]
        %v1600 = vld [vmem:[%s487 + $0x38] sm:$0xff]
        %v1601 = vld [vmem:[%s487 + $0x40] sm:$0xff]
        %v1602 = vld [vmem:[%s487 + $0x48] sm:$0xff]
        %v1603 = vld [vmem:[%s487 + $0x50] sm:$0xff]
        %v1604 = vld [vmem:[%s487 + $0x58] sm:$0xff]
        %v1605 = vld [vmem:[%s487 + $0x60] sm:$0xff]
        %v1606 = vld [vmem:[%s487 + $0x68] sm:$0xff]
        %v1607 = vld [vmem:[%s487 + $0x70] sm:$0xff]
        %v1608 = vld [vmem:[%s487 + $0x78] sm:$0xff]
        %v1609 = vld [vmem:[%s487 + $0x80] sm:$0xff]
        %v1610 = vld [vmem:[%s487 + $0x88] sm:$0xff]
        %v1611 = vld [vmem:[%s487 + $0x90] sm:$0xff]
        %v1612 = vld [vmem:[%s487 + $0x98] sm:$0xff]
        %v1613 = vld [vmem:[%s487 + $0xa0] sm:$0xff]
        %v1614 = vld [vmem:[%s487 + $0xa8] sm:$0xff]
        %v1615 = vld [vmem:[%s487 + $0xb0] sm:$0xff]
        %v1616 = vld [vmem:[%s487 + $0xb8] sm:$0xff]
        %v1617 = vld [vmem:[%s487 + $0xc0] sm:$0xff]
        %v1618 = vld [vmem:[%s487 + $0xc8] sm:$0xff]
        %v1619 = vld [vmem:[%s487 + $0xd0] sm:$0xff]
        %v1620 = vld [vmem:[%s487 + $0xd8] sm:$0xff]
        %v1621 = vld [vmem:[%s487 + $0xe0] sm:$0xff]
        %v1622 = vld [vmem:[%s487 + $0xe8] sm:$0xff]
        %v1623 = vld [vmem:[%s487 + $0xf0] sm:$0xff]
        %v1624 = vld [vmem:[%s487 + $0xf8] sm:$0xff]
        %v1625 = vld [vmem:[%s487 + $0x100] sm:$0xff]
        %v1626 = vld [vmem:[%s487 + $0x108] sm:$0xff]
        %v1627 = vld [vmem:[%s487 + $0x110] sm:$0xff]
        %v1628 = vld [vmem:[%s487 + $0x118] sm:$0xff]
        %v1629 = vld [vmem:[%s487 + $0x120] sm:$0xff]
        %v1630 = vld [vmem:[%s487 + $0x128] sm:$0xff]
        %v1631 = vld [vmem:[%s487 + $0x130] sm:$0xff]
        %v1632 = vld [vmem:[%s487 + $0x138] sm:$0xff]
        %v1633 = vld [vmem:[%s487 + $0x140] sm:$0xff]
        %v1634 = vld [vmem:[%s487 + $0x148] sm:$0xff]
        %v1635 = vld [vmem:[%s487 + $0x150] sm:$0xff]
        %v1636 = vld [vmem:[%s487 + $0x158] sm:$0xff]
        %v1637 = vld [vmem:[%s487 + $0x160] sm:$0xff]
        %v1638 = vld [vmem:[%s487 + $0x168] sm:$0xff]
        %v1639 = vld [vmem:[%s487 + $0x170] sm:$0xff]
        %v1640 = vld [vmem:[%s487 + $0x178] sm:$0xff]
        %v1641 = vld [vmem:[%s487 + $0x180] sm:$0xff]
        %v1642 = vld [vmem:[%s487 + $0x188] sm:$0xff]
        %v1643 = vld [vmem:[%s487 + $0x190] sm:$0xff]
        %v1644 = vld [vmem:[%s487 + $0x198] sm:$0xff]
        %v1645 = vld [vmem:[%s487 + $0x1a0] sm:$0xff]
        %v1646 = vld [vmem:[%s487 + $0x1a8] sm:$0xff]
        %v1647 = vld [vmem:[%s487 + $0x1b0] sm:$0xff]
        %v1648 = vld [vmem:[%s487 + $0x1b8] sm:$0xff]
        %v1649 = vld [vmem:[%s487 + $0x1c0] sm:$0xff]
        %v1650 = vld [vmem:[%s487 + $0x1c8] sm:$0xff]
        %v1651 = vld [vmem:[%s487 + $0x1d0] sm:$0xff]
        %v1652 = vld [vmem:[%s487 + $0x1d8] sm:$0xff]
        %v1653 = vld [vmem:[%s487 + $0x1e0] sm:$0xff]
        %v1654 = vld [vmem:[%s487 + $0x1e8] sm:$0xff]
        %v1655 = vld [vmem:[%s487 + $0x1f0] sm:$0xff]
        %v1656 = vld [vmem:[%s487 + $0x1f8] sm:$0xff]
        %v1657 = vld [vmem:[%s487 + $0x200] sm:$0xff]
        %v1658 = vld [vmem:[%s487 + $0x208] sm:$0xff]
        %v1659 = vld [vmem:[%s487 + $0x210] sm:$0xff]
        %v1660 = vld [vmem:[%s487 + $0x218] sm:$0xff]
        %v1661 = vld [vmem:[%s487 + $0x220] sm:$0xff]
        %v1662 = vld [vmem:[%s487 + $0x228] sm:$0xff]
        %v1663 = vld [vmem:[%s487 + $0x230] sm:$0xff]
        %v1664 = vld [vmem:[%s487 + $0x238] sm:$0xff]
        %v1665 = vld [vmem:[%s487 + $0x240] sm:$0xff]
        %v1666 = vld [vmem:[%s487 + $0x248] sm:$0xff]
        %v1667 = vld [vmem:[%s487 + $0x250] sm:$0xff]
        %v1668 = vld [vmem:[%s487 + $0x258] sm:$0xff]
        %v1669 = vld [vmem:[%s487 + $0x260] sm:$0xff]
        %v1670 = vld [vmem:[%s487 + $0x268] sm:$0xff]
        %v1671 = vld [vmem:[%s487 + $0x270] sm:$0xff]
        %v1672 = vld [vmem:[%s487 + $0x278] sm:$0xff]
        %v1673 = vld [vmem:[%s487 + $0x280] sm:$0xff]
        %v1674 = vld [vmem:[%s487 + $0x288] sm:$0xff]
        %v1675 = vld [vmem:[%s487 + $0x290] sm:$0xff]
        %v1676 = vld [vmem:[%s487 + $0x298] sm:$0xff]
        %v1677 = vld [vmem:[%s487 + $0x2a0] sm:$0xff]
        %v1678 = vld [vmem:[%s487 + $0x2a8] sm:$0xff]
        %v1679 = vld [vmem:[%s487 + $0x2b0] sm:$0xff]
        %v1680 = vld [vmem:[%s487 + $0x2b8] sm:$0xff]
        %v1681 = vld [vmem:[%s487 + $0x2c0] sm:$0xff]
        %v1682 = vld [vmem:[%s487 + $0x2c8] sm:$0xff]
        %v1683 = vld [vmem:[%s487 + $0x2d0] sm:$0xff]
        %v1684 = vld [vmem:[%s487 + $0x2d8] sm:$0xff]
        %v1685 = vld [vmem:[%s487 + $0x2e0] sm:$0xff]
        %v1686 = vld [vmem:[%s487 + $0x2e8] sm:$0xff]
        %v1687 = vld [vmem:[%s487 + $0x2f0] sm:$0xff]
        %v1688 = vld [vmem:[%s487 + $0x2f8] sm:$0xff]
        %v1689 = vld [vmem:[%s487 + $0x300] sm:$0xff]
        %v1690 = vld [vmem:[%s487 + $0x308] sm:$0xff]
        %v1691 = vld [vmem:[%s487 + $0x310] sm:$0xff]
        %v1692 = vld [vmem:[%s487 + $0x318] sm:$0xff]
        %v1693 = vld [vmem:[%s487 + $0x320] sm:$0xff]
        %v1694 = vld [vmem:[%s487 + $0x328] sm:$0xff]
        %v1695 = vld [vmem:[%s487 + $0x330] sm:$0xff]
        %v1696 = vld [vmem:[%s487 + $0x338] sm:$0xff]
        %v1697 = vld [vmem:[%s487 + $0x340] sm:$0xff]
        %v1698 = vld [vmem:[%s487 + $0x348] sm:$0xff]
        %v1699 = vld [vmem:[%s487 + $0x350] sm:$0xff]
        %v1700 = vld [vmem:[%s487 + $0x358] sm:$0xff]
        %v1701 = vld [vmem:[%s487 + $0x360] sm:$0xff]
        %v1702 = vld [vmem:[%s487 + $0x368] sm:$0xff]
        %v1703 = vld [vmem:[%s487 + $0x370] sm:$0xff]
        %v1704 = vld [vmem:[%s487 + $0x378] sm:$0xff]
        %v1705 = vld [vmem:[%s487 + $0x380] sm:$0xff]
        %v1706 = vld [vmem:[%s487 + $0x388] sm:$0xff]
        %v1707 = vld [vmem:[%s487 + $0x390] sm:$0xff]
        %v1708 = vld [vmem:[%s487 + $0x398] sm:$0xff]
        %v1709 = vld [vmem:[%s487 + $0x3a0] sm:$0xff]
        %v1710 = vld [vmem:[%s487 + $0x3a8] sm:$0xff]
        %v1711 = vld [vmem:[%s487 + $0x3b0] sm:$0xff]
        %v1712 = vld [vmem:[%s487 + $0x3b8] sm:$0xff]
        %v1713 = vld [vmem:[%s487 + $0x3c0] sm:$0xff]
        %v1714 = vld [vmem:[%s487 + $0x3c8] sm:$0xff]
        %v1715 = vld [vmem:[%s487 + $0x3d0] sm:$0xff]
        %v1716 = vld [vmem:[%s487 + $0x3d8] sm:$0xff]
        %v1717 = vld [vmem:[%s487 + $0x3e0] sm:$0xff]
        %v1718 = vld [vmem:[%s487 + $0x3e8] sm:$0xff]
        %v1719 = vld [vmem:[%s487 + $0x3f0] sm:$0xff]
        %v1720 = vld [vmem:[%s487 + $0x3f8] sm:$0xff]
        %v1721 = vld [vmem:[%s487 + $0x400] sm:$0xff]
        %v1722 = vld [vmem:[%s487 + $0x408] sm:$0xff]
        %v1723 = vld [vmem:[%s487 + $0x410] sm:$0xff]
        %v1724 = vld [vmem:[%s487 + $0x418] sm:$0xff]
        %v1725 = vld [vmem:[%s487 + $0x420] sm:$0xff]
        %v1726 = vld [vmem:[%s487 + $0x428] sm:$0xff]
        %v1727 = vld [vmem:[%s487 + $0x430] sm:$0xff]
        %v1728 = vld [vmem:[%s487 + $0x438] sm:$0xff]
        %v1729 = vld [vmem:[%s487 + $0x440] sm:$0xff]
        %v1730 = vld [vmem:[%s487 + $0x448] sm:$0xff]
        %v1731 = vld [vmem:[%s487 + $0x450] sm:$0xff]
        %v1732 = vld [vmem:[%s487 + $0x458] sm:$0xff]
        %v1733 = vld [vmem:[%s487 + $0x460] sm:$0xff]
        %v1734 = vld [vmem:[%s487 + $0x468] sm:$0xff]
        %v1735 = vld [vmem:[%s487 + $0x470] sm:$0xff]
        %v1736 = vld [vmem:[%s487 + $0x478] sm:$0xff]
        %v1737 = vld [vmem:[%s487 + $0x480] sm:$0xff]
        %v1738 = vld [vmem:[%s487 + $0x488] sm:$0xff]
        %v1739 = vld [vmem:[%s487 + $0x490] sm:$0xff]
        %v1740 = vld [vmem:[%s487 + $0x498] sm:$0xff]
        %v1741 = vld [vmem:[%s487 + $0x4a0] sm:$0xff]
        %v1742 = vld [vmem:[%s487 + $0x4a8] sm:$0xff]
        %v1743 = vld [vmem:[%s487 + $0x4b0] sm:$0xff]
        %v1744 = vld [vmem:[%s487 + $0x4b8] sm:$0xff]
        %v1745 = vld [vmem:[%s487 + $0x4c0] sm:$0xff]
        %v1746 = vld [vmem:[%s487 + $0x4c8] sm:$0xff]
        %v1747 = vld [vmem:[%s487 + $0x4d0] sm:$0xff]
        %v1748 = vld [vmem:[%s487 + $0x4d8] sm:$0xff]
        %v1749 = vld [vmem:[%s487 + $0x4e0] sm:$0xff]
        %v1750 = vld [vmem:[%s487 + $0x4e8] sm:$0xff]
        %v1751 = vld [vmem:[%s487 + $0x4f0] sm:$0xff]
        %v1752 = vld [vmem:[%s487 + $0x4f8] sm:$0xff]
        %v1913 = vunpack.c.l.b16 %v1593
        %v1914 = vunpack.c.h.b16 %v1593
        %v1915 = vunpack.c.l.b16 %v1594
        %v1916 = vunpack.c.h.b16 %v1594
        %v1917 = vunpack.c.l.b16 %v1595
        %v1918 = vunpack.c.h.b16 %v1595
        %v1919 = vunpack.c.l.b16 %v1596
        %v1920 = vunpack.c.h.b16 %v1596
        %v1921 = vunpack.c.l.b16 %v1597
        %v1922 = vunpack.c.h.b16 %v1597
        %v1923 = vunpack.c.l.b16 %v1598
        %v1924 = vunpack.c.h.b16 %v1598
        %v1925 = vunpack.c.l.b16 %v1599
        %v1926 = vunpack.c.h.b16 %v1599
        %v1927 = vunpack.c.l.b16 %v1600
        %v1928 = vunpack.c.h.b16 %v1600
        %v1929 = vunpack.c.l.b16 %v1601
        %v1930 = vunpack.c.h.b16 %v1601
        %v1931 = vunpack.c.l.b16 %v1602
        %v1932 = vunpack.c.h.b16 %v1602
        %v1933 = vunpack.c.l.b16 %v1603
        %v1934 = vunpack.c.h.b16 %v1603
        %v1935 = vunpack.c.l.b16 %v1604
        %v1936 = vunpack.c.h.b16 %v1604
        %v1937 = vunpack.c.l.b16 %v1605
        %v1938 = vunpack.c.h.b16 %v1605
        %v1939 = vunpack.c.l.b16 %v1606
        %v1940 = vunpack.c.h.b16 %v1606
        %v1941 = vunpack.c.l.b16 %v1607
        %v1942 = vunpack.c.h.b16 %v1607
        %v1943 = vunpack.c.l.b16 %v1608
        %v1944 = vunpack.c.h.b16 %v1608
        %v1945 = vunpack.c.l.b16 %v1609
        %v1946 = vunpack.c.h.b16 %v1609
        %v1947 = vunpack.c.l.b16 %v1610
        %v1948 = vunpack.c.h.b16 %v1610
        %v1949 = vunpack.c.l.b16 %v1611
        %v1950 = vunpack.c.h.b16 %v1611
        %v1951 = vunpack.c.l.b16 %v1612
        %v1952 = vunpack.c.h.b16 %v1612
        %v1953 = vunpack.c.l.b16 %v1613
        %v1954 = vunpack.c.h.b16 %v1613
        %v1955 = vunpack.c.l.b16 %v1614
        %v1956 = vunpack.c.h.b16 %v1614
        %v1957 = vunpack.c.l.b16 %v1615
        %v1958 = vunpack.c.h.b16 %v1615
        %v1959 = vunpack.c.l.b16 %v1616
        %v1960 = vunpack.c.h.b16 %v1616
        %v1961 = vunpack.c.l.b16 %v1617
        %v1962 = vunpack.c.h.b16 %v1617
        %v1963 = vunpack.c.l.b16 %v1618
        %v1964 = vunpack.c.h.b16 %v1618
        %v1965 = vunpack.c.l.b16 %v1619
        %v1966 = vunpack.c.h.b16 %v1619
        %v1967 = vunpack.c.l.b16 %v1620
        %v1968 = vunpack.c.h.b16 %v1620
        %v1969 = vunpack.c.l.b16 %v1621
        %v1970 = vunpack.c.h.b16 %v1621
        %v1971 = vunpack.c.l.b16 %v1622
        %v1972 = vunpack.c.h.b16 %v1622
        %v1973 = vunpack.c.l.b16 %v1623
        %v1974 = vunpack.c.h.b16 %v1623
        %v1975 = vunpack.c.l.b16 %v1624
        %v1976 = vunpack.c.h.b16 %v1624
        %v1977 = vunpack.c.l.b16 %v1625
        %v1978 = vunpack.c.h.b16 %v1625
        %v1979 = vunpack.c.l.b16 %v1626
        %v1980 = vunpack.c.h.b16 %v1626
        %v1981 = vunpack.c.l.b16 %v1627
        %v1982 = vunpack.c.h.b16 %v1627
        %v1983 = vunpack.c.l.b16 %v1628
        %v1984 = vunpack.c.h.b16 %v1628
        %v1985 = vunpack.c.l.b16 %v1629
        %v1986 = vunpack.c.h.b16 %v1629
        %v1987 = vunpack.c.l.b16 %v1630
        %v1988 = vunpack.c.h.b16 %v1630
        %v1989 = vunpack.c.l.b16 %v1631
        %v1990 = vunpack.c.h.b16 %v1631
        %v1991 = vunpack.c.l.b16 %v1632
        %v1992 = vunpack.c.h.b16 %v1632
        %v1993 = vunpack.c.l.b16 %v1633
        %v1994 = vunpack.c.h.b16 %v1633
        %v1995 = vunpack.c.l.b16 %v1634
        %v1996 = vunpack.c.h.b16 %v1634
        %v1997 = vunpack.c.l.b16 %v1635
        %v1998 = vunpack.c.h.b16 %v1635
        %v1999 = vunpack.c.l.b16 %v1636
        %v2000 = vunpack.c.h.b16 %v1636
        %v2001 = vunpack.c.l.b16 %v1637
        %v2002 = vunpack.c.h.b16 %v1637
        %v2003 = vunpack.c.l.b16 %v1638
        %v2004 = vunpack.c.h.b16 %v1638
        %v2005 = vunpack.c.l.b16 %v1639
        %v2006 = vunpack.c.h.b16 %v1639
        %v2007 = vunpack.c.l.b16 %v1640
        %v2008 = vunpack.c.h.b16 %v1640
        %v2009 = vunpack.c.l.b16 %v1641
        %v2010 = vunpack.c.h.b16 %v1641
        %v2011 = vunpack.c.l.b16 %v1642
        %v2012 = vunpack.c.h.b16 %v1642
        %v2013 = vunpack.c.l.b16 %v1643
        %v2014 = vunpack.c.h.b16 %v1643
        %v2015 = vunpack.c.l.b16 %v1644
        %v2016 = vunpack.c.h.b16 %v1644
        %v2017 = vunpack.c.l.b16 %v1645
        %v2018 = vunpack.c.h.b16 %v1645
        %v2019 = vunpack.c.l.b16 %v1646
        %v2020 = vunpack.c.h.b16 %v1646
        %v2021 = vunpack.c.l.b16 %v1647
        %v2022 = vunpack.c.h.b16 %v1647
        %v2023 = vunpack.c.l.b16 %v1648
        %v2024 = vunpack.c.h.b16 %v1648
        %v2025 = vunpack.c.l.b16 %v1649
        %v2026 = vunpack.c.h.b16 %v1649
        %v2027 = vunpack.c.l.b16 %v1650
        %v2028 = vunpack.c.h.b16 %v1650
        %v2029 = vunpack.c.l.b16 %v1651
        %v2030 = vunpack.c.h.b16 %v1651
        %v2031 = vunpack.c.l.b16 %v1652
        %v2032 = vunpack.c.h.b16 %v1652
        %v2033 = vunpack.c.l.b16 %v1653
        %v2034 = vunpack.c.h.b16 %v1653
        %v2035 = vunpack.c.l.b16 %v1654
        %v2036 = vunpack.c.h.b16 %v1654
        %v2037 = vunpack.c.l.b16 %v1655
        %v2038 = vunpack.c.h.b16 %v1655
        %v2039 = vunpack.c.l.b16 %v1656
        %v2040 = vunpack.c.h.b16 %v1656
        %v2041 = vunpack.c.l.b16 %v1657
        %v2042 = vunpack.c.h.b16 %v1657
        %v2043 = vunpack.c.l.b16 %v1658
        %v2044 = vunpack.c.h.b16 %v1658
        %v2045 = vunpack.c.l.b16 %v1659
        %v2046 = vunpack.c.h.b16 %v1659
        %v2047 = vunpack.c.l.b16 %v1660
        %v2048 = vunpack.c.h.b16 %v1660
        %v2049 = vunpack.c.l.b16 %v1661
        %v2050 = vunpack.c.h.b16 %v1661
        %v2051 = vunpack.c.l.b16 %v1662
        %v2052 = vunpack.c.h.b16 %v1662
        %v2053 = vunpack.c.l.b16 %v1663
        %v2054 = vunpack.c.h.b16 %v1663
        %v2055 = vunpack.c.l.b16 %v1664
        %v2056 = vunpack.c.h.b16 %v1664
        %v2057 = vunpack.c.l.b16 %v1665
        %v2058 = vunpack.c.h.b16 %v1665
        %v2059 = vunpack.c.l.b16 %v1666
        %v2060 = vunpack.c.h.b16 %v1666
        %v2061 = vunpack.c.l.b16 %v1667
        %v2062 = vunpack.c.h.b16 %v1667
        %v2063 = vunpack.c.l.b16 %v1668
        %v2064 = vunpack.c.h.b16 %v1668
        %v2065 = vunpack.c.l.b16 %v1669
        %v2066 = vunpack.c.h.b16 %v1669
        %v2067 = vunpack.c.l.b16 %v1670
        %v2068 = vunpack.c.h.b16 %v1670
        %v2069 = vunpack.c.l.b16 %v1671
        %v2070 = vunpack.c.h.b16 %v1671
        %v2071 = vunpack.c.l.b16 %v1672
        %v2072 = vunpack.c.h.b16 %v1672
        %v2073 = vunpack.c.l.b16 %v1673
        %v2074 = vunpack.c.h.b16 %v1673
        %v2075 = vunpack.c.l.b16 %v1674
        %v2076 = vunpack.c.h.b16 %v1674
        %v2077 = vunpack.c.l.b16 %v1675
        %v2078 = vunpack.c.h.b16 %v1675
        %v2079 = vunpack.c.l.b16 %v1676
        %v2080 = vunpack.c.h.b16 %v1676
        %v2081 = vunpack.c.l.b16 %v1677
        %v2082 = vunpack.c.h.b16 %v1677
        %v2083 = vunpack.c.l.b16 %v1678
        %v2084 = vunpack.c.h.b16 %v1678
        %v2085 = vunpack.c.l.b16 %v1679
        %v2086 = vunpack.c.h.b16 %v1679
        %v2087 = vunpack.c.l.b16 %v1680
        %v2088 = vunpack.c.h.b16 %v1680
        %v2089 = vunpack.c.l.b16 %v1681
        %v2090 = vunpack.c.h.b16 %v1681
        %v2091 = vunpack.c.l.b16 %v1682
        %v2092 = vunpack.c.h.b16 %v1682
        %v2093 = vunpack.c.l.b16 %v1683
        %v2094 = vunpack.c.h.b16 %v1683
        %v2095 = vunpack.c.l.b16 %v1684
        %v2096 = vunpack.c.h.b16 %v1684
        %v2097 = vunpack.c.l.b16 %v1685
        %v2098 = vunpack.c.h.b16 %v1685
        %v2099 = vunpack.c.l.b16 %v1686
        %v2100 = vunpack.c.h.b16 %v1686
        %v2101 = vunpack.c.l.b16 %v1687
        %v2102 = vunpack.c.h.b16 %v1687
        %v2103 = vunpack.c.l.b16 %v1688
        %v2104 = vunpack.c.h.b16 %v1688
        %v2105 = vunpack.c.l.b16 %v1689
        %v2106 = vunpack.c.h.b16 %v1689
        %v2107 = vunpack.c.l.b16 %v1690
        %v2108 = vunpack.c.h.b16 %v1690
        %v2109 = vunpack.c.l.b16 %v1691
        %v2110 = vunpack.c.h.b16 %v1691
        %v2111 = vunpack.c.l.b16 %v1692
        %v2112 = vunpack.c.h.b16 %v1692
        %v2113 = vunpack.c.l.b16 %v1693
        %v2114 = vunpack.c.h.b16 %v1693
        %v2115 = vunpack.c.l.b16 %v1694
        %v2116 = vunpack.c.h.b16 %v1694
        %v2117 = vunpack.c.l.b16 %v1695
        %v2118 = vunpack.c.h.b16 %v1695
        %v2119 = vunpack.c.l.b16 %v1696
        %v2120 = vunpack.c.h.b16 %v1696
        %v2121 = vunpack.c.l.b16 %v1697
        %v2122 = vunpack.c.h.b16 %v1697
        %v2123 = vunpack.c.l.b16 %v1698
        %v2124 = vunpack.c.h.b16 %v1698
        %v2125 = vunpack.c.l.b16 %v1699
        %v2126 = vunpack.c.h.b16 %v1699
        %v2127 = vunpack.c.l.b16 %v1700
        %v2128 = vunpack.c.h.b16 %v1700
        %v2129 = vunpack.c.l.b16 %v1701
        %v2130 = vunpack.c.h.b16 %v1701
        %v2131 = vunpack.c.l.b16 %v1702
        %v2132 = vunpack.c.h.b16 %v1702
        %v2133 = vunpack.c.l.b16 %v1703
        %v2134 = vunpack.c.h.b16 %v1703
        %v2135 = vunpack.c.l.b16 %v1704
        %v2136 = vunpack.c.h.b16 %v1704
        %v2137 = vunpack.c.l.b16 %v1705
        %v2138 = vunpack.c.h.b16 %v1705
        %v2139 = vunpack.c.l.b16 %v1706
        %v2140 = vunpack.c.h.b16 %v1706
        %v2141 = vunpack.c.l.b16 %v1707
        %v2142 = vunpack.c.h.b16 %v1707
        %v2143 = vunpack.c.l.b16 %v1708
        %v2144 = vunpack.c.h.b16 %v1708
        %v2145 = vunpack.c.l.b16 %v1709
        %v2146 = vunpack.c.h.b16 %v1709
        %v2147 = vunpack.c.l.b16 %v1710
        %v2148 = vunpack.c.h.b16 %v1710
        %v2149 = vunpack.c.l.b16 %v1711
        %v2150 = vunpack.c.h.b16 %v1711
        %v2151 = vunpack.c.l.b16 %v1712
        %v2152 = vunpack.c.h.b16 %v1712
        %v2153 = vunpack.c.l.b16 %v1713
        %v2154 = vunpack.c.h.b16 %v1713
        %v2155 = vunpack.c.l.b16 %v1714
        %v2156 = vunpack.c.h.b16 %v1714
        %v2157 = vunpack.c.l.b16 %v1715
        %v2158 = vunpack.c.h.b16 %v1715
        %v2159 = vunpack.c.l.b16 %v1716
        %v2160 = vunpack.c.h.b16 %v1716
        %v2161 = vunpack.c.l.b16 %v1717
        %v2162 = vunpack.c.h.b16 %v1717
        %v2163 = vunpack.c.l.b16 %v1718
        %v2164 = vunpack.c.h.b16 %v1718
        %v2165 = vunpack.c.l.b16 %v1719
        %v2166 = vunpack.c.h.b16 %v1719
        %v2167 = vunpack.c.l.b16 %v1720
        %v2168 = vunpack.c.h.b16 %v1720
        %v2169 = vunpack.c.l.b16 %v1721
        %v2170 = vunpack.c.h.b16 %v1721
        %v2171 = vunpack.c.l.b16 %v1722
        %v2172 = vunpack.c.h.b16 %v1722
        %v2173 = vunpack.c.l.b16 %v1723
        %v2174 = vunpack.c.h.b16 %v1723
        %v2175 = vunpack.c.l.b16 %v1724
        %v2176 = vunpack.c.h.b16 %v1724
        %v2177 = vunpack.c.l.b16 %v1725
        %v2178 = vunpack.c.h.b16 %v1725
        %v2179 = vunpack.c.l.b16 %v1726
        %v2180 = vunpack.c.h.b16 %v1726
        %v2181 = vunpack.c.l.b16 %v1727
        %v2182 = vunpack.c.h.b16 %v1727
        %v2183 = vunpack.c.l.b16 %v1728
        %v2184 = vunpack.c.h.b16 %v1728
        %v2185 = vunpack.c.l.b16 %v1729
        %v2186 = vunpack.c.h.b16 %v1729
        %v2187 = vunpack.c.l.b16 %v1730
        %v2188 = vunpack.c.h.b16 %v1730
        %v2189 = vunpack.c.l.b16 %v1731
        %v2190 = vunpack.c.h.b16 %v1731
        %v2191 = vunpack.c.l.b16 %v1732
        %v2192 = vunpack.c.h.b16 %v1732
        %v2193 = vunpack.c.l.b16 %v1733
        %v2194 = vunpack.c.h.b16 %v1733
        %v2195 = vunpack.c.l.b16 %v1734
        %v2196 = vunpack.c.h.b16 %v1734
        %v2197 = vunpack.c.l.b16 %v1735
        %v2198 = vunpack.c.h.b16 %v1735
        %v2199 = vunpack.c.l.b16 %v1736
        %v2200 = vunpack.c.h.b16 %v1736
        %v2201 = vunpack.c.l.b16 %v1737
        %v2202 = vunpack.c.h.b16 %v1737
        %v2203 = vunpack.c.l.b16 %v1738
        %v2204 = vunpack.c.h.b16 %v1738
        %v2205 = vunpack.c.l.b16 %v1739
        %v2206 = vunpack.c.h.b16 %v1739
        %v2207 = vunpack.c.l.b16 %v1740
        %v2208 = vunpack.c.h.b16 %v1740
        %v2209 = vunpack.c.l.b16 %v1741
        %v2210 = vunpack.c.h.b16 %v1741
        %v2211 = vunpack.c.l.b16 %v1742
        %v2212 = vunpack.c.h.b16 %v1742
        %v2213 = vunpack.c.l.b16 %v1743
        %v2214 = vunpack.c.h.b16 %v1743
        %v2215 = vunpack.c.l.b16 %v1744
        %v2216 = vunpack.c.h.b16 %v1744
        %v2217 = vunpack.c.l.b16 %v1745
        %v2218 = vunpack.c.h.b16 %v1745
        %v2219 = vunpack.c.l.b16 %v1746
        %v2220 = vunpack.c.h.b16 %v1746
        %v2221 = vunpack.c.l.b16 %v1747
        %v2222 = vunpack.c.h.b16 %v1747
        %v2223 = vunpack.c.l.b16 %v1748
        %v2224 = vunpack.c.h.b16 %v1748
        %v2225 = vunpack.c.l.b16 %v1749
        %v2226 = vunpack.c.h.b16 %v1749
        %v2227 = vunpack.c.l.b16 %v1750
        %v2228 = vunpack.c.h.b16 %v1750
        %v2229 = vunpack.c.l.b16 %v1751
        %v2230 = vunpack.c.h.b16 %v1751
        %v2231 = vunpack.c.l.b16 %v1752
        %v2232 = vunpack.c.h.b16 %v1752
        %v2233 = vpack.c.b16 %v1915, %v1913
        %v2234 = vpack.c.b16 %v1916, %v1914
        %v2235 = vpack.c.b16 %v1919, %v1917
        %v2236 = vpack.c.b16 %v1920, %v1918
        %v2237 = vpack.c.b16 %v1923, %v1921
        %v2238 = vpack.c.b16 %v1924, %v1922
        %v2239 = vpack.c.b16 %v1927, %v1925
        %v2240 = vpack.c.b16 %v1928, %v1926
        %v2241 = vpack.c.b16 %v1931, %v1929
        %v2242 = vpack.c.b16 %v1932, %v1930
        %v2243 = vpack.c.b16 %v1935, %v1933
        %v2244 = vpack.c.b16 %v1936, %v1934
        %v2245 = vpack.c.b16 %v1939, %v1937
        %v2246 = vpack.c.b16 %v1940, %v1938
        %v2247 = vpack.c.b16 %v1943, %v1941
        %v2248 = vpack.c.b16 %v1944, %v1942
        %v2249 = vpack.c.b16 %v1947, %v1945
        %v2250 = vpack.c.b16 %v1948, %v1946
        %v2251 = vpack.c.b16 %v1951, %v1949
        %v2252 = vpack.c.b16 %v1952, %v1950
        %v2253 = vpack.c.b16 %v1955, %v1953
        %v2254 = vpack.c.b16 %v1956, %v1954
        %v2255 = vpack.c.b16 %v1959, %v1957
        %v2256 = vpack.c.b16 %v1960, %v1958
        %v2257 = vpack.c.b16 %v1963, %v1961
        %v2258 = vpack.c.b16 %v1964, %v1962
        %v2259 = vpack.c.b16 %v1967, %v1965
        %v2260 = vpack.c.b16 %v1968, %v1966
        %v2261 = vpack.c.b16 %v1971, %v1969
        %v2262 = vpack.c.b16 %v1972, %v1970
        %v2263 = vpack.c.b16 %v1975, %v1973
        %v2264 = vpack.c.b16 %v1976, %v1974
        %v2265 = vpack.c.b16 %v1979, %v1977
        %v2266 = vpack.c.b16 %v1980, %v1978
        %v2267 = vpack.c.b16 %v1983, %v1981
        %v2268 = vpack.c.b16 %v1984, %v1982
        %v2269 = vpack.c.b16 %v1987, %v1985
        %v2270 = vpack.c.b16 %v1988, %v1986
        %v2271 = vpack.c.b16 %v1991, %v1989
        %v2272 = vpack.c.b16 %v1992, %v1990
        %v2273 = vpack.c.b16 %v1995, %v1993
        %v2274 = vpack.c.b16 %v1996, %v1994
        %v2275 = vpack.c.b16 %v1999, %v1997
        %v2276 = vpack.c.b16 %v2000, %v1998
        %v2277 = vpack.c.b16 %v2003, %v2001
        %v2278 = vpack.c.b16 %v2004, %v2002
        %v2279 = vpack.c.b16 %v2007, %v2005
        %v2280 = vpack.c.b16 %v2008, %v2006
        %v2281 = vpack.c.b16 %v2011, %v2009
        %v2282 = vpack.c.b16 %v2012, %v2010
        %v2283 = vpack.c.b16 %v2015, %v2013
        %v2284 = vpack.c.b16 %v2016, %v2014
        %v2285 = vpack.c.b16 %v2019, %v2017
        %v2286 = vpack.c.b16 %v2020, %v2018
        %v2287 = vpack.c.b16 %v2023, %v2021
        %v2288 = vpack.c.b16 %v2024, %v2022
        %v2289 = vpack.c.b16 %v2027, %v2025
        %v2290 = vpack.c.b16 %v2028, %v2026
        %v2291 = vpack.c.b16 %v2031, %v2029
        %v2292 = vpack.c.b16 %v2032, %v2030
        %v2293 = vpack.c.b16 %v2035, %v2033
        %v2294 = vpack.c.b16 %v2036, %v2034
        %v2295 = vpack.c.b16 %v2039, %v2037
        %v2296 = vpack.c.b16 %v2040, %v2038
        %v2297 = vpack.c.b16 %v2043, %v2041
        %v2298 = vpack.c.b16 %v2044, %v2042
        %v2299 = vpack.c.b16 %v2047, %v2045
        %v2300 = vpack.c.b16 %v2048, %v2046
        %v2301 = vpack.c.b16 %v2051, %v2049
        %v2302 = vpack.c.b16 %v2052, %v2050
        %v2303 = vpack.c.b16 %v2055, %v2053
        %v2304 = vpack.c.b16 %v2056, %v2054
        %v2305 = vpack.c.b16 %v2059, %v2057
        %v2306 = vpack.c.b16 %v2060, %v2058
        %v2307 = vpack.c.b16 %v2063, %v2061
        %v2308 = vpack.c.b16 %v2064, %v2062
        %v2309 = vpack.c.b16 %v2067, %v2065
        %v2310 = vpack.c.b16 %v2068, %v2066
        %v2311 = vpack.c.b16 %v2071, %v2069
        %v2312 = vpack.c.b16 %v2072, %v2070
        %v2313 = vpack.c.b16 %v2075, %v2073
        %v2314 = vpack.c.b16 %v2076, %v2074
        %v2315 = vpack.c.b16 %v2079, %v2077
        %v2316 = vpack.c.b16 %v2080, %v2078
        %v2317 = vpack.c.b16 %v2083, %v2081
        %v2318 = vpack.c.b16 %v2084, %v2082
        %v2319 = vpack.c.b16 %v2087, %v2085
        %v2320 = vpack.c.b16 %v2088, %v2086
        %v2321 = vpack.c.b16 %v2091, %v2089
        %v2322 = vpack.c.b16 %v2092, %v2090
        %v2323 = vpack.c.b16 %v2095, %v2093
        %v2324 = vpack.c.b16 %v2096, %v2094
        %v2325 = vpack.c.b16 %v2099, %v2097
        %v2326 = vpack.c.b16 %v2100, %v2098
        %v2327 = vpack.c.b16 %v2103, %v2101
        %v2328 = vpack.c.b16 %v2104, %v2102
        %v2329 = vpack.c.b16 %v2107, %v2105
        %v2330 = vpack.c.b16 %v2108, %v2106
        %v2331 = vpack.c.b16 %v2111, %v2109
        %v2332 = vpack.c.b16 %v2112, %v2110
        %v2333 = vpack.c.b16 %v2115, %v2113
        %v2334 = vpack.c.b16 %v2116, %v2114
        %v2335 = vpack.c.b16 %v2119, %v2117
        %v2336 = vpack.c.b16 %v2120, %v2118
        %v2337 = vpack.c.b16 %v2123, %v2121
        %v2338 = vpack.c.b16 %v2124, %v2122
        %v2339 = vpack.c.b16 %v2127, %v2125
        %v2340 = vpack.c.b16 %v2128, %v2126
        %v2341 = vpack.c.b16 %v2131, %v2129
        %v2342 = vpack.c.b16 %v2132, %v2130
        %v2343 = vpack.c.b16 %v2135, %v2133
        %v2344 = vpack.c.b16 %v2136, %v2134
        %v2345 = vpack.c.b16 %v2139, %v2137
        %v2346 = vpack.c.b16 %v2140, %v2138
        %v2347 = vpack.c.b16 %v2143, %v2141
        %v2348 = vpack.c.b16 %v2144, %v2142
        %v2349 = vpack.c.b16 %v2147, %v2145
        %v2350 = vpack.c.b16 %v2148, %v2146
        %v2351 = vpack.c.b16 %v2151, %v2149
        %v2352 = vpack.c.b16 %v2152, %v2150
        %v2353 = vpack.c.b16 %v2155, %v2153
        %v2354 = vpack.c.b16 %v2156, %v2154
        %v2355 = vpack.c.b16 %v2159, %v2157
        %v2356 = vpack.c.b16 %v2160, %v2158
        %v2357 = vpack.c.b16 %v2163, %v2161
        %v2358 = vpack.c.b16 %v2164, %v2162
        %v2359 = vpack.c.b16 %v2167, %v2165
        %v2360 = vpack.c.b16 %v2168, %v2166
        %v2361 = vpack.c.b16 %v2171, %v2169
        %v2362 = vpack.c.b16 %v2172, %v2170
        %v2363 = vpack.c.b16 %v2175, %v2173
        %v2364 = vpack.c.b16 %v2176, %v2174
        %v2365 = vpack.c.b16 %v2179, %v2177
        %v2366 = vpack.c.b16 %v2180, %v2178
        %v2367 = vpack.c.b16 %v2183, %v2181
        %v2368 = vpack.c.b16 %v2184, %v2182
        %v2369 = vpack.c.b16 %v2187, %v2185
        %v2370 = vpack.c.b16 %v2188, %v2186
        %v2371 = vpack.c.b16 %v2191, %v2189
        %v2372 = vpack.c.b16 %v2192, %v2190
        %v2373 = vpack.c.b16 %v2195, %v2193
        %v2374 = vpack.c.b16 %v2196, %v2194
        %v2375 = vpack.c.b16 %v2199, %v2197
        %v2376 = vpack.c.b16 %v2200, %v2198
        %v2377 = vpack.c.b16 %v2203, %v2201
        %v2378 = vpack.c.b16 %v2204, %v2202
        %v2379 = vpack.c.b16 %v2207, %v2205
        %v2380 = vpack.c.b16 %v2208, %v2206
        %v2381 = vpack.c.b16 %v2211, %v2209
        %v2382 = vpack.c.b16 %v2212, %v2210
        %v2383 = vpack.c.b16 %v2215, %v2213
        %v2384 = vpack.c.b16 %v2216, %v2214
        %v2385 = vpack.c.b16 %v2219, %v2217
        %v2386 = vpack.c.b16 %v2220, %v2218
        %v2387 = vpack.c.b16 %v2223, %v2221
        %v2388 = vpack.c.b16 %v2224, %v2222
        %v2389 = vpack.c.b16 %v2227, %v2225
        %v2390 = vpack.c.b16 %v2228, %v2226
        %v2391 = vpack.c.b16 %v2231, %v2229
        %v2392 = vpack.c.b16 %v2232, %v2230
        %2553 = vmatprep.subr.bf16.mxu0 %v2234
        %2554 = vmatpush1.bf16.msra.mxu0 %v2233
        %2555 = vmatprep.subr.bf16.mxu0 %v2236
        %2556 = vmatpush1.bf16.msra.mxu0 %v2235
        %2557 = vmatprep.subr.bf16.mxu0 %v2238
        %2558 = vmatpush1.bf16.msra.mxu0 %v2237
        %2559 = vmatprep.subr.bf16.mxu0 %v2240
        %2560 = vmatpush1.bf16.msra.mxu0 %v2239
        %2561 = vmatprep.subr.bf16.mxu0 %v2242
        %2562 = vmatpush1.bf16.msra.mxu0 %v2241
        %2563 = vmatprep.subr.bf16.mxu0 %v2244
        %2564 = vmatpush1.bf16.msra.mxu0 %v2243
        %2565 = vmatprep.subr.bf16.mxu0 %v2246
        %2566 = vmatpush1.bf16.msra.mxu0 %v2245
        %2567 = vmatprep.subr.bf16.mxu0 %v2248
        %2568 = vmatpush1.bf16.msra.mxu0 %v2247
        %2569 = vmatprep.subr.bf16.mxu0 %v2250
        %2570 = vmatpush1.bf16.msra.mxu0 %v2249
        %2571 = vmatprep.subr.bf16.mxu0 %v2252
        %2572 = vmatpush1.bf16.msra.mxu0 %v2251
        %2573 = vmatprep.subr.bf16.mxu0 %v2254
        %2574 = vmatpush1.bf16.msra.mxu0 %v2253
        %2575 = vmatprep.subr.bf16.mxu0 %v2256
        %2576 = vmatpush1.bf16.msra.mxu0 %v2255
        %2577 = vmatprep.subr.bf16.mxu0 %v2258
        %2578 = vmatpush1.bf16.msra.mxu0 %v2257
        %2579 = vmatprep.subr.bf16.mxu0 %v2260
        %2580 = vmatpush1.bf16.msra.mxu0 %v2259
        %2581 = vmatprep.subr.bf16.mxu0 %v2262
        %2582 = vmatpush1.bf16.msra.mxu0 %v2261
        %2583 = vmatprep.subr.bf16.mxu0 %v2264
        %2584 = vmatpush1.bf16.msra.mxu0 %v2263
        %2585 = vmatprep.mubr.bf16.mxu0 %v1566
        %2586 = vmatmul.mubr.bf16.gmra.mrb[0].mxu0 %v1565
        %v2587 = vpop.f32.mrb[0].mxu0
        %v2588 = vadd.f32 0.0, %v2587
        %v2589 = vpop.f32.mrb[0].mxu0
        %v2590 = vadd.f32 0.0, %v2589
        %v2591 = vpop.f32.mrb[0].mxu0
        %v2592 = vadd.f32 0.0, %v2591
        %v2593 = vpop.f32.mrb[0].mxu0
        %v2594 = vadd.f32 0.0, %v2593
        %2595 = vmatprep.mubr.bf16.mxu0 %v1576
        %2596 = vmatmul.mubr.bf16.gmra.mrb[0].mxu0 %v1575
        %v2597 = vpop.f32.mrb[0].mxu0
        %v2598 = vadd.f32 0.0, %v2597
        %v2599 = vpop.f32.mrb[0].mxu0
        %v2600 = vadd.f32 0.0, %v2599
        %v2601 = vpop.f32.mrb[0].mxu0
        %v2602 = vadd.f32 0.0, %v2601
        %v2603 = vpop.f32.mrb[0].mxu0
        %v2604 = vadd.f32 0.0, %v2603
        %2605 = vdwg.mxu0
        %2606 = vmatprep.subr.bf16.mxu0 %v2266
        %2607 = vmatpush1.bf16.msra.mxu0 %v2265
        %2608 = vmatprep.subr.bf16.mxu0 %v2268
        %2609 = vmatpush1.bf16.msra.mxu0 %v2267
        %2610 = vmatprep.subr.bf16.mxu0 %v2270
        %2611 = vmatpush1.bf16.msra.mxu0 %v2269
        %2612 = vmatprep.subr.bf16.mxu0 %v2272
        %2613 = vmatpush1.bf16.msra.mxu0 %v2271
        %2614 = vmatprep.subr.bf16.mxu0 %v2274
        %2615 = vmatpush1.bf16.msra.mxu0 %v2273
        %2616 = vmatprep.subr.bf16.mxu0 %v2276
        %2617 = vmatpush1.bf16.msra.mxu0 %v2275
        %2618 = vmatprep.subr.bf16.mxu0 %v2278
        %2619 = vmatpush1.bf16.msra.mxu0 %v2277
        %2620 = vmatprep.subr.bf16.mxu0 %v2280
        %2621 = vmatpush1.bf16.msra.mxu0 %v2279
        %2622 = vmatprep.subr.bf16.mxu0 %v2282
        %2623 = vmatpush1.bf16.msra.mxu0 %v2281
        %2624 = vmatprep.subr.bf16.mxu0 %v2284
        %2625 = vmatpush1.bf16.msra.mxu0 %v2283
        %2626 = vmatprep.subr.bf16.mxu0 %v2286
        %2627 = vmatpush1.bf16.msra.mxu0 %v2285
        %2628 = vmatprep.subr.bf16.mxu0 %v2288
        %2629 = vmatpush1.bf16.msra.mxu0 %v2287
        %2630 = vmatprep.subr.bf16.mxu0 %v2290
        %2631 = vmatpush1.bf16.msra.mxu0 %v2289
        %2632 = vmatprep.subr.bf16.mxu0 %v2292
        %2633 = vmatpush1.bf16.msra.mxu0 %v2291
        %2634 = vmatprep.subr.bf16.mxu0 %v2294
        %2635 = vmatpush1.bf16.msra.mxu0 %v2293
        %2636 = vmatprep.subr.bf16.mxu0 %v2296
        %2637 = vmatpush1.bf16.msra.mxu0 %v2295
        %2638 = vmatprep.mubr.bf16.mxu0 %v1568
        %2639 = vmatmul.mubr.bf16.gmra.mrb[0].mxu0 %v1567
        %v2640 = vpop.f32.mrb[0].mxu0
        %v2641 = vadd.f32 %v2588, %v2640
        %v2642 = vpop.f32.mrb[0].mxu0
        %v2643 = vadd.f32 %v2590, %v2642
        %v2644 = vpop.f32.mrb[0].mxu0
        %v2645 = vadd.f32 %v2592, %v2644
        %v2646 = vpop.f32.mrb[0].mxu0
        %v2647 = vadd.f32 %v2594, %v2646
        %2648 = vmatprep.mubr.bf16.mxu0 %v1578
        %2649 = vmatmul.mubr.bf16.gmra.mrb[0].mxu0 %v1577
        %v2650 = vpop.f32.mrb[0].mxu0
        %v2651 = vadd.f32 %v2598, %v2650
        %v2652 = vpop.f32.mrb[0].mxu0
        %v2653 = vadd.f32 %v2600, %v2652
        %v2654 = vpop.f32.mrb[0].mxu0
        %v2655 = vadd.f32 %v2602, %v2654
        %v2656 = vpop.f32.mrb[0].mxu0
        %v2657 = vadd.f32 %v2604, %v2656
        %2658 = vdwg.mxu0
        %2659 = vmatprep.subr.bf16.mxu0 %v2298
        %2660 = vmatpush1.bf16.msra.mxu0 %v2297
        %2661 = vmatprep.subr.bf16.mxu0 %v2300
        %2662 = vmatpush1.bf16.msra.mxu0 %v2299
        %2663 = vmatprep.subr.bf16.mxu0 %v2302
        %2664 = vmatpush1.bf16.msra.mxu0 %v2301
        %2665 = vmatprep.subr.bf16.mxu0 %v2304
        %2666 = vmatpush1.bf16.msra.mxu0 %v2303
        %2667 = vmatprep.subr.bf16.mxu0 %v2306
        %2668 = vmatpush1.bf16.msra.mxu0 %v2305
        %2669 = vmatprep.subr.bf16.mxu0 %v2308
        %2670 = vmatpush1.bf16.msra.mxu0 %v2307
        %2671 = vmatprep.subr.bf16.mxu0 %v2310
        %2672 = vmatpush1.bf16.msra.mxu0 %v2309
        %2673 = vmatprep.subr.bf16.mxu0 %v2312
        %2674 = vmatpush1.bf16.msra.mxu0 %v2311
        %2675 = vmatprep.subr.bf16.mxu0 %v2314
        %2676 = vmatpush1.bf16.msra.mxu0 %v2313
        %2677 = vmatprep.subr.bf16.mxu0 %v2316
        %2678 = vmatpush1.bf16.msra.mxu0 %v2315
        %2679 = vmatprep.subr.bf16.mxu0 %v2318
        %2680 = vmatpush1.bf16.msra.mxu0 %v2317
        %2681 = vmatprep.subr.bf16.mxu0 %v2320
        %2682 = vmatpush1.bf16.msra.mxu0 %v2319
        %2683 = vmatprep.subr.bf16.mxu0 %v2322
        %2684 = vmatpush1.bf16.msra.mxu0 %v2321
        %2685 = vmatprep.subr.bf16.mxu0 %v2324
        %2686 = vmatpush1.bf16.msra.mxu0 %v2323
        %2687 = vmatprep.subr.bf16.mxu0 %v2326
        %2688 = vmatpush1.bf16.msra.mxu0 %v2325
        %2689 = vmatprep.subr.bf16.mxu0 %v2328
        %2690 = vmatpush1.bf16.msra.mxu0 %v2327
        %2691 = vmatprep.mubr.bf16.mxu0 %v1570
        %2692 = vmatmul.mubr.bf16.gmra.mrb[0].mxu0 %v1569
        %v2693 = vpop.f32.mrb[0].mxu0
        %v2694 = vadd.f32 %v2641, %v2693
        %v2695 = vpop.f32.mrb[0].mxu0
        %v2696 = vadd.f32 %v2643, %v2695
        %v2697 = vpop.f32.mrb[0].mxu0
        %v2698 = vadd.f32 %v2645, %v2697
        %v2699 = vpop.f32.mrb[0].mxu0
        %v2700 = vadd.f32 %v2647, %v2699
        %2701 = vmatprep.mubr.bf16.mxu0 %v1580
        %2702 = vmatmul.mubr.bf16.gmra.mrb[0].mxu0 %v1579
        %v2703 = vpop.f32.mrb[0].mxu0
        %v2704 = vadd.f32 %v2651, %v2703
        %v2705 = vpop.f32.mrb[0].mxu0
        %v2706 = vadd.f32 %v2653, %v2705
        %v2707 = vpop.f32.mrb[0].mxu0
        %v2708 = vadd.f32 %v2655, %v2707
        %v2709 = vpop.f32.mrb[0].mxu0
        %v2710 = vadd.f32 %v2657, %v2709
        %2711 = vdwg.mxu0
        %2712 = vmatprep.subr.bf16.mxu0 %v2330
        %2713 = vmatpush1.bf16.msra.mxu0 %v2329
        %2714 = vmatprep.subr.bf16.mxu0 %v2332
        %2715 = vmatpush1.bf16.msra.mxu0 %v2331
        %2716 = vmatprep.subr.bf16.mxu0 %v2334
        %2717 = vmatpush1.bf16.msra.mxu0 %v2333
        %2718 = vmatprep.subr.bf16.mxu0 %v2336
        %2719 = vmatpush1.bf16.msra.mxu0 %v2335
        %2720 = vmatprep.subr.bf16.mxu0 %v2338
        %2721 = vmatpush1.bf16.msra.mxu0 %v2337
        %2722 = vmatprep.subr.bf16.mxu0 %v2340
        %2723 = vmatpush1.bf16.msra.mxu0 %v2339
        %2724 = vmatprep.subr.bf16.mxu0 %v2342
        %2725 = vmatpush1.bf16.msra.mxu0 %v2341
        %2726 = vmatprep.subr.bf16.mxu0 %v2344
        %2727 = vmatpush1.bf16.msra.mxu0 %v2343
        %2728 = vmatprep.subr.bf16.mxu0 %v2346
        %2729 = vmatpush1.bf16.msra.mxu0 %v2345
        %2730 = vmatprep.subr.bf16.mxu0 %v2348
        %2731 = vmatpush1.bf16.msra.mxu0 %v2347
        %2732 = vmatprep.subr.bf16.mxu0 %v2350
        %2733 = vmatpush1.bf16.msra.mxu0 %v2349
        %2734 = vmatprep.subr.bf16.mxu0 %v2352
        %2735 = vmatpush1.bf16.msra.mxu0 %v2351
        %2736 = vmatprep.subr.bf16.mxu0 %v2354
        %2737 = vmatpush1.bf16.msra.mxu0 %v2353
        %2738 = vmatprep.subr.bf16.mxu0 %v2356
        %2739 = vmatpush1.bf16.msra.mxu0 %v2355
        %2740 = vmatprep.subr.bf16.mxu0 %v2358
        %2741 = vmatpush1.bf16.msra.mxu0 %v2357
        %2742 = vmatprep.subr.bf16.mxu0 %v2360
        %2743 = vmatpush1.bf16.msra.mxu0 %v2359
        %2744 = vmatprep.mubr.bf16.mxu0 %v1572
        %2745 = vmatmul.mubr.bf16.gmra.mrb[0].mxu0 %v1571
        %v2746 = vpop.f32.mrb[0].mxu0
        %v2747 = vadd.f32 %v2694, %v2746
        %v2748 = vpop.f32.mrb[0].mxu0
        %v2749 = vadd.f32 %v2696, %v2748
        %v2750 = vpop.f32.mrb[0].mxu0
        %v2751 = vadd.f32 %v2698, %v2750
        %v2752 = vpop.f32.mrb[0].mxu0
        %v2753 = vadd.f32 %v2700, %v2752
        %2754 = vmatprep.mubr.bf16.mxu0 %v1582
        %2755 = vmatmul.mubr.bf16.gmra.mrb[0].mxu0 %v1581
        %v2756 = vpop.f32.mrb[0].mxu0
        %v2757 = vadd.f32 %v2704, %v2756
        %v2758 = vpop.f32.mrb[0].mxu0
        %v2759 = vadd.f32 %v2706, %v2758
        %v2760 = vpop.f32.mrb[0].mxu0
        %v2761 = vadd.f32 %v2708, %v2760
        %v2762 = vpop.f32.mrb[0].mxu0
        %v2763 = vadd.f32 %v2710, %v2762
        %2764 = vdwg.mxu0
        %2765 = vmatprep.subr.bf16.mxu0 %v2362
        %2766 = vmatpush1.bf16.msra.mxu0 %v2361
        %2767 = vmatprep.subr.bf16.mxu0 %v2364
        %2768 = vmatpush1.bf16.msra.mxu0 %v2363
        %2769 = vmatprep.subr.bf16.mxu0 %v2366
        %2770 = vmatpush1.bf16.msra.mxu0 %v2365
        %2771 = vmatprep.subr.bf16.mxu0 %v2368
        %2772 = vmatpush1.bf16.msra.mxu0 %v2367
        %2773 = vmatprep.subr.bf16.mxu0 %v2370
        %2774 = vmatpush1.bf16.msra.mxu0 %v2369
        %2775 = vmatprep.subr.bf16.mxu0 %v2372
        %2776 = vmatpush1.bf16.msra.mxu0 %v2371
        %2777 = vmatprep.subr.bf16.mxu0 %v2374
        %2778 = vmatpush1.bf16.msra.mxu0 %v2373
        %2779 = vmatprep.subr.bf16.mxu0 %v2376
        %2780 = vmatpush1.bf16.msra.mxu0 %v2375
        %2781 = vmatprep.subr.bf16.mxu0 %v2378
        %2782 = vmatpush1.bf16.msra.mxu0 %v2377
        %2783 = vmatprep.subr.bf16.mxu0 %v2380
        %2784 = vmatpush1.bf16.msra.mxu0 %v2379
        %2785 = vmatprep.subr.bf16.mxu0 %v2382
        %2786 = vmatpush1.bf16.msra.mxu0 %v2381
        %2787 = vmatprep.subr.bf16.mxu0 %v2384
        %2788 = vmatpush1.bf16.msra.mxu0 %v2383
        %2789 = vmatprep.subr.bf16.mxu0 %v2386
        %2790 = vmatpush1.bf16.msra.mxu0 %v2385
        %2791 = vmatprep.subr.bf16.mxu0 %v2388
        %2792 = vmatpush1.bf16.msra.mxu0 %v2387
        %2793 = vmatprep.subr.bf16.mxu0 %v2390
        %2794 = vmatpush1.bf16.msra.mxu0 %v2389
        %2795 = vmatprep.subr.bf16.mxu0 %v2392
        %2796 = vmatpush1.bf16.msra.mxu0 %v2391
        %2797 = vmatprep.mubr.bf16.mxu0 %v1574
        %2798 = vmatmul.mubr.bf16.gmra.mrb[0].mxu0 %v1573
        %v2799 = vpop.f32.mrb[0].mxu0
        %v2800 = vadd.f32 %v2747, %v2799
        %v2801 = vpop.f32.mrb[0].mxu0
        %v2802 = vadd.f32 %v2749, %v2801
        %v2803 = vpop.f32.mrb[0].mxu0
        %v2804 = vadd.f32 %v2751, %v2803
        %v2805 = vpop.f32.mrb[0].mxu0
        %v2806 = vadd.f32 %v2753, %v2805
        %2807 = vmatprep.mubr.bf16.mxu0 %v1584
        %2808 = vmatmul.mubr.bf16.gmra.mrb[0].mxu0 %v1583
        %v2809 = vpop.f32.mrb[0].mxu0
        %v2810 = vadd.f32 %v2757, %v2809
        %v2811 = vpop.f32.mrb[0].mxu0
        %v2812 = vadd.f32 %v2759, %v2811
        %v2813 = vpop.f32.mrb[0].mxu0
        %v2814 = vadd.f32 %v2761, %v2813
        %v2815 = vpop.f32.mrb[0].mxu0
        %v2816 = vadd.f32 %v2763, %v2815
        %2817 = vdwg.mxu0
        %v2818 = vadd.f32 %v1585, %v2800
        %v2819 = vadd.f32 %v1586, %v2802
        %v2820 = vadd.f32 %v1587, %v2804
        %v2821 = vadd.f32 %v1588, %v2806
        %v2822 = vadd.f32 %v1589, %v2810
        %v2823 = vadd.f32 %v1590, %v2812
        %v2824 = vadd.f32 %v1591, %v2814
        %v2825 = vadd.f32 %v1592, %v2816
        %2826 = vst [vmem:[#allocation4] sm:$0xff] %v2818
        %2827 = vst [vmem:[#allocation4 + $0x8] sm:$0xff] %v2819
        %2828 = vst [vmem:[#allocation4 + $0x10] sm:$0xff] %v2820
        %2829 = vst [vmem:[#allocation4 + $0x18] sm:$0xff] %v2821
        %2830 = vst [vmem:[#allocation4 + $0x20] sm:$0xff] %v2822
        %2831 = vst [vmem:[#allocation4 + $0x28] sm:$0xff] %v2823
        %2832 = vst [vmem:[#allocation4 + $0x30] sm:$0xff] %v2824
        %2833 = vst [vmem:[#allocation4 + $0x38] sm:$0xff] %v2825
        %p2834 = scmp.eq.s32.totalorder %s30, 2
        // Predicated region
        $region101: #{efficient_waterfall_forward.1} parent=59 // pred_check
          %p2835 = pneg %p2834
        $region102: #{efficient_waterfall_forward.1} parent=59 // pred_check_branch
          %2837 = sbr.rel (%p2835) target = $region104
        $region103: #{efficient_waterfall_forward.1} parent=59 // pred_region
          %v2838 = vld [vmem:[#allocation4] sm:$0xff]
          %v2839 = vld [vmem:[#allocation4 + $0x8] sm:$0xff]
          %v2840 = vld [vmem:[#allocation4 + $0x10] sm:$0xff]
          %v2841 = vld [vmem:[#allocation4 + $0x18] sm:$0xff]
          %v2842 = vld [vmem:[#allocation4 + $0x20] sm:$0xff]
          %v2843 = vld [vmem:[#allocation4 + $0x28] sm:$0xff]
          %v2844 = vld [vmem:[#allocation4 + $0x30] sm:$0xff]
          %v2845 = vld [vmem:[#allocation4 + $0x38] sm:$0xff]
          %v2846 = vld [vmem:[#allocation12] sm:$0x3]
          %v2848 = vlaneseq
          %v2849 = vshrl.u32 %v2848, 7
          %v2850 = vsub.s32 0, %v2849
          %v2851 = vrot.slane %v2846, %v2850
          %v2852 = vlaneseq
          %v2853 = vshrl.u32 %v2852, 7
          %v2854 = vsub.s32 1, %v2853
          %v2855 = vrot.slane %v2846, %v2854
          %v2858 = vadd.f32 %v2838, %v2851
          %v2859 = vadd.f32 %v2839, %v2855
          %v2860 = vadd.f32 %v2840, %v2851
          %v2861 = vadd.f32 %v2841, %v2855
          %v2862 = vadd.f32 %v2842, %v2851
          %v2863 = vadd.f32 %v2843, %v2855
          %v2864 = vadd.f32 %v2844, %v2851
          %v2865 = vadd.f32 %v2845, %v2855
          %v2866 = vmax.f32 %v2858, 0.0
          %v2867 = vmax.f32 %v2859, 0.0
          %v2868 = vmax.f32 %v2860, 0.0
          %v2869 = vmax.f32 %v2861, 0.0
          %v2870 = vmax.f32 %v2862, 0.0
          %v2871 = vmax.f32 %v2863, 0.0
          %v2872 = vmax.f32 %v2864, 0.0
          %v2873 = vmax.f32 %v2865, 0.0
          %v2874 = vpack.c.bf16 %v2868, %v2866
          %v2875 = vpack.c.bf16 %v2869, %v2867
          %v2876 = vpack.c.bf16 %v2872, %v2870
          %v2877 = vpack.c.bf16 %v2873, %v2871
          %v2878 = vld [vmem:[#allocation13] sm:$0xff]
          %v2879 = vld [vmem:[#allocation13 + $0x8] sm:$0xf]
          %v2880 = vld [vmem:[#allocation13 + $0xc] sm:$0xff]
          %v2881 = vld [vmem:[#allocation13 + $0x14] sm:$0xf]
          %v2882 = vld [vmem:[#allocation13 + $0x18] sm:$0xff]
          %v2883 = vld [vmem:[#allocation13 + $0x20] sm:$0xf]
          %v2884 = vld [vmem:[#allocation13 + $0x24] sm:$0xff]
          %v2885 = vld [vmem:[#allocation13 + $0x2c] sm:$0xf]
          %v2886 = vld [vmem:[#allocation13 + $0x30] sm:$0xff]
          %v2887 = vld [vmem:[#allocation13 + $0x38] sm:$0xf]
          %v2888 = vld [vmem:[#allocation13 + $0x3c] sm:$0xff]
          %v2889 = vld [vmem:[#allocation13 + $0x44] sm:$0xf]
          %v2890 = vld [vmem:[#allocation13 + $0x48] sm:$0xff]
          %v2891 = vld [vmem:[#allocation13 + $0x50] sm:$0xf]
          %v2892 = vld [vmem:[#allocation13 + $0x54] sm:$0xff]
          %v2893 = vld [vmem:[#allocation13 + $0x5c] sm:$0xf]
          %v2894 = vld [vmem:[#allocation13 + $0x60] sm:$0xff]
          %v2895 = vld [vmem:[#allocation13 + $0x68] sm:$0xf]
          %v2896 = vld [vmem:[#allocation13 + $0x6c] sm:$0xff]
          %v2897 = vld [vmem:[#allocation13 + $0x74] sm:$0xf]
          %v2898 = vld [vmem:[#allocation13 + $0x78] sm:$0xff]
          %v2899 = vld [vmem:[#allocation13 + $0x80] sm:$0xf]
          %v2900 = vld [vmem:[#allocation13 + $0x84] sm:$0xff]
          %v2901 = vld [vmem:[#allocation13 + $0x8c] sm:$0xf]
          %v2902 = vld [vmem:[#allocation13 + $0x90] sm:$0xff]
          %v2903 = vld [vmem:[#allocation13 + $0x98] sm:$0xf]
          %v2904 = vld [vmem:[#allocation13 + $0x9c] sm:$0xff]
          %v2905 = vld [vmem:[#allocation13 + $0xa4] sm:$0xf]
          %v2906 = vld [vmem:[#allocation13 + $0xa8] sm:$0xff]
          %v2907 = vld [vmem:[#allocation13 + $0xb0] sm:$0xf]
          %v2908 = vld [vmem:[#allocation13 + $0xb4] sm:$0xff]
          %v2909 = vld [vmem:[#allocation13 + $0xbc] sm:$0xf]
          %v2910 = vld [vmem:[#allocation13 + $0xc0] sm:$0xff]
          %v2911 = vld [vmem:[#allocation13 + $0xc8] sm:$0xf]
          %v2912 = vld [vmem:[#allocation13 + $0xcc] sm:$0xff]
          %v2913 = vld [vmem:[#allocation13 + $0xd4] sm:$0xf]
          %v2914 = vld [vmem:[#allocation13 + $0xd8] sm:$0xff]
          %v2915 = vld [vmem:[#allocation13 + $0xe0] sm:$0xf]
          %v2916 = vld [vmem:[#allocation13 + $0xe4] sm:$0xff]
          %v2917 = vld [vmem:[#allocation13 + $0xec] sm:$0xf]
          %v2918 = vld [vmem:[#allocation13 + $0xf0] sm:$0xff]
          %v2919 = vld [vmem:[#allocation13 + $0xf8] sm:$0xf]
          %v2920 = vld [vmem:[#allocation13 + $0xfc] sm:$0xff]
          %v2921 = vld [vmem:[#allocation13 + $0x104] sm:$0xf]
          %v2922 = vld [vmem:[#allocation13 + $0x108] sm:$0xff]
          %v2923 = vld [vmem:[#allocation13 + $0x110] sm:$0xf]
          %v2924 = vld [vmem:[#allocation13 + $0x114] sm:$0xff]
          %v2925 = vld [vmem:[#allocation13 + $0x11c] sm:$0xf]
          %v2926 = vld [vmem:[#allocation13 + $0x120] sm:$0xff]
          %v2927 = vld [vmem:[#allocation13 + $0x128] sm:$0xf]
          %v2928 = vld [vmem:[#allocation13 + $0x12c] sm:$0xff]
          %v2929 = vld [vmem:[#allocation13 + $0x134] sm:$0xf]
          %v2930 = vld [vmem:[#allocation13 + $0x138] sm:$0xff]
          %v2931 = vld [vmem:[#allocation13 + $0x140] sm:$0xf]
          %v2932 = vld [vmem:[#allocation13 + $0x144] sm:$0xff]
          %v2933 = vld [vmem:[#allocation13 + $0x14c] sm:$0xf]
          %v2934 = vld [vmem:[#allocation13 + $0x150] sm:$0xff]
          %v2935 = vld [vmem:[#allocation13 + $0x158] sm:$0xf]
          %v2936 = vld [vmem:[#allocation13 + $0x15c] sm:$0xff]
          %v2937 = vld [vmem:[#allocation13 + $0x164] sm:$0xf]
          %v2938 = vld [vmem:[#allocation13 + $0x168] sm:$0xff]
          %v2939 = vld [vmem:[#allocation13 + $0x170] sm:$0xf]
          %v2940 = vld [vmem:[#allocation13 + $0x174] sm:$0xff]
          %v2941 = vld [vmem:[#allocation13 + $0x17c] sm:$0xf]
          %v2942 = vld [vmem:[#allocation3] sm:$0xff]
          %v2943 = vld [vmem:[#allocation3 + $0x8] sm:$0xff]
          %v2944 = vld [vmem:[#allocation15] sm:$0xff]
          %v2945 = vld [vmem:[#allocation15 + $0x8] sm:$0xf]
          %v2946 = vld [vmem:[#allocation15 + $0xc] sm:$0xff]
          %v2947 = vld [vmem:[#allocation15 + $0x14] sm:$0xf]
          %v2948 = vld [vmem:[#allocation15 + $0x18] sm:$0xff]
          %v2949 = vld [vmem:[#allocation15 + $0x20] sm:$0xf]
          %v2950 = vld [vmem:[#allocation15 + $0x24] sm:$0xff]
          %v2951 = vld [vmem:[#allocation15 + $0x2c] sm:$0xf]
          %v2960 = vunpack.c.l.b16 %v2944
          %v2961 = vunpack.c.h.b16 %v2944
          %v2962 = vunpack.c.l.b16 %v2945
          %v2963 = vunpack.c.l.b16 %v2946
          %v2964 = vunpack.c.h.b16 %v2946
          %v2965 = vunpack.c.l.b16 %v2947
          %v2966 = vunpack.c.l.b16 %v2948
          %v2967 = vunpack.c.h.b16 %v2948
          %v2968 = vunpack.c.l.b16 %v2949
          %v2969 = vunpack.c.l.b16 %v2950
          %v2970 = vunpack.c.h.b16 %v2950
          %v2971 = vunpack.c.l.b16 %v2951
          %v2972 = vpack.c.b16 %v2963, %v2960
          %v2973 = vpack.c.b16 %v2964, %v2961
          %v2974 = vpack.c.b16 %v2965, %v2962
          %v2975 = vpack.c.b16 %v2969, %v2966
          %v2976 = vpack.c.b16 %v2970, %v2967
          %v2977 = vpack.c.b16 %v2971, %v2968
          %vm2984 = vcmask 261120
          %v2986 = vsel %vm2984, %v2942, 0
          %v2989 = vsel %vm2984, %v2943, 0
          %2991 = vmatprep.subr.bf16.mxu0 %v2973
          %2992 = vmatpush1.bf16.msra.mxu0 %v2972
          %2993 = vmatprep.subr.bf16.mxu0 %v2976
          %2994 = vmatpush1.bf16.msra.mxu0 %v2975
          %2995 = vmatprep.subr.bf16.mxu0 0
          %2996 = vmatpush1.bf16.msra.mxu0 0
          %2997 = vmatprep.subr.bf16.mxu0 0
          %2998 = vmatpush1.bf16.msra.mxu0 0
          %2999 = vmatprep.subr.bf16.mxu0 0
          %3000 = vmatpush1.bf16.msra.mxu0 0
          %3001 = vmatprep.subr.bf16.mxu0 0
          %3002 = vmatpush1.bf16.msra.mxu0 0
          %3003 = vmatprep.subr.bf16.mxu0 0
          %3004 = vmatpush1.bf16.msra.mxu0 0
          %3005 = vmatprep.subr.bf16.mxu0 0
          %3006 = vmatpush1.bf16.msra.mxu0 0
          %3007 = vmatprep.subr.bf16.mxu0 0
          %3008 = vmatpush1.bf16.msra.mxu0 0
          %3009 = vmatprep.subr.bf16.mxu0 0
          %3010 = vmatpush1.bf16.msra.mxu0 0
          %3011 = vmatprep.subr.bf16.mxu0 0
          %3012 = vmatpush1.bf16.msra.mxu0 0
          %3013 = vmatprep.subr.bf16.mxu0 0
          %3014 = vmatpush1.bf16.msra.mxu0 0
          %3015 = vmatprep.subr.bf16.mxu0 0
          %3016 = vmatpush1.bf16.msra.mxu0 0
          %3017 = vmatprep.subr.bf16.mxu0 0
          %3018 = vmatpush1.bf16.msra.mxu0 0
          %3019 = vmatprep.subr.bf16.mxu0 0
          %3020 = vmatpush1.bf16.msra.mxu0 0
          %3021 = vmatprep.subr.bf16.mxu0 0
          %3022 = vmatpush1.bf16.msra.mxu0 0
          %3023 = vmatprep.mubr.bf16.mxu0 0
          %3024 = vmatmul.mubr.bf16.gmra.mrb[0].mxu0 %v2986
          %v3025 = vpop.f32.mrb[0].mxu0
          %v3026 = vadd.f32 0.0, %v3025
          %v3027 = vpop.f32.mrb[0].mxu0
          %v3028 = vadd.f32 0.0, %v3027
          %v3029 = vpop.f32.mrb[0].mxu0
          %v3030 = vadd.f32 0.0, %v3029
          %v3031 = vpop.f32.mrb[0].mxu0
          %v3032 = vadd.f32 0.0, %v3031
          %3033 = vmatprep.mubr.bf16.mxu0 0
          %3034 = vmatmul.mubr.bf16.gmra.mrb[0].mxu0 %v2989
          %v3035 = vpop.f32.mrb[0].mxu0
          %v3036 = vadd.f32 0.0, %v3035
          %v3037 = vpop.f32.mrb[0].mxu0
          %v3038 = vadd.f32 0.0, %v3037
          %v3039 = vpop.f32.mrb[0].mxu0
          %v3040 = vadd.f32 0.0, %v3039
          %v3041 = vpop.f32.mrb[0].mxu0
          %v3042 = vadd.f32 0.0, %v3041
          %3043 = vdwg.mxu0
          %3044 = vmatprep.subr.bf16.mxu0 0
          %3045 = vmatpush1.bf16.msra.mxu0 %v2974
          %3046 = vmatprep.subr.bf16.mxu0 0
          %3047 = vmatpush1.bf16.msra.mxu0 %v2977
          %3048 = vmatprep.subr.bf16.mxu0 0
          %3049 = vmatpush1.bf16.msra.mxu0 0
          %3050 = vmatprep.subr.bf16.mxu0 0
          %3051 = vmatpush1.bf16.msra.mxu0 0
          %3052 = vmatprep.subr.bf16.mxu0 0
          %3053 = vmatpush1.bf16.msra.mxu0 0
          %3054 = vmatprep.subr.bf16.mxu0 0
          %3055 = vmatpush1.bf16.msra.mxu0 0
          %3056 = vmatprep.subr.bf16.mxu0 0
          %3057 = vmatpush1.bf16.msra.mxu0 0
          %3058 = vmatprep.subr.bf16.mxu0 0
          %3059 = vmatpush1.bf16.msra.mxu0 0
          %3060 = vmatprep.subr.bf16.mxu0 0
          %3061 = vmatpush1.bf16.msra.mxu0 0
          %3062 = vmatprep.subr.bf16.mxu0 0
          %3063 = vmatpush1.bf16.msra.mxu0 0
          %3064 = vmatprep.subr.bf16.mxu0 0
          %3065 = vmatpush1.bf16.msra.mxu0 0
          %3066 = vmatprep.subr.bf16.mxu0 0
          %3067 = vmatpush1.bf16.msra.mxu0 0
          %3068 = vmatprep.subr.bf16.mxu0 0
          %3069 = vmatpush1.bf16.msra.mxu0 0
          %3070 = vmatprep.subr.bf16.mxu0 0
          %3071 = vmatpush1.bf16.msra.mxu0 0
          %3072 = vmatprep.subr.bf16.mxu0 0
          %3073 = vmatpush1.bf16.msra.mxu0 0
          %3074 = vmatprep.subr.bf16.mxu0 0
          %3075 = vmatpush1.bf16.msra.mxu0 0
          %3076 = vmatprep.mubr.bf16.mxu0 0
          %3077 = vmatmul.mubr.bf16.gmra.mrb[0].mxu0 %v2986
          %v3078 = vpop.f32.mrb[0].mxu0
          %v3079 = vadd.f32 0.0, %v3078
          %v3080 = vpop.f32.mrb[0].mxu0
          %v3081 = vpop.f32.mrb[0].mxu0
          %v3082 = vadd.f32 0.0, %v3081
          %v3083 = vpop.f32.mrb[0].mxu0
          %3084 = vmatprep.mubr.bf16.mxu0 0
          %3085 = vmatmul.mubr.bf16.gmra.mrb[0].mxu0 %v2989
          %v3086 = vpop.f32.mrb[0].mxu0
          %v3087 = vadd.f32 0.0, %v3086
          %v3088 = vpop.f32.mrb[0].mxu0
          %v3089 = vpop.f32.mrb[0].mxu0
          %v3090 = vadd.f32 0.0, %v3089
          %v3091 = vpop.f32.mrb[0].mxu0
          %3092 = vdwg.mxu0
          %v3157 = vunpack.c.l.b16 %v2878
          %v3158 = vunpack.c.h.b16 %v2878
          %v3159 = vunpack.c.l.b16 %v2879
          %v3160 = vunpack.c.l.b16 %v2880
          %v3161 = vunpack.c.h.b16 %v2880
          %v3162 = vunpack.c.l.b16 %v2881
          %v3163 = vunpack.c.l.b16 %v2882
          %v3164 = vunpack.c.h.b16 %v2882
          %v3165 = vunpack.c.l.b16 %v2883
          %v3166 = vunpack.c.l.b16 %v2884
          %v3167 = vunpack.c.h.b16 %v2884
          %v3168 = vunpack.c.l.b16 %v2885
          %v3169 = vunpack.c.l.b16 %v2886
          %v3170 = vunpack.c.h.b16 %v2886
          %v3171 = vunpack.c.l.b16 %v2887
          %v3172 = vunpack.c.l.b16 %v2888
          %v3173 = vunpack.c.h.b16 %v2888
          %v3174 = vunpack.c.l.b16 %v2889
          %v3175 = vunpack.c.l.b16 %v2890
          %v3176 = vunpack.c.h.b16 %v2890
          %v3177 = vunpack.c.l.b16 %v2891
          %v3178 = vunpack.c.l.b16 %v2892
          %v3179 = vunpack.c.h.b16 %v2892
          %v3180 = vunpack.c.l.b16 %v2893
          %v3181 = vunpack.c.l.b16 %v2894
          %v3182 = vunpack.c.h.b16 %v2894
          %v3183 = vunpack.c.l.b16 %v2895
          %v3184 = vunpack.c.l.b16 %v2896
          %v3185 = vunpack.c.h.b16 %v2896
          %v3186 = vunpack.c.l.b16 %v2897
          %v3187 = vunpack.c.l.b16 %v2898
          %v3188 = vunpack.c.h.b16 %v2898
          %v3189 = vunpack.c.l.b16 %v2899
          %v3190 = vunpack.c.l.b16 %v2900
          %v3191 = vunpack.c.h.b16 %v2900
          %v3192 = vunpack.c.l.b16 %v2901
          %v3193 = vunpack.c.l.b16 %v2902
          %v3194 = vunpack.c.h.b16 %v2902
          %v3195 = vunpack.c.l.b16 %v2903
          %v3196 = vunpack.c.l.b16 %v2904
          %v3197 = vunpack.c.h.b16 %v2904
          %v3198 = vunpack.c.l.b16 %v2905
          %v3199 = vunpack.c.l.b16 %v2906
          %v3200 = vunpack.c.h.b16 %v2906
          %v3201 = vunpack.c.l.b16 %v2907
          %v3202 = vunpack.c.l.b16 %v2908
          %v3203 = vunpack.c.h.b16 %v2908
          %v3204 = vunpack.c.l.b16 %v2909
          %v3205 = vunpack.c.l.b16 %v2910
          %v3206 = vunpack.c.h.b16 %v2910
          %v3207 = vunpack.c.l.b16 %v2911
          %v3208 = vunpack.c.l.b16 %v2912
          %v3209 = vunpack.c.h.b16 %v2912
          %v3210 = vunpack.c.l.b16 %v2913
          %v3211 = vunpack.c.l.b16 %v2914
          %v3212 = vunpack.c.h.b16 %v2914
          %v3213 = vunpack.c.l.b16 %v2915
          %v3214 = vunpack.c.l.b16 %v2916
          %v3215 = vunpack.c.h.b16 %v2916
          %v3216 = vunpack.c.l.b16 %v2917
          %v3217 = vunpack.c.l.b16 %v2918
          %v3218 = vunpack.c.h.b16 %v2918
          %v3219 = vunpack.c.l.b16 %v2919
          %v3220 = vunpack.c.l.b16 %v2920
          %v3221 = vunpack.c.h.b16 %v2920
          %v3222 = vunpack.c.l.b16 %v2921
          %v3223 = vunpack.c.l.b16 %v2922
          %v3224 = vunpack.c.h.b16 %v2922
          %v3225 = vunpack.c.l.b16 %v2923
          %v3226 = vunpack.c.l.b16 %v2924
          %v3227 = vunpack.c.h.b16 %v2924
          %v3228 = vunpack.c.l.b16 %v2925
          %v3229 = vunpack.c.l.b16 %v2926
          %v3230 = vunpack.c.h.b16 %v2926
          %v3231 = vunpack.c.l.b16 %v2927
          %v3232 = vunpack.c.l.b16 %v2928
          %v3233 = vunpack.c.h.b16 %v2928
          %v3234 = vunpack.c.l.b16 %v2929
          %v3235 = vunpack.c.l.b16 %v2930
          %v3236 = vunpack.c.h.b16 %v2930
          %v3237 = vunpack.c.l.b16 %v2931
          %v3238 = vunpack.c.l.b16 %v2932
          %v3239 = vunpack.c.h.b16 %v2932
          %v3240 = vunpack.c.l.b16 %v2933
          %v3241 = vunpack.c.l.b16 %v2934
          %v3242 = vunpack.c.h.b16 %v2934
          %v3243 = vunpack.c.l.b16 %v2935
          %v3244 = vunpack.c.l.b16 %v2936
          %v3245 = vunpack.c.h.b16 %v2936
          %v3246 = vunpack.c.l.b16 %v2937
          %v3247 = vunpack.c.l.b16 %v2938
          %v3248 = vunpack.c.h.b16 %v2938
          %v3249 = vunpack.c.l.b16 %v2939
          %v3250 = vunpack.c.l.b16 %v2940
          %v3251 = vunpack.c.h.b16 %v2940
          %v3252 = vunpack.c.l.b16 %v2941
          %v3253 = vpack.c.b16 %v3160, %v3157
          %v3254 = vpack.c.b16 %v3161, %v3158
          %v3255 = vpack.c.b16 %v3162, %v3159
          %v3256 = vpack.c.b16 %v3166, %v3163
          %v3257 = vpack.c.b16 %v3167, %v3164
          %v3258 = vpack.c.b16 %v3168, %v3165
          %v3259 = vpack.c.b16 %v3172, %v3169
          %v3260 = vpack.c.b16 %v3173, %v3170
          %v3261 = vpack.c.b16 %v3174, %v3171
          %v3262 = vpack.c.b16 %v3178, %v3175
          %v3263 = vpack.c.b16 %v3179, %v3176
          %v3264 = vpack.c.b16 %v3180, %v3177
          %v3265 = vpack.c.b16 %v3184, %v3181
          %v3266 = vpack.c.b16 %v3185, %v3182
          %v3267 = vpack.c.b16 %v3186, %v3183
          %v3268 = vpack.c.b16 %v3190, %v3187
          %v3269 = vpack.c.b16 %v3191, %v3188
          %v3270 = vpack.c.b16 %v3192, %v3189
          %v3271 = vpack.c.b16 %v3196, %v3193
          %v3272 = vpack.c.b16 %v3197, %v3194
          %v3273 = vpack.c.b16 %v3198, %v3195
          %v3274 = vpack.c.b16 %v3202, %v3199
          %v3275 = vpack.c.b16 %v3203, %v3200
          %v3276 = vpack.c.b16 %v3204, %v3201
          %v3277 = vpack.c.b16 %v3208, %v3205
          %v3278 = vpack.c.b16 %v3209, %v3206
          %v3279 = vpack.c.b16 %v3210, %v3207
          %v3280 = vpack.c.b16 %v3214, %v3211
          %v3281 = vpack.c.b16 %v3215, %v3212
          %v3282 = vpack.c.b16 %v3216, %v3213
          %v3283 = vpack.c.b16 %v3220, %v3217
          %v3284 = vpack.c.b16 %v3221, %v3218
          %v3285 = vpack.c.b16 %v3222, %v3219
          %v3286 = vpack.c.b16 %v3226, %v3223
          %v3287 = vpack.c.b16 %v3227, %v3224
          %v3288 = vpack.c.b16 %v3228, %v3225
          %v3289 = vpack.c.b16 %v3232, %v3229
          %v3290 = vpack.c.b16 %v3233, %v3230
          %v3291 = vpack.c.b16 %v3234, %v3231
          %v3292 = vpack.c.b16 %v3238, %v3235
          %v3293 = vpack.c.b16 %v3239, %v3236
          %v3294 = vpack.c.b16 %v3240, %v3237
          %v3295 = vpack.c.b16 %v3244, %v3241
          %v3296 = vpack.c.b16 %v3245, %v3242
          %v3297 = vpack.c.b16 %v3246, %v3243
          %v3298 = vpack.c.b16 %v3250, %v3247
          %v3299 = vpack.c.b16 %v3251, %v3248
          %v3300 = vpack.c.b16 %v3252, %v3249
          %3349 = vmatprep.subr.bf16.mxu0 %v3254
          %3350 = vmatpush1.bf16.msra.mxu0 %v3253
          %3351 = vmatprep.subr.bf16.mxu0 %v3257
          %3352 = vmatpush1.bf16.msra.mxu0 %v3256
          %3353 = vmatprep.subr.bf16.mxu0 %v3260
          %3354 = vmatpush1.bf16.msra.mxu0 %v3259
          %3355 = vmatprep.subr.bf16.mxu0 %v3263
          %3356 = vmatpush1.bf16.msra.mxu0 %v3262
          %3357 = vmatprep.subr.bf16.mxu0 %v3266
          %3358 = vmatpush1.bf16.msra.mxu0 %v3265
          %3359 = vmatprep.subr.bf16.mxu0 %v3269
          %3360 = vmatpush1.bf16.msra.mxu0 %v3268
          %3361 = vmatprep.subr.bf16.mxu0 %v3272
          %3362 = vmatpush1.bf16.msra.mxu0 %v3271
          %3363 = vmatprep.subr.bf16.mxu0 %v3275
          %3364 = vmatpush1.bf16.msra.mxu0 %v3274
          %3365 = vmatprep.subr.bf16.mxu0 %v3278
          %3366 = vmatpush1.bf16.msra.mxu0 %v3277
          %3367 = vmatprep.subr.bf16.mxu0 %v3281
          %3368 = vmatpush1.bf16.msra.mxu0 %v3280
          %3369 = vmatprep.subr.bf16.mxu0 %v3284
          %3370 = vmatpush1.bf16.msra.mxu0 %v3283
          %3371 = vmatprep.subr.bf16.mxu0 %v3287
          %3372 = vmatpush1.bf16.msra.mxu0 %v3286
          %3373 = vmatprep.subr.bf16.mxu0 %v3290
          %3374 = vmatpush1.bf16.msra.mxu0 %v3289
          %3375 = vmatprep.subr.bf16.mxu0 %v3293
          %3376 = vmatpush1.bf16.msra.mxu0 %v3292
          %3377 = vmatprep.subr.bf16.mxu0 %v3296
          %3378 = vmatpush1.bf16.msra.mxu0 %v3295
          %3379 = vmatprep.subr.bf16.mxu0 %v3299
          %3380 = vmatpush1.bf16.msra.mxu0 %v3298
          %3381 = vmatprep.mubr.bf16.mxu0 %v2875
          %3382 = vmatmul.mubr.bf16.gmra.mrb[0].mxu0 %v2874
          %v3383 = vpop.f32.mrb[0].mxu0
          %v3384 = vadd.f32 %v3026, %v3383
          %v3385 = vpop.f32.mrb[0].mxu0
          %v3386 = vadd.f32 %v3028, %v3385
          %v3387 = vpop.f32.mrb[0].mxu0
          %v3388 = vadd.f32 %v3030, %v3387
          %v3389 = vpop.f32.mrb[0].mxu0
          %v3390 = vadd.f32 %v3032, %v3389
          %3391 = vmatprep.mubr.bf16.mxu0 %v2877
          %3392 = vmatmul.mubr.bf16.gmra.mrb[0].mxu0 %v2876
          %v3393 = vpop.f32.mrb[0].mxu0
          %v3394 = vadd.f32 %v3036, %v3393
          %v3395 = vpop.f32.mrb[0].mxu0
          %v3396 = vadd.f32 %v3038, %v3395
          %v3397 = vpop.f32.mrb[0].mxu0
          %v3398 = vadd.f32 %v3040, %v3397
          %v3399 = vpop.f32.mrb[0].mxu0
          %v3400 = vadd.f32 %v3042, %v3399
          %3401 = vdwg.mxu0
          %3402 = vmatprep.subr.bf16.mxu0 0
          %3403 = vmatpush1.bf16.msra.mxu0 %v3255
          %3404 = vmatprep.subr.bf16.mxu0 0
          %3405 = vmatpush1.bf16.msra.mxu0 %v3258
          %3406 = vmatprep.subr.bf16.mxu0 0
          %3407 = vmatpush1.bf16.msra.mxu0 %v3261
          %3408 = vmatprep.subr.bf16.mxu0 0
          %3409 = vmatpush1.bf16.msra.mxu0 %v3264
          %3410 = vmatprep.subr.bf16.mxu0 0
          %3411 = vmatpush1.bf16.msra.mxu0 %v3267
          %3412 = vmatprep.subr.bf16.mxu0 0
          %3413 = vmatpush1.bf16.msra.mxu0 %v3270
          %3414 = vmatprep.subr.bf16.mxu0 0
          %3415 = vmatpush1.bf16.msra.mxu0 %v3273
          %3416 = vmatprep.subr.bf16.mxu0 0
          %3417 = vmatpush1.bf16.msra.mxu0 %v3276
          %3418 = vmatprep.subr.bf16.mxu0 0
          %3419 = vmatpush1.bf16.msra.mxu0 %v3279
          %3420 = vmatprep.subr.bf16.mxu0 0
          %3421 = vmatpush1.bf16.msra.mxu0 %v3282
          %3422 = vmatprep.subr.bf16.mxu0 0
          %3423 = vmatpush1.bf16.msra.mxu0 %v3285
          %3424 = vmatprep.subr.bf16.mxu0 0
          %3425 = vmatpush1.bf16.msra.mxu0 %v3288
          %3426 = vmatprep.subr.bf16.mxu0 0
          %3427 = vmatpush1.bf16.msra.mxu0 %v3291
          %3428 = vmatprep.subr.bf16.mxu0 0
          %3429 = vmatpush1.bf16.msra.mxu0 %v3294
          %3430 = vmatprep.subr.bf16.mxu0 0
          %3431 = vmatpush1.bf16.msra.mxu0 %v3297
          %3432 = vmatprep.subr.bf16.mxu0 0
          %3433 = vmatpush1.bf16.msra.mxu0 %v3300
          %3434 = vmatprep.mubr.bf16.mxu0 %v2875
          %3435 = vmatmul.mubr.bf16.gmra.mrb[0].mxu0 %v2874
          %v3436 = vpop.f32.mrb[0].mxu0
          %v3437 = vadd.f32 %v3079, %v3436
          %v3438 = vpop.f32.mrb[0].mxu0
          %v3439 = vpop.f32.mrb[0].mxu0
          %v3440 = vadd.f32 %v3082, %v3439
          %v3441 = vpop.f32.mrb[0].mxu0
          %3442 = vmatprep.mubr.bf16.mxu0 %v2877
          %3443 = vmatmul.mubr.bf16.gmra.mrb[0].mxu0 %v2876
          %v3444 = vpop.f32.mrb[0].mxu0
          %v3445 = vadd.f32 %v3087, %v3444
          %v3446 = vpop.f32.mrb[0].mxu0
          %v3447 = vpop.f32.mrb[0].mxu0
          %v3448 = vadd.f32 %v3090, %v3447
          %v3449 = vpop.f32.mrb[0].mxu0
          %3450 = vdwg.mxu0
          %v3451 = vld [vmem:[#allocation16] sm:$0x7]
          %v3453 = vlaneseq
          %v3454 = vshrl.u32 %v3453, 7
          %v3455 = vsub.s32 0, %v3454
          %v3456 = vrot.slane %v3451, %v3455
          %v3457 = vlaneseq
          %v3458 = vshrl.u32 %v3457, 7
          %v3459 = vsub.s32 1, %v3458
          %v3460 = vrot.slane %v3451, %v3459
          %v3461 = vlaneseq
          %v3462 = vshrl.u32 %v3461, 7
          %v3463 = vsub.s32 2, %v3462
          %v3464 = vrot.slane %v3451, %v3463
          %v3468 = vadd.f32 %v3384, %v3456
          %v3469 = vadd.f32 %v3386, %v3460
          %v3470 = vadd.f32 %v3437, %v3464
          %v3471 = vadd.f32 %v3388, %v3456
          %v3472 = vadd.f32 %v3390, %v3460
          %v3473 = vadd.f32 %v3440, %v3464
          %v3474 = vadd.f32 %v3394, %v3456
          %v3475 = vadd.f32 %v3396, %v3460
          %v3476 = vadd.f32 %v3445, %v3464
          %v3477 = vadd.f32 %v3398, %v3456
          %v3478 = vadd.f32 %v3400, %v3460
          %v3479 = vadd.f32 %v3448, %v3464
          %v3480 = vxor.u32 %v3468, 2147483648
          %v3481 = vxor.u32 %v3469, 2147483648
          %v3482 = vxor.u32 %v3470, 2147483648
          %v3483 = vxor.u32 %v3471, 2147483648
          %v3484 = vxor.u32 %v3472, 2147483648
          %v3485 = vxor.u32 %v3473, 2147483648
          %v3486 = vxor.u32 %v3474, 2147483648
          %v3487 = vxor.u32 %v3475, 2147483648
          %v3488 = vxor.u32 %v3476, 2147483648
          %v3489 = vxor.u32 %v3477, 2147483648
          %v3490 = vxor.u32 %v3478, 2147483648
          %v3491 = vxor.u32 %v3479, 2147483648
          %v3492 = vmul.f32 %v3480, 1.442695
          %v3493 = vpow.pop %v3492
          %v3494 = vmul.f32 %v3481, 1.442695
          %v3495 = vpow.pop %v3494
          %v3496 = vmul.f32 %v3482, 1.442695
          %v3497 = vpow.pop %v3496
          %v3498 = vmul.f32 %v3483, 1.442695
          %v3499 = vpow.pop %v3498
          %v3500 = vmul.f32 %v3484, 1.442695
          %v3501 = vpow.pop %v3500
          %v3502 = vmul.f32 %v3485, 1.442695
          %v3503 = vpow.pop %v3502
          %v3504 = vmul.f32 %v3486, 1.442695
          %v3505 = vpow.pop %v3504
          %v3506 = vmul.f32 %v3487, 1.442695
          %v3507 = vpow.pop %v3506
          %v3508 = vmul.f32 %v3488, 1.442695
          %v3509 = vpow.pop %v3508
          %v3510 = vmul.f32 %v3489, 1.442695
          %v3511 = vpow.pop %v3510
          %v3512 = vmul.f32 %v3490, 1.442695
          %v3513 = vpow.pop %v3512
          %v3514 = vmul.f32 %v3491, 1.442695
          %v3515 = vpow.pop %v3514
          %v3516 = vadd.f32 %v3493, 1.0
          %v3517 = vadd.f32 %v3495, 1.0
          %v3518 = vadd.f32 %v3497, 1.0
          %v3519 = vadd.f32 %v3499, 1.0
          %v3520 = vadd.f32 %v3501, 1.0
          %v3521 = vadd.f32 %v3503, 1.0
          %v3522 = vadd.f32 %v3505, 1.0
          %v3523 = vadd.f32 %v3507, 1.0
          %v3524 = vadd.f32 %v3509, 1.0
          %v3525 = vadd.f32 %v3511, 1.0
          %v3526 = vadd.f32 %v3513, 1.0
          %v3527 = vadd.f32 %v3515, 1.0
          %v3528 = vrcp.pop %v3516
          %v3529 = vmul.f32 1.0, %v3528
          %v3530 = vrcp.pop %v3517
          %v3531 = vmul.f32 1.0, %v3530
          %v3532 = vrcp.pop %v3518
          %v3533 = vmul.f32 1.0, %v3532
          %v3534 = vrcp.pop %v3519
          %v3535 = vmul.f32 1.0, %v3534
          %v3536 = vrcp.pop %v3520
          %v3537 = vmul.f32 1.0, %v3536
          %v3538 = vrcp.pop %v3521
          %v3539 = vmul.f32 1.0, %v3538
          %v3540 = vrcp.pop %v3522
          %v3541 = vmul.f32 1.0, %v3540
          %v3542 = vrcp.pop %v3523
          %v3543 = vmul.f32 1.0, %v3542
          %v3544 = vrcp.pop %v3524
          %v3545 = vmul.f32 1.0, %v3544
          %v3546 = vrcp.pop %v3525
          %v3547 = vmul.f32 1.0, %v3546
          %v3548 = vrcp.pop %v3526
          %v3549 = vmul.f32 1.0, %v3548
          %v3550 = vrcp.pop %v3527
          %v3551 = vmul.f32 1.0, %v3550
          %3552 = vst [vmem:[%s570] sm:$0xff] %v3529
          %3553 = vst [vmem:[%s570 + $0x8] sm:$0xff] %v3531
          %3554 = vst [vmem:[%s570 + $0x10] sm:$0xff] %v3533
          %3555 = vst [vmem:[%s570 + $0x18] sm:$0xff] %v3535
          %3556 = vst [vmem:[%s570 + $0x20] sm:$0xff] %v3537
          %3557 = vst [vmem:[%s570 + $0x28] sm:$0xff] %v3539
          %3558 = vst [vmem:[%s570 + $0x30] sm:$0xff] %v3541
          %3559 = vst [vmem:[%s570 + $0x38] sm:$0xff] %v3543
          %3560 = vst [vmem:[%s570 + $0x40] sm:$0xff] %v3545
          %3561 = vst [vmem:[%s570 + $0x48] sm:$0xff] %v3547
          %3562 = vst [vmem:[%s570 + $0x50] sm:$0xff] %v3549
          %3563 = vst [vmem:[%s570 + $0x58] sm:$0xff] %v3551
        $region104: #{efficient_waterfall_forward.1} parent=59 // pred_fallthru
          _
        %s3564 = smul.u32 4, %s29
        %p3565 = scmp.lt.s32.totalorder %s3564, 3
        %s3566 = scalar_select %p3565, %s3564, 3
        %s3567 = smul.addr %s3566, 3
        %s3568 = smul.addr %s3567, 8
        %s3569 = scalar_lea.vmem %s10, %s3568
        // Predicated region
        $region105: #{efficient_waterfall_forward.1} parent=59 // pred_check
          %p3570 = pneg %p285
        $region106: #{efficient_waterfall_forward.1} parent=59 // pred_check_branch
          %3572 = sbr.rel (%p3570) target = $region108
        $region107: #{efficient_waterfall_forward.1} parent=59 // pred_region
          %s3573 = smul.u32 4, %s29
        $region108: #{efficient_waterfall_forward.1} parent=59 // pred_fallthru
          _
        // Predicated region
        $region109: #{efficient_waterfall_forward.1} parent=59 // pred_check
          %p3574 = pneg %p285
        $region110: #{efficient_waterfall_forward.1} parent=59 // pred_check_branch
          %3576 = sbr.rel (%p3574) target = $region112
        $region111: #{efficient_waterfall_forward.1} parent=59 // pred_region
          %s3577 = smul.u32 4, %s29
          %p3578 = scmp.lt.s32.totalorder %s3577, 3
          %s3579 = scalar_select %p3578, %s3577, 3
          %s3580 = smul.addr %s3579, 3
          %s3581 = smul.addr %s3580, 8
          %s3582 = scalar_lea.vmem %s10, %s3581
        $region112: #{efficient_waterfall_forward.1} parent=59 // pred_fallthru
          _
      $region60: #{efficient_waterfall_forward.1} parent=5 // pred_fallthru
        _
      %p3583 = scmp.le.s32.totalorder 2, %s20
      // Predicated region
      $region113: #{efficient_waterfall_forward.1} parent=5 // pred_check
        %p3584 = pneg %p3583
      $region114: #{efficient_waterfall_forward.1} parent=5 // pred_check_branch
        %3586 = sbr.rel (%p3584) target = $region116
      $region115: #{efficient_waterfall_forward.1} parent=5 // pred_region
        %s3587 = ssub.s32 %s20, 2
      $region116: #{efficient_waterfall_forward.1} parent=5 // pred_fallthru
        _
    $region6: #{efficient_waterfall_forward.1} parent=1 // loop_footer
      %s24 = sadd.s32 1, %s20
    $region7: #{efficient_waterfall_forward.1} parent=1 // loop_footer_branch
      %19 = sbr.rel target = $region3
    $region8: #{efficient_waterfall_forward.1} parent=1 // loop_exit
      _
    %3588 = vsyncpa [#allocation6], 1
    %s3589 = scalar_lea.sflag [#allocation6], 1
    %3590 = vsyncpa %s3589, 1
    %3591 = vsyncpa [#allocation8], 1
    %3592 = vsyncpa [#allocation14], 1
    %3593 = vsyncpa [#allocation17], 1

</llo_original>
